<compile_context>
chip_gen: v7x
topology: tpu7x:2x2x1
jax: 0.10.0
libtpu: 0.0.40
codegen_flags: <defaults>
</compile_context>

<pallas_src>
import functools

import jax
import jax.numpy as jnp
from jax.experimental import pallas as pl
from jax.experimental.pallas import tpu as pltpu


def _round_up(a, b):
    return (a + b - 1) // b * b


def _layernorm(x, gamma, beta, eps=1e-5):
    # PyTorch nn.LayerNorm: biased variance over the last dim, eps inside rsqrt.
    mean = jnp.mean(x, axis=-1, keepdims=True)
    var = jnp.mean((x - mean) ** 2, axis=-1, keepdims=True)
    return (x - mean) * jax.lax.rsqrt(var + eps) * gamma + beta


def _vmem_limit_bytes():
    # ~85% of physical VMEM, capped at 112 MiB: ~54 MiB on v7x (64 MiB physical),
    # ~108 MiB on v5e/v6e (128 MiB physical). None -> compiler default.
    try:
        phys = int(pltpu.get_tpu_info().vmem_capacity_bytes)
        return min(int(phys * 0.85), 112 * 1024 * 1024)
    except Exception:
        return None


def block_kernel(x_ref,
                 ln1_g_ref, ln1_b_ref,
                 wq_ref, wkv_ref,
                 wproj_ref, bproj_ref,
                 ln2_g_ref, ln2_b_ref,
                 w1_ref, b1_ref, w2_ref, b2_ref,
                 o_ref,
                 k_scr, v_scr,
                 *, n_head, head_size, q_block_size):
    H, hs = n_head, head_size
    D = H * hs
    tq = q_block_size
    cdt = wq_ref.dtype          # MXU operand dtype (bf16 in production, f32 for checking)
    qi = pl.program_id(1)

    g1, be1 = ln1_g_ref[...], ln1_b_ref[...]

    # ---- once per batch (first query block): LN1 over the full (padded) sequence,
    #      fused K|V projection, stored head-major in VMEM scratch ------------------
    @pl.when(qi == 0)
    def _():
        ln_full = _layernorm(x_ref[0], g1, be1)                       # (T, D) f32
        kv = jnp.dot(ln_full.astype(cdt), wkv_ref[...],
                     preferred_element_type=cdt)                      # (T, 2D) cdt
        k_scr[...] = jnp.stack([kv[:, h * hs:(h + 1) * hs] for h in range(H)], axis=0)
        v_scr[...] = jnp.stack([kv[:, D + h * hs:D + (h + 1) * hs] for h in range(H)],
                               axis=0)

    # ---- per query block -----------------------------------------------------------
    q0 = pl.multiple_of(qi * tq, tq)
    xq = x_ref[0, pl.ds(q0, tq), :]                                   # (tq, D) f32
    lnq = _layernorm(xq, g1, be1)                                     # residual input

    # wq already carries the 1/sqrt(head_size) attention scale (folded in wrapper).
    q = jnp.dot(lnq.astype(cdt), wq_ref[...], preferred_element_type=cdt)   # (tq, D)
    qh = jnp.stack([q[:, h * hs:(h + 1) * hs] for h in range(H)], axis=0)   # (H, tq, hs)

    # 2-D causal-mask rows, broadcast over heads inside the loop.
    row = q0 + jax.lax.broadcasted_iota(jnp.int32, (tq, tq), 0)

    def kv_block(kb, carry):
        m, l, acc = carry
        k0 = pl.multiple_of(kb * tq, tq)
        kh = k_scr[:, pl.ds(k0, tq), :]                               # (H, tq, hs)
        vh = v_scr[:, pl.ds(k0, tq), :]
        s = jnp.einsum('hqd,hkd->hqk', qh, kh,
                       preferred_element_type=jnp.float32)            # (H, tq, tq) f32
        col = k0 + jax.lax.broadcasted_iota(jnp.int32, (tq, tq), 1)
        # torch quirk: wei.masked_fill(wei.tril() == 0, -inf)
        #   == keep iff (row >= col) AND (score != 0)
        keep = (row >= col)[None, :, :] & (s != 0.0)
        s = jnp.where(keep, s, -jnp.inf)
        # online softmax update
        m_new = jnp.maximum(m, jnp.max(s, axis=-1, keepdims=True))
        alpha = jnp.exp(m - m_new)
        p = jnp.exp(s - m_new)
        l_new = alpha * l + jnp.sum(p, axis=-1, keepdims=True)
        acc_new = alpha * acc + jnp.einsum('hqk,hkd->hqd', p.astype(cdt), vh,
                                           preferred_element_type=jnp.float32)
        return m_new, l_new, acc_new

    m0 = jnp.full((H, tq, 1), -jnp.inf, jnp.float32)
    l0 = jnp.zeros((H, tq, 1), jnp.float32)
    acc0 = jnp.zeros((H, tq, hs), jnp.float32)
    # Causality: only key blocks kb <= qi contribute; later blocks are never touched.
    _m, l, acc = jax.lax.fori_loop(0, qi + 1, kv_block, (m0, l0, acc0))

    # Normalize AFTER the PV matmul: (H, tq, hs) multiplies instead of (H, tq, T).
    o = acc * pl.reciprocal(l, approx=True)                           # (H, tq, hs) f32
    cat = jnp.concatenate([o[h] for h in range(H)], axis=-1)          # (tq, D)

    attn = jnp.dot(cat.astype(cdt), wproj_ref[...],
                   preferred_element_type=jnp.float32) + bproj_ref[...]
    x2 = attn + lnq               # residual adds the *post-LN1* activations (module quirk)

    # ---- x = ln2(x); x = ffn(x) + x --------------------------------------------------
    x3 = _layernorm(x2, ln2_g_ref[...], ln2_b_ref[...])
    h1 = jnp.maximum(
        jnp.dot(x3.astype(cdt), w1_ref[...],
                preferred_element_type=jnp.float32) + b1_ref[...], 0.0)
    ffn = jnp.dot(h1.astype(cdt), w2_ref[...],
                  preferred_element_type=jnp.float32) + b2_ref[...]

    o_ref[0] = (ffn + x3).astype(o_ref.dtype)


def block_forward(x, params, *, n_head, head_size,
                  q_block=256,                 # v6e: 256-512; v5e: 128 is MXU-optimal
                  compute_dtype=jnp.bfloat16,
                  single_buffer_weights=True):
    B, T, D = x.shape
    H, hs = n_head, head_size
    assert D == H * hs, "concat of heads must equal d_model"
    (ln1_g, ln1_b, wq, wk, wv, wproj, bproj,
     ln2_g, ln2_b, w1, b1, w2, b2) = params

    # --- one-time weight fusion (wrapper-side) ---
    # per-head (H, D, hs) -> head-major columns (D, H*hs); fold the 1/sqrt(hs)
    # attention scale into Q so the kernel skips a per-score multiply.
    scale = float(hs) ** -0.5
    wq_f = jnp.transpose(wq, (1, 0, 2)).reshape(D, D) * scale
    wk_f = jnp.transpose(wk, (1, 0, 2)).reshape(D, D)
    wv_f = jnp.transpose(wv, (1, 0, 2)).reshape(D, D)
    wkv_f = jnp.concatenate([wk_f, wv_f], axis=-1)                    # (D, 2D)

    cdt = compute_dtype
    wq_f = wq_f.astype(cdt)
    wkv_f = wkv_f.astype(cdt)
    wproj_c = wproj.astype(cdt)
    w1_c = w1.astype(cdt)
    w2_c = w2.astype(cdt)

    # --- query tiling: pad T up to a multiple of the query block ---
    tq = min(q_block, _round_up(T, 8))
    T_pad = _round_up(T, tq)
    nq = T_pad // tq
    x_in = x if T_pad == T else jnp.pad(x, ((0, 0), (0, T_pad - T), (0, 0)))

    kernel = functools.partial(block_kernel, n_head=H, head_size=hs, q_block_size=tq)

    x_map = lambda b, qi: (b, 0, 0)      # constant over qi -> fetched once per batch
    out_map = lambda b, qi: (b, qi, 0)

    def run(buffered):
        if buffered:
            # weights have constant block indices -> single-buffer them (halves their
            # resident VMEM footprint; the difference between fitting and spilling on
            # v7x's 64 MiB VMEM at real model sizes).
            def wspec(shape):
                return pl.BlockSpec(shape, lambda b, qi, _n=len(shape): (0,) * _n,
                                    pipeline_mode=pl.Buffered(1))
        else:
            def wspec(shape):
                return pl.BlockSpec(shape, lambda b, qi, _n=len(shape): (0,) * _n)

        in_specs = [
            pl.BlockSpec((1, T_pad, D), x_map),                       # x (full sequence)
            wspec((1, D)), wspec((1, D)),                             # ln1 gamma, beta
            wspec((D, D)),                                            # fused Wq (scaled)
            wspec((D, 2 * D)),                                        # fused Wk | Wv
            wspec((D, D)), wspec((1, D)),                             # Wproj, bproj
            wspec((1, D)), wspec((1, D)),                             # ln2 gamma, beta
            wspec((D, D)), wspec((1, D)),                             # FFN inner W, b
            wspec((D, D)), wspec((1, D)),                             # FFN out   W, b
        ]

        out = pl.pallas_call(
            kernel,
            out_shape=jax.ShapeDtypeStruct((B, T_pad, D), x.dtype),
            grid_spec=pltpu.PrefetchScalarGridSpec(
                num_scalar_prefetch=0,
                grid=(B, nq),
                in_specs=in_specs,
                out_specs=pl.BlockSpec((1, tq, D), out_map),
                scratch_shapes=[pltpu.VMEM((H, T_pad, hs), cdt),      # K, head-major
                                pltpu.VMEM((H, T_pad, hs), cdt)],     # V, head-major
            ),
            compiler_params=pltpu.CompilerParams(
                # qi axis is "arbitrary": K/V scratch filled at qi==0 is reused by
                # later query blocks of the same batch; batch axis is megacore-parallel.
                dimension_semantics=("parallel", "arbitrary"),
                vmem_limit_bytes=_vmem_limit_bytes()),
        )(x_in, ln1_g, ln1_b, wq_f, wkv_f, wproj_c, bproj,
          ln2_g, ln2_b, w1_c, b1, w2_c, b2)
        return jax.block_until_ready(out)

    if single_buffer_weights:
        try:
            out = run(True)
        except Exception:
            # pl.Buffered(1) not supported by this JAX build -> default double-buffering.
            out = run(False)
    else:
        out = run(False)

    return out if T_pad == T else out[:, :T, :]


# ---------------- pure-JAX reference (torch `Block` semantics, f32) -----------------
def block_reference(x, params, *, n_head, head_size):
    (ln1_g, ln1_b, wq, wk, wv, wproj, bproj,
     ln2_g, ln2_b, w1, b1, w2, b2) = params
    x1 = _layernorm(x, ln1_g, ln1_b)
    T = x.shape[1]
    lower = jnp.tril(jnp.ones((T, T), dtype=bool))
    outs = []
    for h in range(n_head):
        q = x1 @ wq[h]
        k = x1 @ wk[h]
        v = x1 @ wv[h]
        wei = (q @ jnp.swapaxes(k, -1, -2)) * (head_size ** -0.5)
        tril_wei = jnp.where(lower, wei, 0.0)
        wei = jnp.where(tril_wei == 0.0, -jnp.inf, wei)
        wei = jax.nn.softmax(wei, axis=-1)
        outs.append(wei @ v)
    cat = jnp.concatenate(outs, axis=-1)
    x2 = cat @ wproj + bproj + x1
    x3 = _layernorm(x2, ln2_g, ln2_b)
    ffn = jnp.maximum(x3 @ w1 + b1, 0.0) @ w2 + b2
    return ffn + x3


def init_params(key, d_model, n_head, head_size):
    """Deterministic PyTorch-like init (LN gamma=1/beta=0, linears uniform)."""
    D = d_model
    keys = jax.random.split(key, 10)

    def lin_w(k, fan_in, shape):
        bound = 1.0 / (fan_in ** 0.5)
        return jax.random.uniform(k, shape, jnp.float32, -bound, bound)

    ln1_g = jnp.ones((1, D), jnp.float32)
    ln1_b = jnp.zeros((1, D), jnp.float32)
    wq = lin_w(keys[0], D, (n_head, D, head_size))
    wk = lin_w(keys[1], D, (n_head, D, head_size))
    wv = lin_w(keys[2], D, (n_head, D, head_size))
    wproj = lin_w(keys[3], D, (D, D))
    bproj = lin_w(keys[4], D, (1, D))
    ln2_g = jnp.ones((1, D), jnp.float32)
    ln2_b = jnp.zeros((1, D), jnp.float32)
    w1 = lin_w(keys[5], D, (D, D))          # FFN(d_model, d_model): d_inner = d_model
    b1 = lin_w(keys[6], D, (1, D))
    w2 = lin_w(keys[7], D, (D, D))
    b2 = lin_w(keys[8], D, (1, D))
    return (ln1_g, ln1_b, wq, wk, wv, wproj, bproj,
            ln2_g, ln2_b, w1, b1, w2, b2)


if __name__ == "__main__":
    n_head, head_size = 4, 8
    d_model = n_head * head_size            # 32 (concat of heads must equal d_model)

    key = jax.random.PRNGKey(0)
    k_x, k_p = jax.random.split(key)
    params = init_params(k_p, d_model, n_head, head_size)

    # --- config 1: single query block (B=2, T=8) --------------------------------
    x = jax.random.normal(k_x, (2, 8, d_model), jnp.float32)
    ref = block_reference(x, params, n_head=n_head, head_size=head_size)

    out_f32 = block_forward(x, params, n_head=n_head, head_size=head_size,
                            compute_dtype=jnp.float32)
    assert out_f32.shape == (2, 8, d_model)
    assert jnp.allclose(out_f32, ref, atol=5e-2, rtol=5e-2), "f32 kernel mismatch"

    out_bf16 = block_forward(x, params, n_head=n_head, head_size=head_size,
                             compute_dtype=jnp.bfloat16)
    assert jnp.allclose(out_bf16, ref, atol=5e-2, rtol=5e-2), "bf16 kernel mismatch"

    # --- config 2: two query blocks (exercises K/V scratch reuse + causal flash
    #     loop over key blocks) ---------------------------------------------------
    x2 = jax.random.normal(jax.random.PRNGKey(1), (2, 16, d_model), jnp.float32)
    ref2 = block_reference(x2, params, n_head=n_head, head_size=head_size)
    out2 = block_forward(x2, params, n_head=n_head, head_size=head_size,
                         q_block=8, compute_dtype=jnp.float32)
    assert jnp.allclose(out2, ref2, atol=5e-2, rtol=5e-2), "multi-block mismatch"

    # --- config 3: T not a multiple of the query block (exercises padding path) --
    x3 = jax.random.normal(jax.random.PRNGKey(2), (1, 12, d_model), jnp.float32)
    ref3 = block_reference(x3, params, n_head=n_head, head_size=head_size)
    out3 = block_forward(x3, params, n_head=n_head, head_size=head_size,
                         q_block=8, compute_dtype=jnp.float32)
    assert out3.shape == (1, 12, d_model)
    assert jnp.allclose(out3, ref3, atol=5e-2, rtol=5e-2), "padded-T mismatch"

    print("KERNEL_OK")
</pallas_src>

<mosaic_0001>
module attributes {stable_mosaic.version = 11 : i64} {
  func.func @block_kernel(%arg0: i32, %arg1: i32, %arg2: memref<1x8x32xf32, #tpu.memory_space<vmem>>, %arg3: memref<1x32xf32, #tpu.memory_space<vmem>>, %arg4: memref<1x32xf32, #tpu.memory_space<vmem>>, %arg5: memref<32x32xf32, #tpu.memory_space<vmem>>, %arg6: memref<32x64xf32, #tpu.memory_space<vmem>>, %arg7: memref<32x32xf32, #tpu.memory_space<vmem>>, %arg8: memref<1x32xf32, #tpu.memory_space<vmem>>, %arg9: memref<1x32xf32, #tpu.memory_space<vmem>>, %arg10: memref<1x32xf32, #tpu.memory_space<vmem>>, %arg11: memref<32x32xf32, #tpu.memory_space<vmem>>, %arg12: memref<1x32xf32, #tpu.memory_space<vmem>>, %arg13: memref<32x32xf32, #tpu.memory_space<vmem>>, %arg14: memref<1x32xf32, #tpu.memory_space<vmem>>, %arg15: memref<1x8x32xf32, #tpu.memory_space<vmem>>, %arg16: memref<4x8x8xf32, #tpu.memory_space<vmem>>, %arg17: memref<4x8x8xf32, #tpu.memory_space<vmem>>) attributes {dimension_semantics = [#tpu.dimension_semantics<parallel>, #tpu.dimension_semantics<arbitrary>], iteration_bounds = array<i64: 2, 1>, scalar_prefetch = 0 : i64, scratch_operands = 2 : i64, tpu.core_type = #tpu.core_type<tc>, window_params = [{transform_indices = @transform_0, window_bounds = array<i64: 1, 8, 32>}, {pipeline_mode = #tpu.pipeline_mode<synchronous>, transform_indices = @transform_1, window_bounds = array<i64: 1, 32>}, {pipeline_mode = #tpu.pipeline_mode<synchronous>, transform_indices = @transform_2, window_bounds = array<i64: 1, 32>}, {pipeline_mode = #tpu.pipeline_mode<synchronous>, transform_indices = @transform_3, window_bounds = array<i64: 32, 32>}, {pipeline_mode = #tpu.pipeline_mode<synchronous>, transform_indices = @transform_4, window_bounds = array<i64: 32, 64>}, {pipeline_mode = #tpu.pipeline_mode<synchronous>, transform_indices = @transform_5, window_bounds = array<i64: 32, 32>}, {pipeline_mode = #tpu.pipeline_mode<synchronous>, transform_indices = @transform_6, window_bounds = array<i64: 1, 32>}, {pipeline_mode = #tpu.pipeline_mode<synchronous>, transform_indices = @transform_7, window_bounds = array<i64: 1, 32>}, {pipeline_mode = #tpu.pipeline_mode<synchronous>, transform_indices = @transform_8, window_bounds = array<i64: 1, 32>}, {pipeline_mode = #tpu.pipeline_mode<synchronous>, transform_indices = @transform_9, window_bounds = array<i64: 32, 32>}, {pipeline_mode = #tpu.pipeline_mode<synchronous>, transform_indices = @transform_10, window_bounds = array<i64: 1, 32>}, {pipeline_mode = #tpu.pipeline_mode<synchronous>, transform_indices = @transform_11, window_bounds = array<i64: 32, 32>}, {pipeline_mode = #tpu.pipeline_mode<synchronous>, transform_indices = @transform_12, window_bounds = array<i64: 1, 32>}, {transform_indices = @transform_13, window_bounds = array<i64: 1, 8, 32>}]} {
    %c0 = arith.constant 0 : index
    %c0_0 = arith.constant 0 : index
    %0 = vector.load %arg3[%c0, %c0_0] : memref<1x32xf32, #tpu.memory_space<vmem>>, vector<1x32xf32>
    %c0_1 = arith.constant 0 : index
    %c0_2 = arith.constant 0 : index
    %1 = vector.load %arg4[%c0_1, %c0_2] : memref<1x32xf32, #tpu.memory_space<vmem>>, vector<1x32xf32>
    %c0_i32 = arith.constant 0 : i32
    %2 = arith.cmpi eq, %arg1, %c0_i32 : i32
    %3 = arith.extui %2 : i1 to i32
    %c0_i32_3 = arith.constant 0 : i32
    %4 = arith.cmpi ne, %3, %c0_i32_3 : i32
    scf.if %4 {
      %c0_46 = arith.constant 0 : index
      %c0_47 = arith.constant 0 : index
      %c0_48 = arith.constant 0 : index
      %111 = vector.load %arg2[%c0_46, %c0_47, %c0_48] : memref<1x8x32xf32, #tpu.memory_space<vmem>>, vector<1x8x32xf32>
      %112 = vector.shape_cast %111 : vector<1x8x32xf32> to vector<8x32xf32>
      %cst_49 = arith.constant dense<0.000000e+00> : vector<8xf32>
      %113 = vector.multi_reduction <add>, %112, %cst_49 [1] : vector<8x32xf32> to vector<8xf32>
      %114 = vector.shape_cast %113 : vector<8xf32> to vector<8x1xf32>
      %cst_50 = arith.constant 3.200000e+01 : f32
      %115 = vector.broadcast %cst_50 : f32 to vector<8x1xf32>
      %116 = arith.divf %114, %115 : vector<8x1xf32>
      %117 = vector.broadcast %116 : vector<8x1xf32> to vector<8x32xf32>
      %118 = arith.subf %112, %117 : vector<8x32xf32>
      %119 = arith.mulf %118, %118 : vector<8x32xf32>
      %cst_51 = arith.constant dense<0.000000e+00> : vector<8xf32>
      %120 = vector.multi_reduction <add>, %119, %cst_51 [1] : vector<8x32xf32> to vector<8xf32>
      %121 = vector.shape_cast %120 : vector<8xf32> to vector<8x1xf32>
      %cst_52 = arith.constant 3.200000e+01 : f32
      %122 = vector.broadcast %cst_52 : f32 to vector<8x1xf32>
      %123 = arith.divf %121, %122 : vector<8x1xf32>
      %124 = vector.broadcast %116 : vector<8x1xf32> to vector<8x32xf32>
      %125 = arith.subf %112, %124 : vector<8x32xf32>
      %cst_53 = arith.constant 9.99999974E-6 : f32
      %126 = vector.broadcast %cst_53 : f32 to vector<8x1xf32>
      %127 = arith.addf %123, %126 : vector<8x1xf32>
      %128 = math.rsqrt %127 : vector<8x1xf32>
      %129 = vector.broadcast %128 : vector<8x1xf32> to vector<8x32xf32>
      %130 = arith.mulf %125, %129 : vector<8x32xf32>
      %131 = vector.broadcast %0 : vector<1x32xf32> to vector<8x32xf32>
      %132 = arith.mulf %130, %131 : vector<8x32xf32>
      %133 = vector.broadcast %1 : vector<1x32xf32> to vector<8x32xf32>
      %134 = arith.addf %132, %133 : vector<8x32xf32>
      %c0_54 = arith.constant 0 : index
      %c0_55 = arith.constant 0 : index
      %135 = vector.load %arg6[%c0_54, %c0_55] : memref<32x64xf32, #tpu.memory_space<vmem>>, vector<32x64xf32>
      %cst_56 = arith.constant dense<0.000000e+00> : vector<8x64xf32>
      %136 = tpu.matmul %134, %135, %cst_56 {dimension_numbers = #tpu.dot_dimension_numbers<[1], [0], [0], [1], [0, 0, 1, 1], [], []>} : vector<8x32xf32>, vector<32x64xf32>, vector<8x64xf32> -> vector<8x64xf32>
      %137 = vector.extract_strided_slice %136 {offsets = [0, 0], sizes = [8, 8], strides = [1, 1]} : vector<8x64xf32> to vector<8x8xf32>
      %138 = vector.extract_strided_slice %136 {offsets = [0, 8], sizes = [8, 8], strides = [1, 1]} : vector<8x64xf32> to vector<8x8xf32>
      %139 = vector.extract_strided_slice %136 {offsets = [0, 16], sizes = [8, 8], strides = [1, 1]} : vector<8x64xf32> to vector<8x8xf32>
      %140 = vector.extract_strided_slice %136 {offsets = [0, 24], sizes = [8, 8], strides = [1, 1]} : vector<8x64xf32> to vector<8x8xf32>
      %141 = vector.shape_cast %137 : vector<8x8xf32> to vector<1x8x8xf32>
      %142 = vector.shape_cast %138 : vector<8x8xf32> to vector<1x8x8xf32>
      %143 = vector.shape_cast %139 : vector<8x8xf32> to vector<1x8x8xf32>
      %144 = vector.shape_cast %140 : vector<8x8xf32> to vector<1x8x8xf32>
      %145 = tpu.concatenate %141, %142, %143, %144 in 0 : vector<1x8x8xf32>, vector<1x8x8xf32>, vector<1x8x8xf32>, vector<1x8x8xf32> -> vector<4x8x8xf32>
      %c0_57 = arith.constant 0 : index
      %c0_58 = arith.constant 0 : index
      %c0_59 = arith.constant 0 : index
      %146 = vector.load %arg16[%c0_57, %c0_58, %c0_59] : memref<4x8x8xf32, #tpu.memory_space<vmem>>, vector<4x8x8xf32>
      tpu.vector_store %arg16[%c0_57, %c0_58, %c0_59], %145 {strides = array<i32>} : memref<4x8x8xf32, #tpu.memory_space<vmem>>, vector<4x8x8xf32>,
      %147 = vector.extract_strided_slice %136 {offsets = [0, 32], sizes = [8, 8], strides = [1, 1]} : vector<8x64xf32> to vector<8x8xf32>
      %148 = vector.extract_strided_slice %136 {offsets = [0, 40], sizes = [8, 8], strides = [1, 1]} : vector<8x64xf32> to vector<8x8xf32>
      %149 = vector.extract_strided_slice %136 {offsets = [0, 48], sizes = [8, 8], strides = [1, 1]} : vector<8x64xf32> to vector<8x8xf32>
      %150 = vector.extract_strided_slice %136 {offsets = [0, 56], sizes = [8, 8], strides = [1, 1]} : vector<8x64xf32> to vector<8x8xf32>
      %151 = vector.shape_cast %147 : vector<8x8xf32> to vector<1x8x8xf32>
      %152 = vector.shape_cast %148 : vector<8x8xf32> to vector<1x8x8xf32>
      %153 = vector.shape_cast %149 : vector<8x8xf32> to vector<1x8x8xf32>
      %154 = vector.shape_cast %150 : vector<8x8xf32> to vector<1x8x8xf32>
      %155 = tpu.concatenate %151, %152, %153, %154 in 0 : vector<1x8x8xf32>, vector<1x8x8xf32>, vector<1x8x8xf32>, vector<1x8x8xf32> -> vector<4x8x8xf32>
      %c0_60 = arith.constant 0 : index
      %c0_61 = arith.constant 0 : index
      %c0_62 = arith.constant 0 : index
      %156 = vector.load %arg17[%c0_60, %c0_61, %c0_62] : memref<4x8x8xf32, #tpu.memory_space<vmem>>, vector<4x8x8xf32>
      tpu.vector_store %arg17[%c0_60, %c0_61, %c0_62], %155 {strides = array<i32>} : memref<4x8x8xf32, #tpu.memory_space<vmem>>, vector<4x8x8xf32>,
    } else {
    }
    %c8_i32 = arith.constant 8 : i32
    %5 = arith.muli %arg1, %c8_i32 : i32
    %6 = tpu.assume_multiple %5, 8 : i32
    %c0_4 = arith.constant 0 : index
    %7 = arith.index_cast %6 : i32 to index
    %c0_5 = arith.constant 0 : index
    %8 = vector.load %arg2[%c0_4, %7, %c0_5] : memref<1x8x32xf32, #tpu.memory_space<vmem>>, vector<1x8x32xf32>
    %9 = vector.shape_cast %8 : vector<1x8x32xf32> to vector<8x32xf32>
    %cst = arith.constant dense<0.000000e+00> : vector<8xf32>
    %10 = vector.multi_reduction <add>, %9, %cst [1] : vector<8x32xf32> to vector<8xf32>
    %11 = vector.shape_cast %10 : vector<8xf32> to vector<8x1xf32>
    %cst_6 = arith.constant 3.200000e+01 : f32
    %12 = vector.broadcast %cst_6 : f32 to vector<8x1xf32>
    %13 = arith.divf %11, %12 : vector<8x1xf32>
    %14 = vector.broadcast %13 : vector<8x1xf32> to vector<8x32xf32>
    %15 = arith.subf %9, %14 : vector<8x32xf32>
    %16 = arith.mulf %15, %15 : vector<8x32xf32>
    %cst_7 = arith.constant dense<0.000000e+00> : vector<8xf32>
    %17 = vector.multi_reduction <add>, %16, %cst_7 [1] : vector<8x32xf32> to vector<8xf32>
    %18 = vector.shape_cast %17 : vector<8xf32> to vector<8x1xf32>
    %cst_8 = arith.constant 3.200000e+01 : f32
    %19 = vector.broadcast %cst_8 : f32 to vector<8x1xf32>
    %20 = arith.divf %18, %19 : vector<8x1xf32>
    %21 = vector.broadcast %13 : vector<8x1xf32> to vector<8x32xf32>
    %22 = arith.subf %9, %21 : vector<8x32xf32>
    %cst_9 = arith.constant 9.99999974E-6 : f32
    %23 = vector.broadcast %cst_9 : f32 to vector<8x1xf32>
    %24 = arith.addf %20, %23 : vector<8x1xf32>
    %25 = math.rsqrt %24 : vector<8x1xf32>
    %26 = vector.broadcast %25 : vector<8x1xf32> to vector<8x32xf32>
    %27 = arith.mulf %22, %26 : vector<8x32xf32>
    %28 = vector.broadcast %0 : vector<1x32xf32> to vector<8x32xf32>
    %29 = arith.mulf %27, %28 : vector<8x32xf32>
    %30 = vector.broadcast %1 : vector<1x32xf32> to vector<8x32xf32>
    %31 = arith.addf %29, %30 : vector<8x32xf32>
    %c0_10 = arith.constant 0 : index
    %c0_11 = arith.constant 0 : index
    %32 = vector.load %arg5[%c0_10, %c0_11] : memref<32x32xf32, #tpu.memory_space<vmem>>, vector<32x32xf32>
    %cst_12 = arith.constant dense<0.000000e+00> : vector<8x32xf32>
    %33 = tpu.matmul %31, %32, %cst_12 {dimension_numbers = #tpu.dot_dimension_numbers<[1], [0], [0], [1], [0, 0, 1, 1], [], []>} : vector<8x32xf32>, vector<32x32xf32>, vector<8x32xf32> -> vector<8x32xf32>
    %34 = vector.extract_strided_slice %33 {offsets = [0, 0], sizes = [8, 8], strides = [1, 1]} : vector<8x32xf32> to vector<8x8xf32>
    %35 = vector.extract_strided_slice %33 {offsets = [0, 8], sizes = [8, 8], strides = [1, 1]} : vector<8x32xf32> to vector<8x8xf32>
    %36 = vector.extract_strided_slice %33 {offsets = [0, 16], sizes = [8, 8], strides = [1, 1]} : vector<8x32xf32> to vector<8x8xf32>
    %37 = vector.extract_strided_slice %33 {offsets = [0, 24], sizes = [8, 8], strides = [1, 1]} : vector<8x32xf32> to vector<8x8xf32>
    %38 = vector.shape_cast %34 : vector<8x8xf32> to vector<1x8x8xf32>
    %39 = vector.shape_cast %35 : vector<8x8xf32> to vector<1x8x8xf32>
    %40 = vector.shape_cast %36 : vector<8x8xf32> to vector<1x8x8xf32>
    %41 = vector.shape_cast %37 : vector<8x8xf32> to vector<1x8x8xf32>
    %42 = tpu.concatenate %38, %39, %40, %41 in 0 : vector<1x8x8xf32>, vector<1x8x8xf32>, vector<1x8x8xf32>, vector<1x8x8xf32> -> vector<4x8x8xf32>
    %43 = tpu.iota {dimensions = array<i32: 0>} : vector<8x8xi32>
    %44 = vector.broadcast %6 : i32 to vector<8x8xi32>
    %45 = arith.addi %44, %43 : vector<8x8xi32>
    %cst_13 = arith.constant 0xFF800000 : f32
    %46 = vector.broadcast %cst_13 : f32 to vector<4x8x1xf32>
    %cst_14 = arith.constant 0.000000e+00 : f32
    %47 = vector.broadcast %cst_14 : f32 to vector<4x8x1xf32>
    %cst_15 = arith.constant 0.000000e+00 : f32
    %48 = vector.broadcast %cst_15 : f32 to vector<4x8x8xf32>
    %c1_i32 = arith.constant 1 : i32
    %49 = arith.addi %arg1, %c1_i32 : i32
    %c0_i32_16 = arith.constant 0 : i32
    %50 = arith.subi %49, %c0_i32_16 : i32
    %51 = arith.addi %c0_i32_16, %50 : i32
    %c1_i32_17 = arith.constant 1 : i32
    %52:3 = scf.for %arg18 = %c0_i32_16 to %51 step %c1_i32_17 iter_args(%arg19 = %46, %arg20 = %47, %arg21 = %48) -> (vector<4x8x1xf32>, vector<4x8x1xf32>, vector<4x8x8xf32>)  : i32 {
      %c8_i32_46 = arith.constant 8 : i32
      %111 = arith.muli %arg18, %c8_i32_46 : i32
      %112 = tpu.assume_multiple %111, 8 : i32
      %c0_47 = arith.constant 0 : index
      %113 = arith.index_cast %112 : i32 to index
      %c0_48 = arith.constant 0 : index
      %114 = vector.load %arg16[%c0_47, %113, %c0_48] : memref<4x8x8xf32, #tpu.memory_space<vmem>>, vector<4x8x8xf32>
      %c0_49 = arith.constant 0 : index
      %115 = arith.index_cast %112 : i32 to index
      %c0_50 = arith.constant 0 : index
      %116 = vector.load %arg17[%c0_49, %115, %c0_50] : memref<4x8x8xf32, #tpu.memory_space<vmem>>, vector<4x8x8xf32>
      "tpu.trace_start"() <{level = 10 : i32, message = "hqd,hkd->hqk"}> : () -> ()
      %cst_51 = arith.constant dense<0.000000e+00> : vector<4x8x8xf32>
      %117 = tpu.matmul %42, %114, %cst_51 {dimension_numbers = #tpu.dot_dimension_numbers<[2], [2], [1], [1], [0, 0, 0, 1, 1, 1], [0], [0]>} : vector<4x8x8xf32>, vector<4x8x8xf32>, vector<4x8x8xf32> -> vector<4x8x8xf32>
      "tpu.trace_stop"() : () -> ()
      %118 = tpu.iota {dimensions = array<i32: 1>} : vector<8x8xi32>
      %119 = vector.broadcast %112 : i32 to vector<8x8xi32>
      %120 = arith.addi %119, %118 : vector<8x8xi32>
      %121 = arith.cmpi sge, %45, %120 : vector<8x8xi32>
      %122 = vector.shape_cast %121 : vector<8x8xi1> to vector<1x8x8xi1>
      %cst_52 = arith.constant 0.000000e+00 : f32
      %123 = vector.broadcast %cst_52 : f32 to vector<4x8x8xf32>
      %124 = arith.cmpf one, %117, %123 : vector<4x8x8xf32>
      %125 = vector.broadcast %122 : vector<1x8x8xi1> to vector<4x8x8xi1>
      %126 = arith.andi %125, %124 : vector<4x8x8xi1>
      %cst_53 = arith.constant 0xFF800000 : f32
      %127 = vector.broadcast %cst_53 : f32 to vector<4x8x8xf32>
      %128 = arith.select %126, %117, %127 : vector<4x8x8xi1>, vector<4x8x8xf32>
      %cst_54 = arith.constant dense<0xFF800000> : vector<4x8xf32>
      %129 = vector.multi_reduction <maximumf>, %128, %cst_54 [2] : vector<4x8x8xf32> to vector<4x8xf32>
      %130 = vector.shape_cast %129 : vector<4x8xf32> to vector<4x8x1xf32>
      %131 = arith.maximumf %arg19, %130 : vector<4x8x1xf32>
      %132 = arith.subf %arg19, %131 : vector<4x8x1xf32>
      %133 = math.exp %132 : vector<4x8x1xf32>
      %134 = vector.broadcast %131 : vector<4x8x1xf32> to vector<4x8x8xf32>
      %135 = arith.subf %128, %134 : vector<4x8x8xf32>
      %136 = math.exp %135 : vector<4x8x8xf32>
      %137 = arith.mulf %133, %arg20 : vector<4x8x1xf32>
      %cst_55 = arith.constant dense<0.000000e+00> : vector<4x8xf32>
      %138 = vector.multi_reduction <add>, %136, %cst_55 [2] : vector<4x8x8xf32> to vector<4x8xf32>
      %139 = vector.shape_cast %138 : vector<4x8xf32> to vector<4x8x1xf32>
      %140 = arith.addf %137, %139 : vector<4x8x1xf32>
      %141 = vector.broadcast %133 : vector<4x8x1xf32> to vector<4x8x8xf32>
      %142 = arith.mulf %141, %arg21 : vector<4x8x8xf32>
      "tpu.trace_start"() <{level = 10 : i32, message = "hqk,hkd->hqd"}> : () -> ()
      %cst_56 = arith.constant dense<0.000000e+00> : vector<4x8x8xf32>
      %143 = tpu.matmul %136, %116, %cst_56 {dimension_numbers = #tpu.dot_dimension_numbers<[2], [1], [1], [2], [0, 0, 0, 1, 1, 2], [0], [0]>} : vector<4x8x8xf32>, vector<4x8x8xf32>, vector<4x8x8xf32> -> vector<4x8x8xf32>
      "tpu.trace_stop"() : () -> ()
      %144 = arith.addf %142, %143 : vector<4x8x8xf32>
      scf.yield %131, %140, %144 : vector<4x8x1xf32>, vector<4x8x1xf32>, vector<4x8x8xf32>
    }
    %53 = tpu.reciprocal %52#1 {approx = true} : vector<4x8x1xf32> -> vector<4x8x1xf32>
    %54 = vector.broadcast %53 : vector<4x8x1xf32> to vector<4x8x8xf32>
    %55 = arith.mulf %52#2, %54 : vector<4x8x8xf32>
    %56 = vector.extract_strided_slice %55 {offsets = [0, 0, 0], sizes = [1, 8, 8], strides = [1, 1, 1]} : vector<4x8x8xf32> to vector<1x8x8xf32>
    %57 = vector.shape_cast %56 : vector<1x8x8xf32> to vector<8x8xf32>
    %58 = vector.extract_strided_slice %55 {offsets = [1, 0, 0], sizes = [1, 8, 8], strides = [1, 1, 1]} : vector<4x8x8xf32> to vector<1x8x8xf32>
    %59 = vector.shape_cast %58 : vector<1x8x8xf32> to vector<8x8xf32>
    %60 = vector.extract_strided_slice %55 {offsets = [2, 0, 0], sizes = [1, 8, 8], strides = [1, 1, 1]} : vector<4x8x8xf32> to vector<1x8x8xf32>
    %61 = vector.shape_cast %60 : vector<1x8x8xf32> to vector<8x8xf32>
    %62 = vector.extract_strided_slice %55 {offsets = [3, 0, 0], sizes = [1, 8, 8], strides = [1, 1, 1]} : vector<4x8x8xf32> to vector<1x8x8xf32>
    %63 = vector.shape_cast %62 : vector<1x8x8xf32> to vector<8x8xf32>
    %64 = tpu.concatenate %57, %59, %61, %63 in 1 : vector<8x8xf32>, vector<8x8xf32>, vector<8x8xf32>, vector<8x8xf32> -> vector<8x32xf32>
    %c0_18 = arith.constant 0 : index
    %c0_19 = arith.constant 0 : index
    %65 = vector.load %arg7[%c0_18, %c0_19] : memref<32x32xf32, #tpu.memory_space<vmem>>, vector<32x32xf32>
    %cst_20 = arith.constant dense<0.000000e+00> : vector<8x32xf32>
    %66 = tpu.matmul %64, %65, %cst_20 {dimension_numbers = #tpu.dot_dimension_numbers<[1], [0], [0], [1], [0, 0, 1, 1], [], []>} : vector<8x32xf32>, vector<32x32xf32>, vector<8x32xf32> -> vector<8x32xf32>
    %c0_21 = arith.constant 0 : index
    %c0_22 = arith.constant 0 : index
    %67 = vector.load %arg8[%c0_21, %c0_22] : memref<1x32xf32, #tpu.memory_space<vmem>>, vector<1x32xf32>
    %68 = vector.broadcast %67 : vector<1x32xf32> to vector<8x32xf32>
    %69 = arith.addf %66, %68 : vector<8x32xf32>
    %70 = arith.addf %69, %31 : vector<8x32xf32>
    %c0_23 = arith.constant 0 : index
    %c0_24 = arith.constant 0 : index
    %71 = vector.load %arg9[%c0_23, %c0_24] : memref<1x32xf32, #tpu.memory_space<vmem>>, vector<1x32xf32>
    %c0_25 = arith.constant 0 : index
    %c0_26 = arith.constant 0 : index
    %72 = vector.load %arg10[%c0_25, %c0_26] : memref<1x32xf32, #tpu.memory_space<vmem>>, vector<1x32xf32>
    %cst_27 = arith.constant dense<0.000000e+00> : vector<8xf32>
    %73 = vector.multi_reduction <add>, %70, %cst_27 [1] : vector<8x32xf32> to vector<8xf32>
    %74 = vector.shape_cast %73 : vector<8xf32> to vector<8x1xf32>
    %cst_28 = arith.constant 3.200000e+01 : f32
    %75 = vector.broadcast %cst_28 : f32 to vector<8x1xf32>
    %76 = arith.divf %74, %75 : vector<8x1xf32>
    %77 = vector.broadcast %76 : vector<8x1xf32> to vector<8x32xf32>
    %78 = arith.subf %70, %77 : vector<8x32xf32>
    %79 = arith.mulf %78, %78 : vector<8x32xf32>
    %cst_29 = arith.constant dense<0.000000e+00> : vector<8xf32>
    %80 = vector.multi_reduction <add>, %79, %cst_29 [1] : vector<8x32xf32> to vector<8xf32>
    %81 = vector.shape_cast %80 : vector<8xf32> to vector<8x1xf32>
    %cst_30 = arith.constant 3.200000e+01 : f32
    %82 = vector.broadcast %cst_30 : f32 to vector<8x1xf32>
    %83 = arith.divf %81, %82 : vector<8x1xf32>
    %84 = vector.broadcast %76 : vector<8x1xf32> to vector<8x32xf32>
    %85 = arith.subf %70, %84 : vector<8x32xf32>
    %cst_31 = arith.constant 9.99999974E-6 : f32
    %86 = vector.broadcast %cst_31 : f32 to vector<8x1xf32>
    %87 = arith.addf %83, %86 : vector<8x1xf32>
    %88 = math.rsqrt %87 : vector<8x1xf32>
    %89 = vector.broadcast %88 : vector<8x1xf32> to vector<8x32xf32>
    %90 = arith.mulf %85, %89 : vector<8x32xf32>
    %91 = vector.broadcast %71 : vector<1x32xf32> to vector<8x32xf32>
    %92 = arith.mulf %90, %91 : vector<8x32xf32>
    %93 = vector.broadcast %72 : vector<1x32xf32> to vector<8x32xf32>
    %94 = arith.addf %92, %93 : vector<8x32xf32>
    %c0_32 = arith.constant 0 : index
    %c0_33 = arith.constant 0 : index
    %95 = vector.load %arg11[%c0_32, %c0_33] : memref<32x32xf32, #tpu.memory_space<vmem>>, vector<32x32xf32>
    %cst_34 = arith.constant dense<0.000000e+00> : vector<8x32xf32>
    %96 = tpu.matmul %94, %95, %cst_34 {dimension_numbers = #tpu.dot_dimension_numbers<[1], [0], [0], [1], [0, 0, 1, 1], [], []>} : vector<8x32xf32>, vector<32x32xf32>, vector<8x32xf32> -> vector<8x32xf32>
    %c0_35 = arith.constant 0 : index
    %c0_36 = arith.constant 0 : index
    %97 = vector.load %arg12[%c0_35, %c0_36] : memref<1x32xf32, #tpu.memory_space<vmem>>, vector<1x32xf32>
    %98 = vector.broadcast %97 : vector<1x32xf32> to vector<8x32xf32>
    %99 = arith.addf %96, %98 : vector<8x32xf32>
    %cst_37 = arith.constant 0.000000e+00 : f32
    %100 = vector.broadcast %cst_37 : f32 to vector<8x32xf32>
    %101 = arith.maximumf %99, %100 : vector<8x32xf32>
    %c0_38 = arith.constant 0 : index
    %c0_39 = arith.constant 0 : index
    %102 = vector.load %arg13[%c0_38, %c0_39] : memref<32x32xf32, #tpu.memory_space<vmem>>, vector<32x32xf32>
    %cst_40 = arith.constant dense<0.000000e+00> : vector<8x32xf32>
    %103 = tpu.matmul %101, %102, %cst_40 {dimension_numbers = #tpu.dot_dimension_numbers<[1], [0], [0], [1], [0, 0, 1, 1], [], []>} : vector<8x32xf32>, vector<32x32xf32>, vector<8x32xf32> -> vector<8x32xf32>
    %c0_41 = arith.constant 0 : index
    %c0_42 = arith.constant 0 : index
    %104 = vector.load %arg14[%c0_41, %c0_42] : memref<1x32xf32, #tpu.memory_space<vmem>>, vector<1x32xf32>
    %105 = vector.broadcast %104 : vector<1x32xf32> to vector<8x32xf32>
    %106 = arith.addf %103, %105 : vector<8x32xf32>
    %107 = arith.addf %106, %94 : vector<8x32xf32>
    %c0_43 = arith.constant 0 : index
    %c0_44 = arith.constant 0 : index
    %c0_45 = arith.constant 0 : index
    %108 = vector.load %arg15[%c0_43, %c0_44, %c0_45] : memref<1x8x32xf32, #tpu.memory_space<vmem>>, vector<1x8x32xf32>
    %109 = vector.shape_cast %108 : vector<1x8x32xf32> to vector<8x32xf32>
    %110 = vector.shape_cast %107 : vector<8x32xf32> to vector<1x8x32xf32>
    tpu.vector_store %arg15[%c0_43, %c0_44, %c0_45], %110 {strides = array<i32>} : memref<1x8x32xf32, #tpu.memory_space<vmem>>, vector<1x8x32xf32>,
    return
  }
  func.func @transform_0(%arg0: i32, %arg1: i32) -> (i32, i32, i32) {
    %c0_i32 = arith.constant 0 : i32
    %c0_i32_0 = arith.constant 0 : i32
    %c0_i32_1 = arith.constant 0 : i32
    return %arg0, %c0_i32, %c0_i32_0 : i32, i32, i32
  }
  func.func @transform_1(%arg0: i32, %arg1: i32) -> (i32, i32) {
    %c0_i32 = arith.constant 0 : i32
    %c0_i32_0 = arith.constant 0 : i32
    %c0_i32_1 = arith.constant 0 : i32
    return %c0_i32, %c0_i32_0 : i32, i32
  }
  func.func @transform_2(%arg0: i32, %arg1: i32) -> (i32, i32) {
    %c0_i32 = arith.constant 0 : i32
    %c0_i32_0 = arith.constant 0 : i32
    %c0_i32_1 = arith.constant 0 : i32
    return %c0_i32, %c0_i32_0 : i32, i32
  }
  func.func @transform_3(%arg0: i32, %arg1: i32) -> (i32, i32) {
    %c0_i32 = arith.constant 0 : i32
    %c0_i32_0 = arith.constant 0 : i32
    %c0_i32_1 = arith.constant 0 : i32
    return %c0_i32, %c0_i32_0 : i32, i32
  }
  func.func @transform_4(%arg0: i32, %arg1: i32) -> (i32, i32) {
    %c0_i32 = arith.constant 0 : i32
    %c0_i32_0 = arith.constant 0 : i32
    %c0_i32_1 = arith.constant 0 : i32
    return %c0_i32, %c0_i32_0 : i32, i32
  }
  func.func @transform_5(%arg0: i32, %arg1: i32) -> (i32, i32) {
    %c0_i32 = arith.constant 0 : i32
    %c0_i32_0 = arith.constant 0 : i32
    %c0_i32_1 = arith.constant 0 : i32
    return %c0_i32, %c0_i32_0 : i32, i32
  }
  func.func @transform_6(%arg0: i32, %arg1: i32) -> (i32, i32) {
    %c0_i32 = arith.constant 0 : i32
    %c0_i32_0 = arith.constant 0 : i32
    %c0_i32_1 = arith.constant 0 : i32
    return %c0_i32, %c0_i32_0 : i32, i32
  }
  func.func @transform_7(%arg0: i32, %arg1: i32) -> (i32, i32) {
    %c0_i32 = arith.constant 0 : i32
    %c0_i32_0 = arith.constant 0 : i32
    %c0_i32_1 = arith.constant 0 : i32
    return %c0_i32, %c0_i32_0 : i32, i32
  }
  func.func @transform_8(%arg0: i32, %arg1: i32) -> (i32, i32) {
    %c0_i32 = arith.constant 0 : i32
    %c0_i32_0 = arith.constant 0 : i32
    %c0_i32_1 = arith.constant 0 : i32
    return %c0_i32, %c0_i32_0 : i32, i32
  }
  func.func @transform_9(%arg0: i32, %arg1: i32) -> (i32, i32) {
    %c0_i32 = arith.constant 0 : i32
    %c0_i32_0 = arith.constant 0 : i32
    %c0_i32_1 = arith.constant 0 : i32
    return %c0_i32, %c0_i32_0 : i32, i32
  }
  func.func @transform_10(%arg0: i32, %arg1: i32) -> (i32, i32) {
    %c0_i32 = arith.constant 0 : i32
    %c0_i32_0 = arith.constant 0 : i32
    %c0_i32_1 = arith.constant 0 : i32
    return %c0_i32, %c0_i32_0 : i32, i32
  }
  func.func @transform_11(%arg0: i32, %arg1: i32) -> (i32, i32) {
    %c0_i32 = arith.constant 0 : i32
    %c0_i32_0 = arith.constant 0 : i32
    %c0_i32_1 = arith.constant 0 : i32
    return %c0_i32, %c0_i32_0 : i32, i32
  }
  func.func @transform_12(%arg0: i32, %arg1: i32) -> (i32, i32) {
    %c0_i32 = arith.constant 0 : i32
    %c0_i32_0 = arith.constant 0 : i32
    %c0_i32_1 = arith.constant 0 : i32
    return %c0_i32, %c0_i32_0 : i32, i32
  }
  func.func @transform_13(%arg0: i32, %arg1: i32) -> (i32, i32, i32) {
    %c0_i32 = arith.constant 0 : i32
    %c0_i32_0 = arith.constant 0 : i32
    return %arg0, %arg1, %c0_i32 : i32, i32, i32
  }
}

module attributes {stable_mosaic.version = 11 : i64} {
  func.func @block_kernel(%arg0: i32, %arg1: i32, %arg2: memref<1x8x32xf32, #tpu.memory_space<vmem>>, %arg3: memref<1x32xf32, #tpu.memory_space<vmem>>, %arg4: memref<1x32xf32, #tpu.memory_space<vmem>>, %arg5: memref<32x32xf32, #tpu.memory_space<vmem>>, %arg6: memref<32x64xf32, #tpu.memory_space<vmem>>, %arg7: memref<32x32xf32, #tpu.memory_space<vmem>>, %arg8: memref<1x32xf32, #tpu.memory_space<vmem>>, %arg9: memref<1x32xf32, #tpu.memory_space<vmem>>, %arg10: memref<1x32xf32, #tpu.memory_space<vmem>>, %arg11: memref<32x32xf32, #tpu.memory_space<vmem>>, %arg12: memref<1x32xf32, #tpu.memory_space<vmem>>, %arg13: memref<32x32xf32, #tpu.memory_space<vmem>>, %arg14: memref<1x32xf32, #tpu.memory_space<vmem>>, %arg15: memref<1x8x32xf32, #tpu.memory_space<vmem>>, %arg16: memref<4x8x8xf32, #tpu.memory_space<vmem>>, %arg17: memref<4x8x8xf32, #tpu.memory_space<vmem>>) attributes {dimension_semantics = [#tpu.dimension_semantics<parallel>, #tpu.dimension_semantics<arbitrary>], iteration_bounds = array<i64: 2, 1>, scalar_prefetch = 0 : i64, scratch_operands = 2 : i64, tpu.core_type = #tpu.core_type<tc>, window_params = [{transform_indices = @transform_0, window_bounds = array<i64: 1, 8, 32>}, {pipeline_mode = #tpu.pipeline_mode<synchronous>, transform_indices = @transform_1, window_bounds = array<i64: 1, 32>}, {pipeline_mode = #tpu.pipeline_mode<synchronous>, transform_indices = @transform_2, window_bounds = array<i64: 1, 32>}, {pipeline_mode = #tpu.pipeline_mode<synchronous>, transform_indices = @transform_3, window_bounds = array<i64: 32, 32>}, {pipeline_mode = #tpu.pipeline_mode<synchronous>, transform_indices = @transform_4, window_bounds = array<i64: 32, 64>}, {pipeline_mode = #tpu.pipeline_mode<synchronous>, transform_indices = @transform_5, window_bounds = array<i64: 32, 32>}, {pipeline_mode = #tpu.pipeline_mode<synchronous>, transform_indices = @transform_6, window_bounds = array<i64: 1, 32>}, {pipeline_mode = #tpu.pipeline_mode<synchronous>, transform_indices = @transform_7, window_bounds = array<i64: 1, 32>}, {pipeline_mode = #tpu.pipeline_mode<synchronous>, transform_indices = @transform_8, window_bounds = array<i64: 1, 32>}, {pipeline_mode = #tpu.pipeline_mode<synchronous>, transform_indices = @transform_9, window_bounds = array<i64: 32, 32>}, {pipeline_mode = #tpu.pipeline_mode<synchronous>, transform_indices = @transform_10, window_bounds = array<i64: 1, 32>}, {pipeline_mode = #tpu.pipeline_mode<synchronous>, transform_indices = @transform_11, window_bounds = array<i64: 32, 32>}, {pipeline_mode = #tpu.pipeline_mode<synchronous>, transform_indices = @transform_12, window_bounds = array<i64: 1, 32>}, {transform_indices = @transform_13, window_bounds = array<i64: 1, 8, 32>}]} {
    %c0 = arith.constant 0 : index
    %c0_0 = arith.constant 0 : index
    %0 = vector.load %arg3[%c0, %c0_0] : memref<1x32xf32, #tpu.memory_space<vmem>>, vector<1x32xf32>
    %c0_1 = arith.constant 0 : index
    %c0_2 = arith.constant 0 : index
    %1 = vector.load %arg4[%c0_1, %c0_2] : memref<1x32xf32, #tpu.memory_space<vmem>>, vector<1x32xf32>
    %c0_i32 = arith.constant 0 : i32
    %2 = arith.cmpi eq, %arg1, %c0_i32 : i32
    %3 = arith.extui %2 : i1 to i32
    %c0_i32_3 = arith.constant 0 : i32
    %4 = arith.cmpi ne, %3, %c0_i32_3 : i32
    scf.if %4 {
      %c0_46 = arith.constant 0 : index
      %c0_47 = arith.constant 0 : index
      %c0_48 = arith.constant 0 : index
      %111 = vector.load %arg2[%c0_46, %c0_47, %c0_48] : memref<1x8x32xf32, #tpu.memory_space<vmem>>, vector<1x8x32xf32>
      %112 = vector.shape_cast %111 : vector<1x8x32xf32> to vector<8x32xf32>
      %cst_49 = arith.constant dense<0.000000e+00> : vector<8xf32>
      %113 = vector.multi_reduction <add>, %112, %cst_49 [1] : vector<8x32xf32> to vector<8xf32>
      %114 = vector.shape_cast %113 : vector<8xf32> to vector<8x1xf32>
      %cst_50 = arith.constant 3.200000e+01 : f32
      %115 = vector.broadcast %cst_50 : f32 to vector<8x1xf32>
      %116 = arith.divf %114, %115 : vector<8x1xf32>
      %117 = vector.broadcast %116 : vector<8x1xf32> to vector<8x32xf32>
      %118 = arith.subf %112, %117 : vector<8x32xf32>
      %119 = arith.mulf %118, %118 : vector<8x32xf32>
      %cst_51 = arith.constant dense<0.000000e+00> : vector<8xf32>
      %120 = vector.multi_reduction <add>, %119, %cst_51 [1] : vector<8x32xf32> to vector<8xf32>
      %121 = vector.shape_cast %120 : vector<8xf32> to vector<8x1xf32>
      %cst_52 = arith.constant 3.200000e+01 : f32
      %122 = vector.broadcast %cst_52 : f32 to vector<8x1xf32>
      %123 = arith.divf %121, %122 : vector<8x1xf32>
      %124 = vector.broadcast %116 : vector<8x1xf32> to vector<8x32xf32>
      %125 = arith.subf %112, %124 : vector<8x32xf32>
      %cst_53 = arith.constant 9.99999974E-6 : f32
      %126 = vector.broadcast %cst_53 : f32 to vector<8x1xf32>
      %127 = arith.addf %123, %126 : vector<8x1xf32>
      %128 = math.rsqrt %127 : vector<8x1xf32>
      %129 = vector.broadcast %128 : vector<8x1xf32> to vector<8x32xf32>
      %130 = arith.mulf %125, %129 : vector<8x32xf32>
      %131 = vector.broadcast %0 : vector<1x32xf32> to vector<8x32xf32>
      %132 = arith.mulf %130, %131 : vector<8x32xf32>
      %133 = vector.broadcast %1 : vector<1x32xf32> to vector<8x32xf32>
      %134 = arith.addf %132, %133 : vector<8x32xf32>
      %c0_54 = arith.constant 0 : index
      %c0_55 = arith.constant 0 : index
      %135 = vector.load %arg6[%c0_54, %c0_55] : memref<32x64xf32, #tpu.memory_space<vmem>>, vector<32x64xf32>
      %cst_56 = arith.constant dense<0.000000e+00> : vector<8x64xf32>
      %136 = tpu.matmul %134, %135, %cst_56 {dimension_numbers = #tpu.dot_dimension_numbers<[1], [0], [0], [1], [0, 0, 1, 1], [], []>} : vector<8x32xf32>, vector<32x64xf32>, vector<8x64xf32> -> vector<8x64xf32>
      %137 = vector.extract_strided_slice %136 {offsets = [0, 0], sizes = [8, 8], strides = [1, 1]} : vector<8x64xf32> to vector<8x8xf32>
      %138 = vector.extract_strided_slice %136 {offsets = [0, 8], sizes = [8, 8], strides = [1, 1]} : vector<8x64xf32> to vector<8x8xf32>
      %139 = vector.extract_strided_slice %136 {offsets = [0, 16], sizes = [8, 8], strides = [1, 1]} : vector<8x64xf32> to vector<8x8xf32>
      %140 = vector.extract_strided_slice %136 {offsets = [0, 24], sizes = [8, 8], strides = [1, 1]} : vector<8x64xf32> to vector<8x8xf32>
      %141 = vector.shape_cast %137 : vector<8x8xf32> to vector<1x8x8xf32>
      %142 = vector.shape_cast %138 : vector<8x8xf32> to vector<1x8x8xf32>
      %143 = vector.shape_cast %139 : vector<8x8xf32> to vector<1x8x8xf32>
      %144 = vector.shape_cast %140 : vector<8x8xf32> to vector<1x8x8xf32>
      %145 = tpu.concatenate %141, %142, %143, %144 in 0 : vector<1x8x8xf32>, vector<1x8x8xf32>, vector<1x8x8xf32>, vector<1x8x8xf32> -> vector<4x8x8xf32>
      %c0_57 = arith.constant 0 : index
      %c0_58 = arith.constant 0 : index
      %c0_59 = arith.constant 0 : index
      %146 = vector.load %arg16[%c0_57, %c0_58, %c0_59] : memref<4x8x8xf32, #tpu.memory_space<vmem>>, vector<4x8x8xf32>
      tpu.vector_store %arg16[%c0_57, %c0_58, %c0_59], %145 {strides = array<i32>} : memref<4x8x8xf32, #tpu.memory_space<vmem>>, vector<4x8x8xf32>,
      %147 = vector.extract_strided_slice %136 {offsets = [0, 32], sizes = [8, 8], strides = [1, 1]} : vector<8x64xf32> to vector<8x8xf32>
      %148 = vector.extract_strided_slice %136 {offsets = [0, 40], sizes = [8, 8], strides = [1, 1]} : vector<8x64xf32> to vector<8x8xf32>
      %149 = vector.extract_strided_slice %136 {offsets = [0, 48], sizes = [8, 8], strides = [1, 1]} : vector<8x64xf32> to vector<8x8xf32>
      %150 = vector.extract_strided_slice %136 {offsets = [0, 56], sizes = [8, 8], strides = [1, 1]} : vector<8x64xf32> to vector<8x8xf32>
      %151 = vector.shape_cast %147 : vector<8x8xf32> to vector<1x8x8xf32>
      %152 = vector.shape_cast %148 : vector<8x8xf32> to vector<1x8x8xf32>
      %153 = vector.shape_cast %149 : vector<8x8xf32> to vector<1x8x8xf32>
      %154 = vector.shape_cast %150 : vector<8x8xf32> to vector<1x8x8xf32>
      %155 = tpu.concatenate %151, %152, %153, %154 in 0 : vector<1x8x8xf32>, vector<1x8x8xf32>, vector<1x8x8xf32>, vector<1x8x8xf32> -> vector<4x8x8xf32>
      %c0_60 = arith.constant 0 : index
      %c0_61 = arith.constant 0 : index
      %c0_62 = arith.constant 0 : index
      %156 = vector.load %arg17[%c0_60, %c0_61, %c0_62] : memref<4x8x8xf32, #tpu.memory_space<vmem>>, vector<4x8x8xf32>
      tpu.vector_store %arg17[%c0_60, %c0_61, %c0_62], %155 {strides = array<i32>} : memref<4x8x8xf32, #tpu.memory_space<vmem>>, vector<4x8x8xf32>,
    } else {
    }
    %c8_i32 = arith.constant 8 : i32
    %5 = arith.muli %arg1, %c8_i32 : i32
    %6 = tpu.assume_multiple %5, 8 : i32
    %c0_4 = arith.constant 0 : index
    %7 = arith.index_cast %6 : i32 to index
    %c0_5 = arith.constant 0 : index
    %8 = vector.load %arg2[%c0_4, %7, %c0_5] : memref<1x8x32xf32, #tpu.memory_space<vmem>>, vector<1x8x32xf32>
    %9 = vector.shape_cast %8 : vector<1x8x32xf32> to vector<8x32xf32>
    %cst = arith.constant dense<0.000000e+00> : vector<8xf32>
    %10 = vector.multi_reduction <add>, %9, %cst [1] : vector<8x32xf32> to vector<8xf32>
    %11 = vector.shape_cast %10 : vector<8xf32> to vector<8x1xf32>
    %cst_6 = arith.constant 3.200000e+01 : f32
    %12 = vector.broadcast %cst_6 : f32 to vector<8x1xf32>
    %13 = arith.divf %11, %12 : vector<8x1xf32>
    %14 = vector.broadcast %13 : vector<8x1xf32> to vector<8x32xf32>
    %15 = arith.subf %9, %14 : vector<8x32xf32>
    %16 = arith.mulf %15, %15 : vector<8x32xf32>
    %cst_7 = arith.constant dense<0.000000e+00> : vector<8xf32>
    %17 = vector.multi_reduction <add>, %16, %cst_7 [1] : vector<8x32xf32> to vector<8xf32>
    %18 = vector.shape_cast %17 : vector<8xf32> to vector<8x1xf32>
    %cst_8 = arith.constant 3.200000e+01 : f32
    %19 = vector.broadcast %cst_8 : f32 to vector<8x1xf32>
    %20 = arith.divf %18, %19 : vector<8x1xf32>
    %21 = vector.broadcast %13 : vector<8x1xf32> to vector<8x32xf32>
    %22 = arith.subf %9, %21 : vector<8x32xf32>
    %cst_9 = arith.constant 9.99999974E-6 : f32
    %23 = vector.broadcast %cst_9 : f32 to vector<8x1xf32>
    %24 = arith.addf %20, %23 : vector<8x1xf32>
    %25 = math.rsqrt %24 : vector<8x1xf32>
    %26 = vector.broadcast %25 : vector<8x1xf32> to vector<8x32xf32>
    %27 = arith.mulf %22, %26 : vector<8x32xf32>
    %28 = vector.broadcast %0 : vector<1x32xf32> to vector<8x32xf32>
    %29 = arith.mulf %27, %28 : vector<8x32xf32>
    %30 = vector.broadcast %1 : vector<1x32xf32> to vector<8x32xf32>
    %31 = arith.addf %29, %30 : vector<8x32xf32>
    %c0_10 = arith.constant 0 : index
    %c0_11 = arith.constant 0 : index
    %32 = vector.load %arg5[%c0_10, %c0_11] : memref<32x32xf32, #tpu.memory_space<vmem>>, vector<32x32xf32>
    %cst_12 = arith.constant dense<0.000000e+00> : vector<8x32xf32>
    %33 = tpu.matmul %31, %32, %cst_12 {dimension_numbers = #tpu.dot_dimension_numbers<[1], [0], [0], [1], [0, 0, 1, 1], [], []>} : vector<8x32xf32>, vector<32x32xf32>, vector<8x32xf32> -> vector<8x32xf32>
    %34 = vector.extract_strided_slice %33 {offsets = [0, 0], sizes = [8, 8], strides = [1, 1]} : vector<8x32xf32> to vector<8x8xf32>
    %35 = vector.extract_strided_slice %33 {offsets = [0, 8], sizes = [8, 8], strides = [1, 1]} : vector<8x32xf32> to vector<8x8xf32>
    %36 = vector.extract_strided_slice %33 {offsets = [0, 16], sizes = [8, 8], strides = [1, 1]} : vector<8x32xf32> to vector<8x8xf32>
    %37 = vector.extract_strided_slice %33 {offsets = [0, 24], sizes = [8, 8], strides = [1, 1]} : vector<8x32xf32> to vector<8x8xf32>
    %38 = vector.shape_cast %34 : vector<8x8xf32> to vector<1x8x8xf32>
    %39 = vector.shape_cast %35 : vector<8x8xf32> to vector<1x8x8xf32>
    %40 = vector.shape_cast %36 : vector<8x8xf32> to vector<1x8x8xf32>
    %41 = vector.shape_cast %37 : vector<8x8xf32> to vector<1x8x8xf32>
    %42 = tpu.concatenate %38, %39, %40, %41 in 0 : vector<1x8x8xf32>, vector<1x8x8xf32>, vector<1x8x8xf32>, vector<1x8x8xf32> -> vector<4x8x8xf32>
    %43 = tpu.iota {dimensions = array<i32: 0>} : vector<8x8xi32>
    %44 = vector.broadcast %6 : i32 to vector<8x8xi32>
    %45 = arith.addi %44, %43 : vector<8x8xi32>
    %cst_13 = arith.constant 0xFF800000 : f32
    %46 = vector.broadcast %cst_13 : f32 to vector<4x8x1xf32>
    %cst_14 = arith.constant 0.000000e+00 : f32
    %47 = vector.broadcast %cst_14 : f32 to vector<4x8x1xf32>
    %cst_15 = arith.constant 0.000000e+00 : f32
    %48 = vector.broadcast %cst_15 : f32 to vector<4x8x8xf32>
    %c1_i32 = arith.constant 1 : i32
    %49 = arith.addi %arg1, %c1_i32 : i32
    %c0_i32_16 = arith.constant 0 : i32
    %50 = arith.subi %49, %c0_i32_16 : i32
    %51 = arith.addi %c0_i32_16, %50 : i32
    %c1_i32_17 = arith.constant 1 : i32
    %52:3 = scf.for %arg18 = %c0_i32_16 to %51 step %c1_i32_17 iter_args(%arg19 = %46, %arg20 = %47, %arg21 = %48) -> (vector<4x8x1xf32>, vector<4x8x1xf32>, vector<4x8x8xf32>)  : i32 {
      %c8_i32_46 = arith.constant 8 : i32
      %111 = arith.muli %arg18, %c8_i32_46 : i32
      %112 = tpu.assume_multiple %111, 8 : i32
      %c0_47 = arith.constant 0 : index
      %113 = arith.index_cast %112 : i32 to index
      %c0_48 = arith.constant 0 : index
      %114 = vector.load %arg16[%c0_47, %113, %c0_48] : memref<4x8x8xf32, #tpu.memory_space<vmem>>, vector<4x8x8xf32>
      %c0_49 = arith.constant 0 : index
      %115 = arith.index_cast %112 : i32 to index
      %c0_50 = arith.constant 0 : index
      %116 = vector.load %arg17[%c0_49, %115, %c0_50] : memref<4x8x8xf32, #tpu.memory_space<vmem>>, vector<4x8x8xf32>
      "tpu.trace_start"() <{level = 10 : i32, message = "hqd,hkd->hqk"}> : () -> ()
      %cst_51 = arith.constant dense<0.000000e+00> : vector<4x8x8xf32>
      %117 = tpu.matmul %42, %114, %cst_51 {dimension_numbers = #tpu.dot_dimension_numbers<[2], [2], [1], [1], [0, 0, 0, 1, 1, 1], [0], [0]>} : vector<4x8x8xf32>, vector<4x8x8xf32>, vector<4x8x8xf32> -> vector<4x8x8xf32>
      "tpu.trace_stop"() : () -> ()
      %118 = tpu.iota {dimensions = array<i32: 1>} : vector<8x8xi32>
      %119 = vector.broadcast %112 : i32 to vector<8x8xi32>
      %120 = arith.addi %119, %118 : vector<8x8xi32>
      %121 = arith.cmpi sge, %45, %120 : vector<8x8xi32>
      %122 = vector.shape_cast %121 : vector<8x8xi1> to vector<1x8x8xi1>
      %cst_52 = arith.constant 0.000000e+00 : f32
      %123 = vector.broadcast %cst_52 : f32 to vector<4x8x8xf32>
      %124 = arith.cmpf one, %117, %123 : vector<4x8x8xf32>
      %125 = vector.broadcast %122 : vector<1x8x8xi1> to vector<4x8x8xi1>
      %126 = arith.andi %125, %124 : vector<4x8x8xi1>
      %cst_53 = arith.constant 0xFF800000 : f32
      %127 = vector.broadcast %cst_53 : f32 to vector<4x8x8xf32>
      %128 = arith.select %126, %117, %127 : vector<4x8x8xi1>, vector<4x8x8xf32>
      %cst_54 = arith.constant dense<0xFF800000> : vector<4x8xf32>
      %129 = vector.multi_reduction <maximumf>, %128, %cst_54 [2] : vector<4x8x8xf32> to vector<4x8xf32>
      %130 = vector.shape_cast %129 : vector<4x8xf32> to vector<4x8x1xf32>
      %131 = arith.maximumf %arg19, %130 : vector<4x8x1xf32>
      %132 = arith.subf %arg19, %131 : vector<4x8x1xf32>
      %133 = math.exp %132 : vector<4x8x1xf32>
      %134 = vector.broadcast %131 : vector<4x8x1xf32> to vector<4x8x8xf32>
      %135 = arith.subf %128, %134 : vector<4x8x8xf32>
      %136 = math.exp %135 : vector<4x8x8xf32>
      %137 = arith.mulf %133, %arg20 : vector<4x8x1xf32>
      %cst_55 = arith.constant dense<0.000000e+00> : vector<4x8xf32>
      %138 = vector.multi_reduction <add>, %136, %cst_55 [2] : vector<4x8x8xf32> to vector<4x8xf32>
      %139 = vector.shape_cast %138 : vector<4x8xf32> to vector<4x8x1xf32>
      %140 = arith.addf %137, %139 : vector<4x8x1xf32>
      %141 = vector.broadcast %133 : vector<4x8x1xf32> to vector<4x8x8xf32>
      %142 = arith.mulf %141, %arg21 : vector<4x8x8xf32>
      "tpu.trace_start"() <{level = 10 : i32, message = "hqk,hkd->hqd"}> : () -> ()
      %cst_56 = arith.constant dense<0.000000e+00> : vector<4x8x8xf32>
      %143 = tpu.matmul %136, %116, %cst_56 {dimension_numbers = #tpu.dot_dimension_numbers<[2], [1], [1], [2], [0, 0, 0, 1, 1, 2], [0], [0]>} : vector<4x8x8xf32>, vector<4x8x8xf32>, vector<4x8x8xf32> -> vector<4x8x8xf32>
      "tpu.trace_stop"() : () -> ()
      %144 = arith.addf %142, %143 : vector<4x8x8xf32>
      scf.yield %131, %140, %144 : vector<4x8x1xf32>, vector<4x8x1xf32>, vector<4x8x8xf32>
    }
    %53 = tpu.reciprocal %52#1 {approx = true} : vector<4x8x1xf32> -> vector<4x8x1xf32>
    %54 = vector.broadcast %53 : vector<4x8x1xf32> to vector<4x8x8xf32>
    %55 = arith.mulf %52#2, %54 : vector<4x8x8xf32>
    %56 = vector.extract_strided_slice %55 {offsets = [0, 0, 0], sizes = [1, 8, 8], strides = [1, 1, 1]} : vector<4x8x8xf32> to vector<1x8x8xf32>
    %57 = vector.shape_cast %56 : vector<1x8x8xf32> to vector<8x8xf32>
    %58 = vector.extract_strided_slice %55 {offsets = [1, 0, 0], sizes = [1, 8, 8], strides = [1, 1, 1]} : vector<4x8x8xf32> to vector<1x8x8xf32>
    %59 = vector.shape_cast %58 : vector<1x8x8xf32> to vector<8x8xf32>
    %60 = vector.extract_strided_slice %55 {offsets = [2, 0, 0], sizes = [1, 8, 8], strides = [1, 1, 1]} : vector<4x8x8xf32> to vector<1x8x8xf32>
    %61 = vector.shape_cast %60 : vector<1x8x8xf32> to vector<8x8xf32>
    %62 = vector.extract_strided_slice %55 {offsets = [3, 0, 0], sizes = [1, 8, 8], strides = [1, 1, 1]} : vector<4x8x8xf32> to vector<1x8x8xf32>
    %63 = vector.shape_cast %62 : vector<1x8x8xf32> to vector<8x8xf32>
    %64 = tpu.concatenate %57, %59, %61, %63 in 1 : vector<8x8xf32>, vector<8x8xf32>, vector<8x8xf32>, vector<8x8xf32> -> vector<8x32xf32>
    %c0_18 = arith.constant 0 : index
    %c0_19 = arith.constant 0 : index
    %65 = vector.load %arg7[%c0_18, %c0_19] : memref<32x32xf32, #tpu.memory_space<vmem>>, vector<32x32xf32>
    %cst_20 = arith.constant dense<0.000000e+00> : vector<8x32xf32>
    %66 = tpu.matmul %64, %65, %cst_20 {dimension_numbers = #tpu.dot_dimension_numbers<[1], [0], [0], [1], [0, 0, 1, 1], [], []>} : vector<8x32xf32>, vector<32x32xf32>, vector<8x32xf32> -> vector<8x32xf32>
    %c0_21 = arith.constant 0 : index
    %c0_22 = arith.constant 0 : index
    %67 = vector.load %arg8[%c0_21, %c0_22] : memref<1x32xf32, #tpu.memory_space<vmem>>, vector<1x32xf32>
    %68 = vector.broadcast %67 : vector<1x32xf32> to vector<8x32xf32>
    %69 = arith.addf %66, %68 : vector<8x32xf32>
    %70 = arith.addf %69, %31 : vector<8x32xf32>
    %c0_23 = arith.constant 0 : index
    %c0_24 = arith.constant 0 : index
    %71 = vector.load %arg9[%c0_23, %c0_24] : memref<1x32xf32, #tpu.memory_space<vmem>>, vector<1x32xf32>
    %c0_25 = arith.constant 0 : index
    %c0_26 = arith.constant 0 : index
    %72 = vector.load %arg10[%c0_25, %c0_26] : memref<1x32xf32, #tpu.memory_space<vmem>>, vector<1x32xf32>
    %cst_27 = arith.constant dense<0.000000e+00> : vector<8xf32>
    %73 = vector.multi_reduction <add>, %70, %cst_27 [1] : vector<8x32xf32> to vector<8xf32>
    %74 = vector.shape_cast %73 : vector<8xf32> to vector<8x1xf32>
    %cst_28 = arith.constant 3.200000e+01 : f32
    %75 = vector.broadcast %cst_28 : f32 to vector<8x1xf32>
    %76 = arith.divf %74, %75 : vector<8x1xf32>
    %77 = vector.broadcast %76 : vector<8x1xf32> to vector<8x32xf32>
    %78 = arith.subf %70, %77 : vector<8x32xf32>
    %79 = arith.mulf %78, %78 : vector<8x32xf32>
    %cst_29 = arith.constant dense<0.000000e+00> : vector<8xf32>
    %80 = vector.multi_reduction <add>, %79, %cst_29 [1] : vector<8x32xf32> to vector<8xf32>
    %81 = vector.shape_cast %80 : vector<8xf32> to vector<8x1xf32>
    %cst_30 = arith.constant 3.200000e+01 : f32
    %82 = vector.broadcast %cst_30 : f32 to vector<8x1xf32>
    %83 = arith.divf %81, %82 : vector<8x1xf32>
    %84 = vector.broadcast %76 : vector<8x1xf32> to vector<8x32xf32>
    %85 = arith.subf %70, %84 : vector<8x32xf32>
    %cst_31 = arith.constant 9.99999974E-6 : f32
    %86 = vector.broadcast %cst_31 : f32 to vector<8x1xf32>
    %87 = arith.addf %83, %86 : vector<8x1xf32>
    %88 = math.rsqrt %87 : vector<8x1xf32>
    %89 = vector.broadcast %88 : vector<8x1xf32> to vector<8x32xf32>
    %90 = arith.mulf %85, %89 : vector<8x32xf32>
    %91 = vector.broadcast %71 : vector<1x32xf32> to vector<8x32xf32>
    %92 = arith.mulf %90, %91 : vector<8x32xf32>
    %93 = vector.broadcast %72 : vector<1x32xf32> to vector<8x32xf32>
    %94 = arith.addf %92, %93 : vector<8x32xf32>
    %c0_32 = arith.constant 0 : index
    %c0_33 = arith.constant 0 : index
    %95 = vector.load %arg11[%c0_32, %c0_33] : memref<32x32xf32, #tpu.memory_space<vmem>>, vector<32x32xf32>
    %cst_34 = arith.constant dense<0.000000e+00> : vector<8x32xf32>
    %96 = tpu.matmul %94, %95, %cst_34 {dimension_numbers = #tpu.dot_dimension_numbers<[1], [0], [0], [1], [0, 0, 1, 1], [], []>} : vector<8x32xf32>, vector<32x32xf32>, vector<8x32xf32> -> vector<8x32xf32>
    %c0_35 = arith.constant 0 : index
    %c0_36 = arith.constant 0 : index
    %97 = vector.load %arg12[%c0_35, %c0_36] : memref<1x32xf32, #tpu.memory_space<vmem>>, vector<1x32xf32>
    %98 = vector.broadcast %97 : vector<1x32xf32> to vector<8x32xf32>
    %99 = arith.addf %96, %98 : vector<8x32xf32>
    %cst_37 = arith.constant 0.000000e+00 : f32
    %100 = vector.broadcast %cst_37 : f32 to vector<8x32xf32>
    %101 = arith.maximumf %99, %100 : vector<8x32xf32>
    %c0_38 = arith.constant 0 : index
    %c0_39 = arith.constant 0 : index
    %102 = vector.load %arg13[%c0_38, %c0_39] : memref<32x32xf32, #tpu.memory_space<vmem>>, vector<32x32xf32>
    %cst_40 = arith.constant dense<0.000000e+00> : vector<8x32xf32>
    %103 = tpu.matmul %101, %102, %cst_40 {dimension_numbers = #tpu.dot_dimension_numbers<[1], [0], [0], [1], [0, 0, 1, 1], [], []>} : vector<8x32xf32>, vector<32x32xf32>, vector<8x32xf32> -> vector<8x32xf32>
    %c0_41 = arith.constant 0 : index
    %c0_42 = arith.constant 0 : index
    %104 = vector.load %arg14[%c0_41, %c0_42] : memref<1x32xf32, #tpu.memory_space<vmem>>, vector<1x32xf32>
    %105 = vector.broadcast %104 : vector<1x32xf32> to vector<8x32xf32>
    %106 = arith.addf %103, %105 : vector<8x32xf32>
    %107 = arith.addf %106, %94 : vector<8x32xf32>
    %c0_43 = arith.constant 0 : index
    %c0_44 = arith.constant 0 : index
    %c0_45 = arith.constant 0 : index
    %108 = vector.load %arg15[%c0_43, %c0_44, %c0_45] : memref<1x8x32xf32, #tpu.memory_space<vmem>>, vector<1x8x32xf32>
    %109 = vector.shape_cast %108 : vector<1x8x32xf32> to vector<8x32xf32>
    %110 = vector.shape_cast %107 : vector<8x32xf32> to vector<1x8x32xf32>
    tpu.vector_store %arg15[%c0_43, %c0_44, %c0_45], %110 {strides = array<i32>} : memref<1x8x32xf32, #tpu.memory_space<vmem>>, vector<1x8x32xf32>,
    return
  }
  func.func @transform_0(%arg0: i32, %arg1: i32) -> (i32, i32, i32) {
    %c0_i32 = arith.constant 0 : i32
    %c0_i32_0 = arith.constant 0 : i32
    %c0_i32_1 = arith.constant 0 : i32
    return %arg0, %c0_i32, %c0_i32_0 : i32, i32, i32
  }
  func.func @transform_1(%arg0: i32, %arg1: i32) -> (i32, i32) {
    %c0_i32 = arith.constant 0 : i32
    %c0_i32_0 = arith.constant 0 : i32
    %c0_i32_1 = arith.constant 0 : i32
    return %c0_i32, %c0_i32_0 : i32, i32
  }
  func.func @transform_2(%arg0: i32, %arg1: i32) -> (i32, i32) {
    %c0_i32 = arith.constant 0 : i32
    %c0_i32_0 = arith.constant 0 : i32
    %c0_i32_1 = arith.constant 0 : i32
    return %c0_i32, %c0_i32_0 : i32, i32
  }
  func.func @transform_3(%arg0: i32, %arg1: i32) -> (i32, i32) {
    %c0_i32 = arith.constant 0 : i32
    %c0_i32_0 = arith.constant 0 : i32
    %c0_i32_1 = arith.constant 0 : i32
    return %c0_i32, %c0_i32_0 : i32, i32
  }
  func.func @transform_4(%arg0: i32, %arg1: i32) -> (i32, i32) {
    %c0_i32 = arith.constant 0 : i32
    %c0_i32_0 = arith.constant 0 : i32
    %c0_i32_1 = arith.constant 0 : i32
    return %c0_i32, %c0_i32_0 : i32, i32
  }
  func.func @transform_5(%arg0: i32, %arg1: i32) -> (i32, i32) {
    %c0_i32 = arith.constant 0 : i32
    %c0_i32_0 = arith.constant 0 : i32
    %c0_i32_1 = arith.constant 0 : i32
    return %c0_i32, %c0_i32_0 : i32, i32
  }
  func.func @transform_6(%arg0: i32, %arg1: i32) -> (i32, i32) {
    %c0_i32 = arith.constant 0 : i32
    %c0_i32_0 = arith.constant 0 : i32
    %c0_i32_1 = arith.constant 0 : i32
    return %c0_i32, %c0_i32_0 : i32, i32
  }
  func.func @transform_7(%arg0: i32, %arg1: i32) -> (i32, i32) {
    %c0_i32 = arith.constant 0 : i32
    %c0_i32_0 = arith.constant 0 : i32
    %c0_i32_1 = arith.constant 0 : i32
    return %c0_i32, %c0_i32_0 : i32, i32
  }
  func.func @transform_8(%arg0: i32, %arg1: i32) -> (i32, i32) {
    %c0_i32 = arith.constant 0 : i32
    %c0_i32_0 = arith.constant 0 : i32
    %c0_i32_1 = arith.constant 0 : i32
    return %c0_i32, %c0_i32_0 : i32, i32
  }
  func.func @transform_9(%arg0: i32, %arg1: i32) -> (i32, i32) {
    %c0_i32 = arith.constant 0 : i32
    %c0_i32_0 = arith.constant 0 : i32
    %c0_i32_1 = arith.constant 0 : i32
    return %c0_i32, %c0_i32_0 : i32, i32
  }
  func.func @transform_10(%arg0: i32, %arg1: i32) -> (i32, i32) {
    %c0_i32 = arith.constant 0 : i32
    %c0_i32_0 = arith.constant 0 : i32
    %c0_i32_1 = arith.constant 0 : i32
    return %c0_i32, %c0_i32_0 : i32, i32
  }
  func.func @transform_11(%arg0: i32, %arg1: i32) -> (i32, i32) {
    %c0_i32 = arith.constant 0 : i32
    %c0_i32_0 = arith.constant 0 : i32
    %c0_i32_1 = arith.constant 0 : i32
    return %c0_i32, %c0_i32_0 : i32, i32
  }
  func.func @transform_12(%arg0: i32, %arg1: i32) -> (i32, i32) {
    %c0_i32 = arith.constant 0 : i32
    %c0_i32_0 = arith.constant 0 : i32
    %c0_i32_1 = arith.constant 0 : i32
    return %c0_i32, %c0_i32_0 : i32, i32
  }
  func.func @transform_13(%arg0: i32, %arg1: i32) -> (i32, i32, i32) {
    %c0_i32 = arith.constant 0 : i32
    %c0_i32_0 = arith.constant 0 : i32
    return %arg0, %arg1, %c0_i32 : i32, i32, i32
  }
}

</mosaic_0001>

<llo_original>
// kernel: tpu_custom_call.1
$region0: #{tpu_custom_call.1}
  #allocation0 [shape = 'u32[]', space=smem, size = 0x4, offset = 0x4, fixed_abs, tag = 'smem constant byte address 0x4 - core index']
  #allocation1 [shape = 'u32[144,128]{1,0:T(1,128)}', space=vmem, size = 0x12000, scoped, tag = 'internal scratch']
  #allocation2 [shape = 'f32[4,8,8]{2,1,0:T(8,128)}', space=vmem, size = 0x4000, scoped, tag = 'scratch operand']
  #allocation3 [shape = 'f32[4,8,8]{2,1,0:T(8,128)}', space=vmem, size = 0x4000, scoped, tag = 'scratch operand']
  %s0 = inlined_call_operand.hbm [shape: f32[2,8,32], index: 0, kind: input, shape index: {}]
  %s1 = inlined_call_operand.vmem [shape: f32[1,32], index: 1, kind: input, shape index: {}]
  %s2 = inlined_call_operand.vmem [shape: f32[1,32], index: 2, kind: input, shape index: {}]
  %s3 = inlined_call_operand.hbm [shape: f32[32,32], index: 3, kind: input, shape index: {}]
  %s4 = inlined_call_operand.hbm [shape: f32[32,64], index: 4, kind: input, shape index: {}]
  %s5 = inlined_call_operand.hbm [shape: f32[32,32], index: 5, kind: input, shape index: {}]
  %s6 = inlined_call_operand.hbm [shape: f32[1,32], index: 6, kind: input, shape index: {}]
  %s7 = inlined_call_operand.hbm [shape: f32[1,32], index: 7, kind: input, shape index: {}]
  %s8 = inlined_call_operand.hbm [shape: f32[1,32], index: 8, kind: input, shape index: {}]
  %s9 = inlined_call_operand.vmem [shape: f32[32,32], index: 9, kind: input, shape index: {}]
  %s10 = inlined_call_operand.vmem [shape: f32[1,32], index: 10, kind: input, shape index: {}]
  %s11 = inlined_call_operand.hbm [shape: f32[32,32], index: 11, kind: input, shape index: {}]
  %s12 = inlined_call_operand.vmem [shape: f32[1,32], index: 12, kind: input, shape index: {}]
  %s13 = inlined_call_operand.hbm [shape: f32[2,8,32], index: 13, kind: output, shape index: {}]
  %s14 = sld [smem:[#allocation0]]
  $region128: #{tpu_custom_call.1} parent=0
    _
  %s16 = ssub.s32 1, %s14
  %s17 = scalar_select 0, %s16, %s14
  $region1: #{tpu_custom_call.1} parent=0
    #allocation4 [shape = 'u8[8192]{0}', space=vmem, size = 0x2000, scoped, tag = 'input window, operand 0']
    #allocation5 [shape = 's32[2]{0}', space=sflag, size = 0x8, scoped, tag = 'scoped memory for tpu_custom_call.1']
    #allocation6 [shape = 's32[2]{0}', space=sflag, size = 0x8, scoped, tag = 'scoped memory for tpu_custom_call.1']
    #allocation7 [shape = 'u8[16384]{0}', space=vmem, size = 0x4000, scoped, tag = 'input window, operand 3, single buffered']
    #allocation8 [shape = 's32[1]{0}', space=sflag, size = 0x4, scoped, tag = 'scoped memory for tpu_custom_call.1']
    #allocation9 [shape = 'u8[16384]{0}', space=vmem, size = 0x4000, scoped, tag = 'input window, operand 4, single buffered']
    #allocation10 [shape = 'u8[16384]{0}', space=vmem, size = 0x4000, scoped, tag = 'input window, operand 5, single buffered']
    #allocation11 [shape = 's32[1]{0}', space=sflag, size = 0x4, scoped, tag = 'scoped memory for tpu_custom_call.1']
    #allocation12 [shape = 'u8[512]{0}', space=vmem, size = 0x400, scoped, tag = 'input window, operand 6, single buffered']
    #allocation13 [shape = 'u8[512]{0}', space=vmem, size = 0x400, scoped, tag = 'input window, operand 7, single buffered']
    #allocation14 [shape = 's32[1]{0}', space=sflag, size = 0x4, scoped, tag = 'scoped memory for tpu_custom_call.1']
    #allocation15 [shape = 'u8[512]{0}', space=vmem, size = 0x400, scoped, tag = 'input window, operand 8, single buffered']
    #allocation16 [shape = 'u8[16384]{0}', space=vmem, size = 0x4000, scoped, tag = 'input window, operand 11, single buffered']
    #allocation17 [shape = 's32[1]{0}', space=sflag, size = 0x4, scoped, tag = 'scoped memory for tpu_custom_call.1']
    #allocation18 [shape = 'u8[8192]{0}', space=vmem, size = 0x2000, scoped, tag = 'output window, operand 0']
    %18 = vsyncpa [#allocation5], 0
    %s19 = scalar_lea.sflag [#allocation5], 1
    %20 = vsyncpa %s19, 0
    %21 = vsyncpa [#allocation8], 0
    %22 = vsyncpa [#allocation11], 0
    %23 = vsyncpa [#allocation14], 0
    %24 = vsyncpa [#allocation17], 0
    %25 = vsyncpa [#allocation6], 0
    %s26 = scalar_lea.sflag [#allocation6], 1
    %27 = vsyncpa %s26, 0
    loop: start=0, step=1, limit=4
    $region2: #{tpu_custom_call.1} parent=1 // loop_pre_header
      _
    $region3: #{tpu_custom_call.1} parent=1 // loop_header
      %s29 = sphi 0, %s33
      %p30 = scmp.ge.s32.totalorder %s29, 4
      %s36 = sphi 0, %s48
      %s37 = sphi 0, %s44
      %s38 = sphi 0, %s36
      %s39 = sphi 0, %s37
      %s40 = sphi 0, %s38
      %s41 = sphi 0, %s39
      %s51 = sphi 0, %s53
      %s54 = sphi 0, %s51
      %s55 = sphi 0, %s54
      %s71 = sphi 0, %s55
      %s75 = sphi 0, %s75
      %s77 = sphi 0, %s75
      %s78 = sphi 0, %s77
      %s92 = sphi 0, %s78
      %s96 = sphi 0, %s96
      %s98 = sphi 0, %s96
      %s99 = sphi 0, %s98
      %s113 = sphi 0, %s99
      %s117 = sphi 0, %s117
      %s119 = sphi 0, %s117
      %s120 = sphi 0, %s119
      %s134 = sphi 0, %s120
      %s138 = sphi 0, %s138
      %s140 = sphi 0, %s138
      %s141 = sphi 0, %s140
      %s155 = sphi 0, %s141
      %s159 = sphi 0, %s159
      %s161 = sphi 0, %s159
      %s162 = sphi 0, %s161
      %s176 = sphi 0, %s162
      %s180 = sphi 0, %s180
      %s182 = sphi 0, %s180
      %s183 = sphi 0, %s182
      %s197 = sphi 0, %s183
      %s201 = sphi 0, %s201
      %s203 = sphi 0, %s201
      %s204 = sphi 0, %s203
      %s218 = sphi 0, %s204
      %s222 = sphi 0, %s222
      %s224 = sphi 0, %s222
      %s225 = sphi 0, %s224
      %s239 = sphi 0, %s225
      %s243 = sphi 0, %s243
      %s245 = sphi 0, %s243
      %s246 = sphi 0, %s245
      %s260 = sphi 0, %s246
      %s264 = sphi 0, %s264
      %s266 = sphi 0, %s264
      %s267 = sphi 0, %s266
      %s281 = sphi 0, %s267
      %s285 = sphi 0, %s285
      %s287 = sphi 0, %s285
      %s288 = sphi 0, %s287
      %s302 = sphi 0, %s288
      %s306 = sphi 0, %s306
      %s308 = sphi 0, %s306
      %s309 = sphi 0, %s308
      %s323 = sphi 0, %s309
      %s331 = sphi 0, %s333
      %s334 = sphi 0, %s331
      %s335 = sphi 0, %s334
      %s351 = sphi 0, %s335
    $region4: #{tpu_custom_call.1} parent=1 // loop_header_branch
      %32 = sbr.rel (%p30) target = $region8
    $region5: #{tpu_custom_call.1} parent=1 // loop_body
      %s34 = ssub.s32 %s29, 1
      %s35 = ssub.s32 %s29, 2
      %s42 = sadd.s32 1, %s37
      %p43 = scmp.ge.s32.totalorder %s42, 1
      %s44 = scalar_select %p43, 0, %s42
      %s45 = sadd.s32 1, %s36
      %s46 = scalar_select %p43, %s45, %s36
      %p47 = scmp.ge.s32.totalorder %s46, 2
      %s48 = scalar_select %p47, 0, %s46
      %s49 = ssub.s32 %s36, %s48
      %p50 = scmp.eq.s32.totalorder %s49, 0
      %s52 = sadd.s32 %s51, 1
      %s53 = scalar_select %p50, %s51, %s52
      %p56 = pneg %p50
      %p57 = scmp.eq.s32.totalorder %s29, 1
      %p58 = por %p56, %p57
      %p59 = scmp.ne.s32.totalorder %s51, %s54
      %p60 = scmp.eq.s32.totalorder %s29, 0
      %p61 = por %p59, %p60
      %p62 = scmp.ne.s32.totalorder %s51, %s54
      %p63 = scmp.eq.s32.totalorder %s34, 1
      %p64 = por %p62, %p63
      %p65 = scmp.ne.s32.totalorder %s54, %s55
      %p66 = scmp.eq.s32.totalorder %s34, 0
      %p67 = por %p65, %p66
      %p68 = scmp.ne.s32.totalorder %s54, %s55
      %p69 = scmp.eq.s32.totalorder %s35, 1
      %p70 = por %p68, %p69
      %p72 = scmp.ne.s32.totalorder %s55, %s71
      %p73 = scmp.eq.s32.totalorder %s35, 0
      %p74 = por %p72, %p73
      %s76 = sadd.s32 %s75, 1
      %p79 = scmp.eq.s32.totalorder %s29, 1
      %p80 = scmp.ne.s32.totalorder %s75, %s77
      %p81 = scmp.eq.s32.totalorder %s29, 0
      %p82 = por %p80, %p81
      %p83 = scmp.ne.s32.totalorder %s75, %s77
      %p84 = scmp.eq.s32.totalorder %s34, 1
      %p85 = por %p83, %p84
      %p86 = scmp.ne.s32.totalorder %s77, %s78
      %p87 = scmp.eq.s32.totalorder %s34, 0
      %p88 = por %p86, %p87
      %p89 = scmp.ne.s32.totalorder %s77, %s78
      %p90 = scmp.eq.s32.totalorder %s35, 1
      %p91 = por %p89, %p90
      %p93 = scmp.ne.s32.totalorder %s78, %s92
      %p94 = scmp.eq.s32.totalorder %s35, 0
      %p95 = por %p93, %p94
      %s97 = sadd.s32 %s96, 1
      %p100 = scmp.eq.s32.totalorder %s29, 1
      %p101 = scmp.ne.s32.totalorder %s96, %s98
      %p102 = scmp.eq.s32.totalorder %s29, 0
      %p103 = por %p101, %p102
      %p104 = scmp.ne.s32.totalorder %s96, %s98
      %p105 = scmp.eq.s32.totalorder %s34, 1
      %p106 = por %p104, %p105
      %p107 = scmp.ne.s32.totalorder %s98, %s99
      %p108 = scmp.eq.s32.totalorder %s34, 0
      %p109 = por %p107, %p108
      %p110 = scmp.ne.s32.totalorder %s98, %s99
      %p111 = scmp.eq.s32.totalorder %s35, 1
      %p112 = por %p110, %p111
      %p114 = scmp.ne.s32.totalorder %s99, %s113
      %p115 = scmp.eq.s32.totalorder %s35, 0
      %p116 = por %p114, %p115
      %s118 = sadd.s32 %s117, 1
      %p121 = scmp.eq.s32.totalorder %s29, 1
      %p122 = scmp.ne.s32.totalorder %s117, %s119
      %p123 = scmp.eq.s32.totalorder %s29, 0
      %p124 = por %p122, %p123
      %p125 = scmp.ne.s32.totalorder %s117, %s119
      %p126 = scmp.eq.s32.totalorder %s34, 1
      %p127 = por %p125, %p126
      %p128 = scmp.ne.s32.totalorder %s119, %s120
      %p129 = scmp.eq.s32.totalorder %s34, 0
      %p130 = por %p128, %p129
      %p131 = scmp.ne.s32.totalorder %s119, %s120
      %p132 = scmp.eq.s32.totalorder %s35, 1
      %p133 = por %p131, %p132
      %p135 = scmp.ne.s32.totalorder %s120, %s134
      %p136 = scmp.eq.s32.totalorder %s35, 0
      %p137 = por %p135, %p136
      %s139 = sadd.s32 %s138, 1
      %p142 = scmp.eq.s32.totalorder %s29, 1
      %p143 = scmp.ne.s32.totalorder %s138, %s140
      %p144 = scmp.eq.s32.totalorder %s29, 0
      %p145 = por %p143, %p144
      %p146 = scmp.ne.s32.totalorder %s138, %s140
      %p147 = scmp.eq.s32.totalorder %s34, 1
      %p148 = por %p146, %p147
      %p149 = scmp.ne.s32.totalorder %s140, %s141
      %p150 = scmp.eq.s32.totalorder %s34, 0
      %p151 = por %p149, %p150
      %p152 = scmp.ne.s32.totalorder %s140, %s141
      %p153 = scmp.eq.s32.totalorder %s35, 1
      %p154 = por %p152, %p153
      %p156 = scmp.ne.s32.totalorder %s141, %s155
      %p157 = scmp.eq.s32.totalorder %s35, 0
      %p158 = por %p156, %p157
      %s160 = sadd.s32 %s159, 1
      %p163 = scmp.eq.s32.totalorder %s29, 1
      %p164 = scmp.ne.s32.totalorder %s159, %s161
      %p165 = scmp.eq.s32.totalorder %s29, 0
      %p166 = por %p164, %p165
      %p167 = scmp.ne.s32.totalorder %s159, %s161
      %p168 = scmp.eq.s32.totalorder %s34, 1
      %p169 = por %p167, %p168
      %p170 = scmp.ne.s32.totalorder %s161, %s162
      %p171 = scmp.eq.s32.totalorder %s34, 0
      %p172 = por %p170, %p171
      %p173 = scmp.ne.s32.totalorder %s161, %s162
      %p174 = scmp.eq.s32.totalorder %s35, 1
      %p175 = por %p173, %p174
      %p177 = scmp.ne.s32.totalorder %s162, %s176
      %p178 = scmp.eq.s32.totalorder %s35, 0
      %p179 = por %p177, %p178
      %s181 = sadd.s32 %s180, 1
      %p184 = scmp.eq.s32.totalorder %s29, 1
      %p185 = scmp.ne.s32.totalorder %s180, %s182
      %p186 = scmp.eq.s32.totalorder %s29, 0
      %p187 = por %p185, %p186
      %p188 = scmp.ne.s32.totalorder %s180, %s182
      %p189 = scmp.eq.s32.totalorder %s34, 1
      %p190 = por %p188, %p189
      %p191 = scmp.ne.s32.totalorder %s182, %s183
      %p192 = scmp.eq.s32.totalorder %s34, 0
      %p193 = por %p191, %p192
      %p194 = scmp.ne.s32.totalorder %s182, %s183
      %p195 = scmp.eq.s32.totalorder %s35, 1
      %p196 = por %p194, %p195
      %p198 = scmp.ne.s32.totalorder %s183, %s197
      %p199 = scmp.eq.s32.totalorder %s35, 0
      %p200 = por %p198, %p199
      %s202 = sadd.s32 %s201, 1
      %p205 = scmp.eq.s32.totalorder %s29, 1
      %p206 = scmp.ne.s32.totalorder %s201, %s203
      %p207 = scmp.eq.s32.totalorder %s29, 0
      %p208 = por %p206, %p207
      %p209 = scmp.ne.s32.totalorder %s201, %s203
      %p210 = scmp.eq.s32.totalorder %s34, 1
      %p211 = por %p209, %p210
      %p212 = scmp.ne.s32.totalorder %s203, %s204
      %p213 = scmp.eq.s32.totalorder %s34, 0
      %p214 = por %p212, %p213
      %p215 = scmp.ne.s32.totalorder %s203, %s204
      %p216 = scmp.eq.s32.totalorder %s35, 1
      %p217 = por %p215, %p216
      %p219 = scmp.ne.s32.totalorder %s204, %s218
      %p220 = scmp.eq.s32.totalorder %s35, 0
      %p221 = por %p219, %p220
      %s223 = sadd.s32 %s222, 1
      %p226 = scmp.eq.s32.totalorder %s29, 1
      %p227 = scmp.ne.s32.totalorder %s222, %s224
      %p228 = scmp.eq.s32.totalorder %s29, 0
      %p229 = por %p227, %p228
      %p230 = scmp.ne.s32.totalorder %s222, %s224
      %p231 = scmp.eq.s32.totalorder %s34, 1
      %p232 = por %p230, %p231
      %p233 = scmp.ne.s32.totalorder %s224, %s225
      %p234 = scmp.eq.s32.totalorder %s34, 0
      %p235 = por %p233, %p234
      %p236 = scmp.ne.s32.totalorder %s224, %s225
      %p237 = scmp.eq.s32.totalorder %s35, 1
      %p238 = por %p236, %p237
      %p240 = scmp.ne.s32.totalorder %s225, %s239
      %p241 = scmp.eq.s32.totalorder %s35, 0
      %p242 = por %p240, %p241
      %s244 = sadd.s32 %s243, 1
      %p247 = scmp.eq.s32.totalorder %s29, 1
      %p248 = scmp.ne.s32.totalorder %s243, %s245
      %p249 = scmp.eq.s32.totalorder %s29, 0
      %p250 = por %p248, %p249
      %p251 = scmp.ne.s32.totalorder %s243, %s245
      %p252 = scmp.eq.s32.totalorder %s34, 1
      %p253 = por %p251, %p252
      %p254 = scmp.ne.s32.totalorder %s245, %s246
      %p255 = scmp.eq.s32.totalorder %s34, 0
      %p256 = por %p254, %p255
      %p257 = scmp.ne.s32.totalorder %s245, %s246
      %p258 = scmp.eq.s32.totalorder %s35, 1
      %p259 = por %p257, %p258
      %p261 = scmp.ne.s32.totalorder %s246, %s260
      %p262 = scmp.eq.s32.totalorder %s35, 0
      %p263 = por %p261, %p262
      %s265 = sadd.s32 %s264, 1
      %p268 = scmp.eq.s32.totalorder %s29, 1
      %p269 = scmp.ne.s32.totalorder %s264, %s266
      %p270 = scmp.eq.s32.totalorder %s29, 0
      %p271 = por %p269, %p270
      %p272 = scmp.ne.s32.totalorder %s264, %s266
      %p273 = scmp.eq.s32.totalorder %s34, 1
      %p274 = por %p272, %p273
      %p275 = scmp.ne.s32.totalorder %s266, %s267
      %p276 = scmp.eq.s32.totalorder %s34, 0
      %p277 = por %p275, %p276
      %p278 = scmp.ne.s32.totalorder %s266, %s267
      %p279 = scmp.eq.s32.totalorder %s35, 1
      %p280 = por %p278, %p279
      %p282 = scmp.ne.s32.totalorder %s267, %s281
      %p283 = scmp.eq.s32.totalorder %s35, 0
      %p284 = por %p282, %p283
      %s286 = sadd.s32 %s285, 1
      %p289 = scmp.eq.s32.totalorder %s29, 1
      %p290 = scmp.ne.s32.totalorder %s285, %s287
      %p291 = scmp.eq.s32.totalorder %s29, 0
      %p292 = por %p290, %p291
      %p293 = scmp.ne.s32.totalorder %s285, %s287
      %p294 = scmp.eq.s32.totalorder %s34, 1
      %p295 = por %p293, %p294
      %p296 = scmp.ne.s32.totalorder %s287, %s288
      %p297 = scmp.eq.s32.totalorder %s34, 0
      %p298 = por %p296, %p297
      %p299 = scmp.ne.s32.totalorder %s287, %s288
      %p300 = scmp.eq.s32.totalorder %s35, 1
      %p301 = por %p299, %p300
      %p303 = scmp.ne.s32.totalorder %s288, %s302
      %p304 = scmp.eq.s32.totalorder %s35, 0
      %p305 = por %p303, %p304
      %s307 = sadd.s32 %s306, 1
      %p310 = scmp.eq.s32.totalorder %s29, 1
      %p311 = scmp.ne.s32.totalorder %s306, %s308
      %p312 = scmp.eq.s32.totalorder %s29, 0
      %p313 = por %p311, %p312
      %p314 = scmp.ne.s32.totalorder %s306, %s308
      %p315 = scmp.eq.s32.totalorder %s34, 1
      %p316 = por %p314, %p315
      %p317 = scmp.ne.s32.totalorder %s308, %s309
      %p318 = scmp.eq.s32.totalorder %s34, 0
      %p319 = por %p317, %p318
      %p320 = scmp.ne.s32.totalorder %s308, %s309
      %p321 = scmp.eq.s32.totalorder %s35, 1
      %p322 = por %p320, %p321
      %p324 = scmp.ne.s32.totalorder %s309, %s323
      %p325 = scmp.eq.s32.totalorder %s35, 0
      %p326 = por %p324, %p325
      %s327 = ssub.s32 %s36, %s48
      %s328 = ssub.s32 %s37, %s44
      %s329 = sor.u32 %s327, %s328
      %p330 = scmp.eq.s32.totalorder %s329, 0
      %s332 = sadd.s32 %s331, 1
      %s333 = scalar_select %p330, %s331, %s332
      %p336 = pneg %p330
      %p337 = scmp.eq.s32.totalorder %s29, 1
      %p338 = por %p336, %p337
      %p339 = scmp.ne.s32.totalorder %s331, %s334
      %p340 = scmp.eq.s32.totalorder %s29, 0
      %p341 = por %p339, %p340
      %p342 = scmp.ne.s32.totalorder %s331, %s334
      %p343 = scmp.eq.s32.totalorder %s34, 1
      %p344 = por %p342, %p343
      %p345 = scmp.ne.s32.totalorder %s334, %s335
      %p346 = scmp.eq.s32.totalorder %s34, 0
      %p347 = por %p345, %p346
      %p348 = scmp.ne.s32.totalorder %s334, %s335
      %p349 = scmp.eq.s32.totalorder %s35, 1
      %p350 = por %p348, %p349
      %p352 = scmp.ne.s32.totalorder %s335, %s351
      %p353 = scmp.eq.s32.totalorder %s35, 0
      %p354 = por %p352, %p353
      %p355 = scmp.le.s32.totalorder 1, %s29
      %p356 = scmp.lt.s32.totalorder %s29, 3
      %p357 = pnand %p355, %p356
      %p358 = pneg %p357
      // Predicated region
      $region9: #{tpu_custom_call.1} parent=5 // pred_check
        _
      $region10: #{tpu_custom_call.1} parent=5 // pred_check_branch
        %360 = sbr.rel (%p357) target = $region12
      $region11: #{tpu_custom_call.1} parent=5 // pred_region
        %s361 = ssub.s32 %s29, 1
        // Predicated region
        $region13: #{tpu_custom_call.1} parent=11 // pred_check
          %p362 = pneg %p88
        $region14: #{tpu_custom_call.1} parent=11 // pred_check_branch
          %364 = sbr.rel (%p362) target = $region16
        $region15: #{tpu_custom_call.1} parent=11 // pred_region
          _
        $region16: #{tpu_custom_call.1} parent=11 // pred_fallthru
          _
        // Predicated region
        $region17: #{tpu_custom_call.1} parent=11 // pred_check
          %p365 = pneg %p109
        $region18: #{tpu_custom_call.1} parent=11 // pred_check_branch
          %367 = sbr.rel (%p365) target = $region20
        $region19: #{tpu_custom_call.1} parent=11 // pred_region
          _
        $region20: #{tpu_custom_call.1} parent=11 // pred_fallthru
          _
        // Predicated region
        $region21: #{tpu_custom_call.1} parent=11 // pred_check
          %p368 = pneg %p130
        $region22: #{tpu_custom_call.1} parent=11 // pred_check_branch
          %370 = sbr.rel (%p368) target = $region24
        $region23: #{tpu_custom_call.1} parent=11 // pred_region
          %s372 = ssub.s32 512, 512
          %373 = vsyncadd [#allocation8], %s372
          %s374 = sshll.u32 [#allocation7], 4
          %s375 = int_to_ptr.vmem [resolvable:$true] %s374
          %380 = dma.hbm_to_vmem [thread:$0]  %s3, 512, %s375, [#allocation8], 128, 128, 8
        $region24: #{tpu_custom_call.1} parent=11 // pred_fallthru
          _
        // Predicated region
        $region25: #{tpu_custom_call.1} parent=11 // pred_check
          %p381 = pneg %p151
        $region26: #{tpu_custom_call.1} parent=11 // pred_check_branch
          %383 = sbr.rel (%p381) target = $region28
        $region27: #{tpu_custom_call.1} parent=11 // pred_region
          %s385 = ssub.s32 512, 512
          %386 = vsyncadd [#allocation8], %s385
          %s387 = sshll.u32 [#allocation9], 4
          %s388 = int_to_ptr.vmem [resolvable:$true] %s387
          %393 = dma.hbm_to_vmem [thread:$0]  %s4, 512, %s388, [#allocation8], 128, 128, 8
        $region28: #{tpu_custom_call.1} parent=11 // pred_fallthru
          _
        // Predicated region
        $region29: #{tpu_custom_call.1} parent=11 // pred_check
          %p394 = pneg %p172
        $region30: #{tpu_custom_call.1} parent=11 // pred_check_branch
          %396 = sbr.rel (%p394) target = $region32
        $region31: #{tpu_custom_call.1} parent=11 // pred_region
          %s398 = ssub.s32 512, 512
          %399 = vsyncadd [#allocation11], %s398
          %s400 = sshll.u32 [#allocation10], 4
          %s401 = int_to_ptr.vmem [resolvable:$true] %s400
          %406 = dma.hbm_to_vmem [thread:$0]  %s5, 512, %s401, [#allocation11], 128, 128, 8
        $region32: #{tpu_custom_call.1} parent=11 // pred_fallthru
          _
        // Predicated region
        $region33: #{tpu_custom_call.1} parent=11 // pred_check
          %p407 = pneg %p193
        $region34: #{tpu_custom_call.1} parent=11 // pred_check_branch
          %409 = sbr.rel (%p407) target = $region36
        $region35: #{tpu_custom_call.1} parent=11 // pred_region
          %s411 = ssub.s32 16, 16
          %412 = vsyncadd [#allocation11], %s411
          %s414 = sshll.u32 [#allocation12], 4
          %s415 = int_to_ptr.vmem [resolvable:$true] %s414
          %417 = dma.hbm_to_vmem [thread:$0]  %s6, 16, %s415, [#allocation11]
        $region36: #{tpu_custom_call.1} parent=11 // pred_fallthru
          _
        // Predicated region
        $region37: #{tpu_custom_call.1} parent=11 // pred_check
          %p418 = pneg %p214
        $region38: #{tpu_custom_call.1} parent=11 // pred_check_branch
          %420 = sbr.rel (%p418) target = $region40
        $region39: #{tpu_custom_call.1} parent=11 // pred_region
          %s422 = ssub.s32 16, 16
          %423 = vsyncadd [#allocation14], %s422
          %s425 = sshll.u32 [#allocation13], 4
          %s426 = int_to_ptr.vmem [resolvable:$true] %s425
          %428 = dma.hbm_to_vmem [thread:$0]  %s7, 16, %s426, [#allocation14]
        $region40: #{tpu_custom_call.1} parent=11 // pred_fallthru
          _
        // Predicated region
        $region41: #{tpu_custom_call.1} parent=11 // pred_check
          %p429 = pneg %p235
        $region42: #{tpu_custom_call.1} parent=11 // pred_check_branch
          %431 = sbr.rel (%p429) target = $region44
        $region43: #{tpu_custom_call.1} parent=11 // pred_region
          %s433 = ssub.s32 16, 16
          %434 = vsyncadd [#allocation14], %s433
          %s436 = sshll.u32 [#allocation15], 4
          %s437 = int_to_ptr.vmem [resolvable:$true] %s436
          %439 = dma.hbm_to_vmem [thread:$0]  %s8, 16, %s437, [#allocation14]
        $region44: #{tpu_custom_call.1} parent=11 // pred_fallthru
          _
        // Predicated region
        $region45: #{tpu_custom_call.1} parent=11 // pred_check
          %p440 = pneg %p256
        $region46: #{tpu_custom_call.1} parent=11 // pred_check_branch
          %442 = sbr.rel (%p440) target = $region48
        $region47: #{tpu_custom_call.1} parent=11 // pred_region
          _
        $region48: #{tpu_custom_call.1} parent=11 // pred_fallthru
          _
        // Predicated region
        $region49: #{tpu_custom_call.1} parent=11 // pred_check
          %p443 = pneg %p277
        $region50: #{tpu_custom_call.1} parent=11 // pred_check_branch
          %445 = sbr.rel (%p443) target = $region52
        $region51: #{tpu_custom_call.1} parent=11 // pred_region
          _
        $region52: #{tpu_custom_call.1} parent=11 // pred_fallthru
          _
        // Predicated region
        $region53: #{tpu_custom_call.1} parent=11 // pred_check
          %p446 = pneg %p298
        $region54: #{tpu_custom_call.1} parent=11 // pred_check_branch
          %448 = sbr.rel (%p446) target = $region56
        $region55: #{tpu_custom_call.1} parent=11 // pred_region
          %s450 = ssub.s32 512, 512
          %451 = vsyncadd [#allocation17], %s450
          %s452 = sshll.u32 [#allocation16], 4
          %s453 = int_to_ptr.vmem [resolvable:$true] %s452
          %458 = dma.hbm_to_vmem [thread:$0]  %s11, 512, %s453, [#allocation17], 128, 128, 8
        $region56: #{tpu_custom_call.1} parent=11 // pred_fallthru
          _
        // Predicated region
        $region57: #{tpu_custom_call.1} parent=11 // pred_check
          %p459 = pneg %p319
        $region58: #{tpu_custom_call.1} parent=11 // pred_check_branch
          %461 = sbr.rel (%p459) target = $region60
        $region59: #{tpu_custom_call.1} parent=11 // pred_region
          _
        $region60: #{tpu_custom_call.1} parent=11 // pred_fallthru
          _
      $region12: #{tpu_custom_call.1} parent=5 // pred_fallthru
        _
      %p462 = scmp.lt.s32.totalorder %s29, 2
      // Predicated region
      $region61: #{tpu_custom_call.1} parent=5 // pred_check
        %p463 = pneg %p462
      $region62: #{tpu_custom_call.1} parent=5 // pred_check_branch
        %465 = sbr.rel (%p463) target = $region64
      $region63: #{tpu_custom_call.1} parent=5 // pred_region
        // Predicated region
        $region65: #{tpu_custom_call.1} parent=63 // pred_check
          %p466 = pneg %p61
        $region66: #{tpu_custom_call.1} parent=63 // pred_check_branch
          %468 = sbr.rel (%p466) target = $region68
        $region67: #{tpu_custom_call.1} parent=63 // pred_region
          %s469 = sand.u32 %s51, 1
          %s470 = scalar_lea.sflag [#allocation5], %s469
          %s471 = sand.u32 %s51, 1
          %s472 = smul.addr %s471, 8
          %s473 = scalar_lea.vmem [#allocation4], %s472
          %s475 = ssub.s32 128, 128
          %476 = vsyncadd %s470, %s475
          %s477 = smul.addr %s36, 128
          %s478 = scalar_lea.hbm %s0, %s477
          %s480 = sshll.u32 %s473, 4
          %s481 = int_to_ptr.vmem [resolvable:$true] %s480
          %483 = dma.hbm_to_vmem [thread:$0]  %s478, 128, %s481, %s470
        $region68: #{tpu_custom_call.1} parent=63 // pred_fallthru
          _
      $region64: #{tpu_custom_call.1} parent=5 // pred_fallthru
        _
      %p484 = scmp.le.s32.totalorder 1, %s29
      %p485 = scmp.lt.s32.totalorder %s29, 3
      %p486 = pnand %p484, %p485
      %p487 = pneg %p486
      // Predicated region
      $region69: #{tpu_custom_call.1} parent=5 // pred_check
        _
      $region70: #{tpu_custom_call.1} parent=5 // pred_check_branch
        %489 = sbr.rel (%p486) target = $region72
      $region71: #{tpu_custom_call.1} parent=5 // pred_region
        %s490 = ssub.s32 %s29, 1
        %s491 = sand.u32 %s54, 1
        %s492 = scalar_lea.sflag [#allocation5], %s491
        %s493 = sand.u32 %s54, 1
        %s494 = smul.addr %s493, 8
        %s495 = scalar_lea.vmem [#allocation4], %s494
        // Predicated region
        $region73: #{tpu_custom_call.1} parent=71 // pred_check
          %p496 = pneg %p67
        $region74: #{tpu_custom_call.1} parent=71 // pred_check_branch
          %498 = sbr.rel (%p496) target = $region76
        $region75: #{tpu_custom_call.1} parent=71 // pred_region
          %499 = dma.done %s492, 128
        $region76: #{tpu_custom_call.1} parent=71 // pred_fallthru
          _
        // Predicated region
        $region77: #{tpu_custom_call.1} parent=71 // pred_check
          %p500 = pneg %p130
        $region78: #{tpu_custom_call.1} parent=71 // pred_check_branch
          %502 = sbr.rel (%p500) target = $region80
        $region79: #{tpu_custom_call.1} parent=71 // pred_region
          %503 = dma.done [#allocation8], 512
        $region80: #{tpu_custom_call.1} parent=71 // pred_fallthru
          _
        // Predicated region
        $region81: #{tpu_custom_call.1} parent=71 // pred_check
          %p504 = pneg %p151
        $region82: #{tpu_custom_call.1} parent=71 // pred_check_branch
          %506 = sbr.rel (%p504) target = $region84
        $region83: #{tpu_custom_call.1} parent=71 // pred_region
          %507 = dma.done [#allocation8], 512
        $region84: #{tpu_custom_call.1} parent=71 // pred_fallthru
          _
        // Predicated region
        $region85: #{tpu_custom_call.1} parent=71 // pred_check
          %p508 = pneg %p172
        $region86: #{tpu_custom_call.1} parent=71 // pred_check_branch
          %510 = sbr.rel (%p508) target = $region88
        $region87: #{tpu_custom_call.1} parent=71 // pred_region
          %511 = dma.done [#allocation11], 512
        $region88: #{tpu_custom_call.1} parent=71 // pred_fallthru
          _
        // Predicated region
        $region89: #{tpu_custom_call.1} parent=71 // pred_check
          %p512 = pneg %p193
        $region90: #{tpu_custom_call.1} parent=71 // pred_check_branch
          %514 = sbr.rel (%p512) target = $region92
        $region91: #{tpu_custom_call.1} parent=71 // pred_region
          %515 = dma.done [#allocation11], 16
        $region92: #{tpu_custom_call.1} parent=71 // pred_fallthru
          _
        // Predicated region
        $region93: #{tpu_custom_call.1} parent=71 // pred_check
          %p516 = pneg %p214
        $region94: #{tpu_custom_call.1} parent=71 // pred_check_branch
          %518 = sbr.rel (%p516) target = $region96
        $region95: #{tpu_custom_call.1} parent=71 // pred_region
          %519 = dma.done [#allocation14], 16
        $region96: #{tpu_custom_call.1} parent=71 // pred_fallthru
          _
        // Predicated region
        $region97: #{tpu_custom_call.1} parent=71 // pred_check
          %p520 = pneg %p235
        $region98: #{tpu_custom_call.1} parent=71 // pred_check_branch
          %522 = sbr.rel (%p520) target = $region100
        $region99: #{tpu_custom_call.1} parent=71 // pred_region
          %523 = dma.done [#allocation14], 16
        $region100: #{tpu_custom_call.1} parent=71 // pred_fallthru
          _
        // Predicated region
        $region101: #{tpu_custom_call.1} parent=71 // pred_check
          %p524 = pneg %p298
        $region102: #{tpu_custom_call.1} parent=71 // pred_check_branch
          %526 = sbr.rel (%p524) target = $region104
        $region103: #{tpu_custom_call.1} parent=71 // pred_region
          %527 = dma.done [#allocation17], 512
        $region104: #{tpu_custom_call.1} parent=71 // pred_fallthru
          _
        %s528 = sand.u32 %s54, 1
        %s529 = scalar_lea.sflag [#allocation5], %s528
        %s530 = sand.u32 %s54, 1
        %s531 = smul.addr %s530, 8
        %s532 = scalar_lea.vmem [#allocation4], %s531
        %p533 = pneg %p67
        %p534 = pneg %p64
        %p535 = pneg %p88
        %p536 = pneg %p85
        %p537 = pneg %p109
        %p538 = pneg %p106
        %p539 = pneg %p130
        %p540 = pneg %p127
        %p541 = pneg %p151
        %p542 = pneg %p148
        %p543 = pneg %p172
        %p544 = pneg %p169
        %p545 = pneg %p193
        %p546 = pneg %p190
        %p547 = pneg %p214
        %p548 = pneg %p211
        %p549 = pneg %p235
        %p550 = pneg %p232
        %p551 = pneg %p256
        %p552 = pneg %p253
        %p553 = pneg %p277
        %p554 = pneg %p274
        %p555 = pneg %p298
        %p556 = pneg %p295
        %p557 = pneg %p319
        %p558 = pneg %p316
        %p559 = pneg %p347
        %p560 = pneg %p344
        %s561 = sand.u32 %s334, 1
        %s562 = scalar_lea.sflag [#allocation6], %s561
        %s563 = sand.u32 %s334, 1
        %s564 = smul.addr %s563, 8
        %s565 = scalar_lea.vmem [#allocation18], %s564
        %v566 = vld [vmem:[%s1] sm:$0x1]
        %v567 = vld [vmem:[%s2] sm:$0x1]
        %p568 = scmp.eq.s32.totalorder %s39, 0
        // Predicated region
        $region105: #{tpu_custom_call.1} parent=71 // pred_check
          %p569 = pneg %p568
        $region106: #{tpu_custom_call.1} parent=71 // pred_check_branch
          %571 = sbr.rel (%p569) target = $region108
        $region107: #{tpu_custom_call.1} parent=71 // pred_region
          %v572 = vld [vmem:[%s495] sm:$0xff]
          %vm573 = vcmask 261120
          %v574 = vsel %vm573, %v572, 0.0
          %575 = vadd.xlane.f32.xlu0 %v574
          %v576 = vpop.xlane.xlu0 %575
          %v577 = vrcp.pop 32.0
          %v578 = vmul.f32 %v576, %v577
          %v579 = vsub.f32 %v572, %v578
          %v580 = vmul.f32 %v579, %v579
          %v581 = vsel %vm573, %v580, 0.0
          %582 = vadd.xlane.f32.xlu0 %v581
          %v583 = vpop.xlane.xlu0 %582
          %v584 = vmul.f32 %v583, %v577
          %v585 = vadd.f32 %v584, 1e-05
          %v586 = vrsqrt.pop %v585
          %v587 = vmul.f32 %v579, %v586
          %v589 = vlaneseq
          %v590 = vshrl.u32 %v589, 7
          %v591 = vsub.s32 0, %v590
          %v592 = vrot.slane %v566, %v591
          %v594 = vmul.f32 %v587, %v592
          %v596 = vlaneseq
          %v597 = vshrl.u32 %v596, 7
          %v598 = vsub.s32 0, %v597
          %v599 = vrot.slane %v567, %v598
          %v601 = vadd.f32 %v594, %v599
          %v602 = vld [vmem:[#allocation9] sm:$0xff]
          %v603 = vld [vmem:[#allocation9 + $0x8] sm:$0xff]
          %v604 = vld [vmem:[#allocation9 + $0x10] sm:$0xff]
          %v605 = vld [vmem:[#allocation9 + $0x18] sm:$0xff]
          %v607 = vsel %vm573, %v601, 0
          %609 = vmatprep.subr.mxu0 0.0
          %610 = vmatpush1.msra.mxu0 %v602
          %611 = vmatprep.subr.mxu0 0.0
          %612 = vmatpush1.msra.mxu0 %v603
          %613 = vmatprep.subr.mxu0 0.0
          %614 = vmatpush1.msra.mxu0 %v604
          %615 = vmatprep.subr.mxu0 0.0
          %616 = vmatpush1.msra.mxu0 %v605
          %617 = vmatprep.subr.mxu0 0.0
          %618 = vmatpush1.msra.mxu0 0.0
          %619 = vmatprep.subr.mxu0 0.0
          %620 = vmatpush1.msra.mxu0 0.0
          %621 = vmatprep.subr.mxu0 0.0
          %622 = vmatpush1.msra.mxu0 0.0
          %623 = vmatprep.subr.mxu0 0.0
          %624 = vmatpush1.msra.mxu0 0.0
          %625 = vmatprep.subr.mxu0 0.0
          %626 = vmatpush1.msra.mxu0 0.0
          %627 = vmatprep.subr.mxu0 0.0
          %628 = vmatpush1.msra.mxu0 0.0
          %629 = vmatprep.subr.mxu0 0.0
          %630 = vmatpush1.msra.mxu0 0.0
          %631 = vmatprep.subr.mxu0 0.0
          %632 = vmatpush1.msra.mxu0 0.0
          %633 = vmatprep.subr.mxu0 0.0
          %634 = vmatpush1.msra.mxu0 0.0
          %635 = vmatprep.subr.mxu0 0.0
          %636 = vmatpush1.msra.mxu0 0.0
          %637 = vmatprep.subr.mxu0 0.0
          %638 = vmatpush1.msra.mxu0 0.0
          %639 = vmatprep.subr.mxu0 0.0
          %640 = vmatpush1.msra.mxu0 0.0
          %641 = vmatprep.subr.mxu0 0.0
          %642 = vmatpush1.msra.mxu0 0.0
          %643 = vmatprep.subr.mxu0 0.0
          %644 = vmatpush1.msra.mxu0 0.0
          %645 = vmatprep.subr.mxu0 0.0
          %646 = vmatpush1.msra.mxu0 0.0
          %647 = vmatprep.subr.mxu0 0.0
          %648 = vmatpush1.msra.mxu0 0.0
          %649 = vmatprep.subr.mxu0 0.0
          %650 = vmatpush1.msra.mxu0 0.0
          %651 = vmatprep.subr.mxu0 0.0
          %652 = vmatpush1.msra.mxu0 0.0
          %653 = vmatprep.subr.mxu0 0.0
          %654 = vmatpush1.msra.mxu0 0.0
          %655 = vmatprep.subr.mxu0 0.0
          %656 = vmatpush1.msra.mxu0 0.0
          %657 = vmatprep.subr.mxu0 0.0
          %658 = vmatpush1.msra.mxu0 0.0
          %659 = vmatprep.subr.mxu0 0.0
          %660 = vmatpush1.msra.mxu0 0.0
          %661 = vmatprep.subr.mxu0 0.0
          %662 = vmatpush1.msra.mxu0 0.0
          %663 = vmatprep.subr.mxu0 0.0
          %664 = vmatpush1.msra.mxu0 0.0
          %665 = vmatprep.subr.mxu0 0.0
          %666 = vmatpush1.msra.mxu0 0.0
          %667 = vmatprep.subr.mxu0 0.0
          %668 = vmatpush1.msra.mxu0 0.0
          %669 = vmatprep.subr.mxu0 0.0
          %670 = vmatpush1.msra.mxu0 0.0
          %671 = vmatprep.subr.mxu0 0.0
          %672 = vmatpush1.msra.mxu0 0.0
          %673 = vmatprep.mubr.f32.mxu0 0.0
          %674 = vmatmul.mubr.f32.gmra.mrb[0].mxu0 %v607
          %v675 = vpop.f32.mrb[0].mxu0
          %v676 = vadd.f32 0.0, %v675
          %v677 = vpop.f32.mrb[0].mxu0
          %678 = vdwg.mxu0
          %680 = vrot.lane.b32.xlu0 %v676, 120
          %v681 = vpop.permute.xlu0 %680
          %683 = vrot.lane.b32.xlu0 %v676, 112
          %v684 = vpop.permute.xlu0 %683
          %686 = vrot.lane.b32.xlu0 %v676, 104
          %v687 = vpop.permute.xlu0 %686
          %vm689 = vcmask 64512
          %690 = vst.msk [vmem:[#allocation2] sm:$0xff] %vm689, %v676
          %691 = vst.msk [vmem:[#allocation2 + $0x8] sm:$0xff] %vm689, %v681
          %692 = vst.msk [vmem:[#allocation2 + $0x10] sm:$0xff] %vm689, %v684
          %693 = vst.msk [vmem:[#allocation2 + $0x18] sm:$0xff] %vm689, %v687
          %694 = vrot.lane.b32.xlu0 %v676, 96
          %v695 = vpop.permute.xlu0 %694
          %696 = vrot.lane.b32.xlu0 %v681, 96
          %v697 = vpop.permute.xlu0 %696
          %698 = vrot.lane.b32.xlu0 %v684, 96
          %v699 = vpop.permute.xlu0 %698
          %700 = vrot.lane.b32.xlu0 %v687, 96
          %v701 = vpop.permute.xlu0 %700
          %706 = vst.msk [vmem:[#allocation3] sm:$0xff] %vm689, %v695
          %707 = vst.msk [vmem:[#allocation3 + $0x8] sm:$0xff] %vm689, %v697
          %708 = vst.msk [vmem:[#allocation3 + $0x10] sm:$0xff] %vm689, %v699
          %709 = vst.msk [vmem:[#allocation3 + $0x18] sm:$0xff] %vm689, %v701
        $region108: #{tpu_custom_call.1} parent=71 // pred_fallthru
          _
        %s710 = smul.u32 %s39, 8
        %s711 = scalar_lea.vmem %s495, %s710 [#allocation4]
        %v712 = vld [vmem:[%s711] sm:$0xff]
        %vm713 = vcmask 261120
        %v714 = vsel %vm713, %v712, 0.0
        %715 = vadd.xlane.f32.xlu0 %v714
        %v716 = vpop.xlane.xlu0 %715
        %v717 = vrcp.pop 32.0
        %v718 = vmul.f32 %v716, %v717
        %v719 = vsub.f32 %v712, %v718
        %v720 = vmul.f32 %v719, %v719
        %v721 = vsel %vm713, %v720, 0.0
        %722 = vadd.xlane.f32.xlu0 %v721
        %v723 = vpop.xlane.xlu0 %722
        %v724 = vmul.f32 %v723, %v717
        %v725 = vadd.f32 %v724, 1e-05
        %v726 = vrsqrt.pop %v725
        %v727 = vmul.f32 %v719, %v726
        %v729 = vlaneseq
        %v730 = vshrl.u32 %v729, 7
        %v731 = vsub.s32 0, %v730
        %v732 = vrot.slane %v566, %v731
        %v734 = vmul.f32 %v727, %v732
        %v736 = vlaneseq
        %v737 = vshrl.u32 %v736, 7
        %v738 = vsub.s32 0, %v737
        %v739 = vrot.slane %v567, %v738
        %v741 = vadd.f32 %v734, %v739
        %v742 = vld [vmem:[#allocation7] sm:$0xff]
        %v743 = vld [vmem:[#allocation7 + $0x8] sm:$0xff]
        %v744 = vld [vmem:[#allocation7 + $0x10] sm:$0xff]
        %v745 = vld [vmem:[#allocation7 + $0x18] sm:$0xff]
        %v747 = vsel %vm713, %v741, 0
        %749 = vmatprep.subr.mxu0 0.0
        %750 = vmatpush1.msra.mxu0 %v742
        %751 = vmatprep.subr.mxu0 0.0
        %752 = vmatpush1.msra.mxu0 %v743
        %753 = vmatprep.subr.mxu0 0.0
        %754 = vmatpush1.msra.mxu0 %v744
        %755 = vmatprep.subr.mxu0 0.0
        %756 = vmatpush1.msra.mxu0 %v745
        %757 = vmatprep.subr.mxu0 0.0
        %758 = vmatpush1.msra.mxu0 0.0
        %759 = vmatprep.subr.mxu0 0.0
        %760 = vmatpush1.msra.mxu0 0.0
        %761 = vmatprep.subr.mxu0 0.0
        %762 = vmatpush1.msra.mxu0 0.0
        %763 = vmatprep.subr.mxu0 0.0
        %764 = vmatpush1.msra.mxu0 0.0
        %765 = vmatprep.subr.mxu0 0.0
        %766 = vmatpush1.msra.mxu0 0.0
        %767 = vmatprep.subr.mxu0 0.0
        %768 = vmatpush1.msra.mxu0 0.0
        %769 = vmatprep.subr.mxu0 0.0
        %770 = vmatpush1.msra.mxu0 0.0
        %771 = vmatprep.subr.mxu0 0.0
        %772 = vmatpush1.msra.mxu0 0.0
        %773 = vmatprep.subr.mxu0 0.0
        %774 = vmatpush1.msra.mxu0 0.0
        %775 = vmatprep.subr.mxu0 0.0
        %776 = vmatpush1.msra.mxu0 0.0
        %777 = vmatprep.subr.mxu0 0.0
        %778 = vmatpush1.msra.mxu0 0.0
        %779 = vmatprep.subr.mxu0 0.0
        %780 = vmatpush1.msra.mxu0 0.0
        %781 = vmatprep.subr.mxu0 0.0
        %782 = vmatpush1.msra.mxu0 0.0
        %783 = vmatprep.subr.mxu0 0.0
        %784 = vmatpush1.msra.mxu0 0.0
        %785 = vmatprep.subr.mxu0 0.0
        %786 = vmatpush1.msra.mxu0 0.0
        %787 = vmatprep.subr.mxu0 0.0
        %788 = vmatpush1.msra.mxu0 0.0
        %789 = vmatprep.subr.mxu0 0.0
        %790 = vmatpush1.msra.mxu0 0.0
        %791 = vmatprep.subr.mxu0 0.0
        %792 = vmatpush1.msra.mxu0 0.0
        %793 = vmatprep.subr.mxu0 0.0
        %794 = vmatpush1.msra.mxu0 0.0
        %795 = vmatprep.subr.mxu0 0.0
        %796 = vmatpush1.msra.mxu0 0.0
        %797 = vmatprep.subr.mxu0 0.0
        %798 = vmatpush1.msra.mxu0 0.0
        %799 = vmatprep.subr.mxu0 0.0
        %800 = vmatpush1.msra.mxu0 0.0
        %801 = vmatprep.subr.mxu0 0.0
        %802 = vmatpush1.msra.mxu0 0.0
        %803 = vmatprep.subr.mxu0 0.0
        %804 = vmatpush1.msra.mxu0 0.0
        %805 = vmatprep.subr.mxu0 0.0
        %806 = vmatpush1.msra.mxu0 0.0
        %807 = vmatprep.subr.mxu0 0.0
        %808 = vmatpush1.msra.mxu0 0.0
        %809 = vmatprep.subr.mxu0 0.0
        %810 = vmatpush1.msra.mxu0 0.0
        %811 = vmatprep.subr.mxu0 0.0
        %812 = vmatpush1.msra.mxu0 0.0
        %813 = vmatprep.mubr.f32.mxu0 0.0
        %814 = vmatmul.mubr.f32.gmra.mrb[0].mxu0 %v747
        %v815 = vpop.f32.mrb[0].mxu0
        %v816 = vadd.f32 0.0, %v815
        %v817 = vpop.f32.mrb[0].mxu0
        %818 = vdwg.mxu0
        %820 = vrot.lane.b32.xlu0 %v816, 120
        %v821 = vpop.permute.xlu0 %820
        %822 = vrot.lane.b32.xlu0 %v816, 112
        %v823 = vpop.permute.xlu0 %822
        %824 = vrot.lane.b32.xlu0 %v816, 104
        %v825 = vpop.permute.xlu0 %824
        %v826 = vlaneseq
        %v827 = vshrl.u32 %v826, 7
        %v828 = vstv %s710
        %v829 = vadd.s32 %v828, %v827
        %s830 = sadd.s32 %s39, 1
        // While loop
        $region109: #{tpu_custom_call.1} parent=71 // loop_pre_header
          _
        $region110: #{tpu_custom_call.1} parent=71 // loop_header
          %s832 = sphi 0, %s834
          %p833 = scmp.ge.s32.totalorder %s832, %s830
          %v837 = vphi -inf, %v1192
          %v838 = vphi -inf, %v1193
          %v839 = vphi -inf, %v1194
          %v840 = vphi -inf, %v1195
          %v841 = vphi 0.0, %v1236
          %v842 = vphi 0.0, %v1237
          %v843 = vphi 0.0, %v1238
          %v844 = vphi 0.0, %v1239
          %v845 = vphi 0.0, %v1536
          %v846 = vphi 0.0, %v1537
          %v847 = vphi 0.0, %v1538
          %v848 = vphi 0.0, %v1539
        $region111: #{tpu_custom_call.1} parent=71 // loop_header_branch
          %836 = sbr.rel (%p833) target = $region115
        $region112: #{tpu_custom_call.1} parent=71 // loop_body
          %s849 = smul.u32 %s832, 8
          %s850 = scalar_lea.vmem [#allocation2], %s849
          %v851 = vld [vmem:[%s850] sm:$0xff]
          %v852 = vld [vmem:[%s850 + $0x8] sm:$0xff]
          %v853 = vld [vmem:[%s850 + $0x10] sm:$0xff]
          %v854 = vld [vmem:[%s850 + $0x18] sm:$0xff]
          %s855 = scalar_lea.vmem [#allocation3], %s849
          %v856 = vld [vmem:[%s855] sm:$0xff]
          %v857 = vld [vmem:[%s855 + $0x8] sm:$0xff]
          %v858 = vld [vmem:[%s855 + $0x10] sm:$0xff]
          %v859 = vld [vmem:[%s855 + $0x18] sm:$0xff]
          %vm860 = vcmask 64512
          %v861 = vsel %vm860, %v816, 0
          %v864 = vsel %vm860, %v851, 0
          %866 = vmatprep.subr.mxu0 0.0
          %867 = vmatpush1.xpose.msra.mxu0 %v864
          %868 = vmatprep.subr.mxu0 0.0
          %869 = vmatpush1.xpose.msra.mxu0 0.0
          %870 = vmatprep.subr.mxu0 0.0
          %871 = vmatpush1.xpose.msra.mxu0 0.0
          %872 = vmatprep.subr.mxu0 0.0
          %873 = vmatpush1.xpose.msra.mxu0 0.0
          %874 = vmatprep.subr.mxu0 0.0
          %875 = vmatpush1.xpose.msra.mxu0 0.0
          %876 = vmatprep.subr.mxu0 0.0
          %877 = vmatpush1.xpose.msra.mxu0 0.0
          %878 = vmatprep.subr.mxu0 0.0
          %879 = vmatpush1.xpose.msra.mxu0 0.0
          %880 = vmatprep.subr.mxu0 0.0
          %881 = vmatpush1.xpose.msra.mxu0 0.0
          %882 = vmatprep.subr.mxu0 0.0
          %883 = vmatpush1.xpose.msra.mxu0 0.0
          %884 = vmatprep.subr.mxu0 0.0
          %885 = vmatpush1.xpose.msra.mxu0 0.0
          %886 = vmatprep.subr.mxu0 0.0
          %887 = vmatpush1.xpose.msra.mxu0 0.0
          %888 = vmatprep.subr.mxu0 0.0
          %889 = vmatpush1.xpose.msra.mxu0 0.0
          %890 = vmatprep.subr.mxu0 0.0
          %891 = vmatpush1.xpose.msra.mxu0 0.0
          %892 = vmatprep.subr.mxu0 0.0
          %893 = vmatpush1.xpose.msra.mxu0 0.0
          %894 = vmatprep.subr.mxu0 0.0
          %895 = vmatpush1.xpose.msra.mxu0 0.0
          %896 = vmatprep.subr.mxu0 0.0
          %897 = vmatpush1.xpose.msra.mxu0 0.0
          %898 = vmatprep.subr.mxu0 0.0
          %899 = vmatpush1.xpose.msra.mxu0 0.0
          %900 = vmatprep.subr.mxu0 0.0
          %901 = vmatpush1.xpose.msra.mxu0 0.0
          %902 = vmatprep.subr.mxu0 0.0
          %903 = vmatpush1.xpose.msra.mxu0 0.0
          %904 = vmatprep.subr.mxu0 0.0
          %905 = vmatpush1.xpose.msra.mxu0 0.0
          %906 = vmatprep.subr.mxu0 0.0
          %907 = vmatpush1.xpose.msra.mxu0 0.0
          %908 = vmatprep.subr.mxu0 0.0
          %909 = vmatpush1.xpose.msra.mxu0 0.0
          %910 = vmatprep.subr.mxu0 0.0
          %911 = vmatpush1.xpose.msra.mxu0 0.0
          %912 = vmatprep.subr.mxu0 0.0
          %913 = vmatpush1.xpose.msra.mxu0 0.0
          %914 = vmatprep.subr.mxu0 0.0
          %915 = vmatpush1.xpose.msra.mxu0 0.0
          %916 = vmatprep.subr.mxu0 0.0
          %917 = vmatpush1.xpose.msra.mxu0 0.0
          %918 = vmatprep.subr.mxu0 0.0
          %919 = vmatpush1.xpose.msra.mxu0 0.0
          %920 = vmatprep.subr.mxu0 0.0
          %921 = vmatpush1.xpose.msra.mxu0 0.0
          %922 = vmatprep.subr.mxu0 0.0
          %923 = vmatpush1.xpose.msra.mxu0 0.0
          %924 = vmatprep.subr.mxu0 0.0
          %925 = vmatpush1.xpose.msra.mxu0 0.0
          %926 = vmatprep.subr.mxu0 0.0
          %927 = vmatpush1.xpose.msra.mxu0 0.0
          %928 = vmatprep.subr.mxu0 0.0
          %929 = vmatpush1.xpose.msra.mxu0 0.0
          %930 = vmatprep.mubr.f32.mxu0 0.0
          %931 = vmatmul.mubr.f32.gmra.mrb[0].mxu0 %v861
          %v932 = vpop.f32.mrb[0].mxu0
          %v933 = vadd.f32 0.0, %v932
          %v934 = vpop.f32.mrb[0].mxu0
          %935 = vdwg.mxu0
          %v936 = vsel %vm860, %v821, 0
          %v939 = vsel %vm860, %v852, 0
          %941 = vmatprep.subr.mxu0 0.0
          %942 = vmatpush1.xpose.msra.mxu0 %v939
          %943 = vmatprep.subr.mxu0 0.0
          %944 = vmatpush1.xpose.msra.mxu0 0.0
          %945 = vmatprep.subr.mxu0 0.0
          %946 = vmatpush1.xpose.msra.mxu0 0.0
          %947 = vmatprep.subr.mxu0 0.0
          %948 = vmatpush1.xpose.msra.mxu0 0.0
          %949 = vmatprep.subr.mxu0 0.0
          %950 = vmatpush1.xpose.msra.mxu0 0.0
          %951 = vmatprep.subr.mxu0 0.0
          %952 = vmatpush1.xpose.msra.mxu0 0.0
          %953 = vmatprep.subr.mxu0 0.0
          %954 = vmatpush1.xpose.msra.mxu0 0.0
          %955 = vmatprep.subr.mxu0 0.0
          %956 = vmatpush1.xpose.msra.mxu0 0.0
          %957 = vmatprep.subr.mxu0 0.0
          %958 = vmatpush1.xpose.msra.mxu0 0.0
          %959 = vmatprep.subr.mxu0 0.0
          %960 = vmatpush1.xpose.msra.mxu0 0.0
          %961 = vmatprep.subr.mxu0 0.0
          %962 = vmatpush1.xpose.msra.mxu0 0.0
          %963 = vmatprep.subr.mxu0 0.0
          %964 = vmatpush1.xpose.msra.mxu0 0.0
          %965 = vmatprep.subr.mxu0 0.0
          %966 = vmatpush1.xpose.msra.mxu0 0.0
          %967 = vmatprep.subr.mxu0 0.0
          %968 = vmatpush1.xpose.msra.mxu0 0.0
          %969 = vmatprep.subr.mxu0 0.0
          %970 = vmatpush1.xpose.msra.mxu0 0.0
          %971 = vmatprep.subr.mxu0 0.0
          %972 = vmatpush1.xpose.msra.mxu0 0.0
          %973 = vmatprep.subr.mxu0 0.0
          %974 = vmatpush1.xpose.msra.mxu0 0.0
          %975 = vmatprep.subr.mxu0 0.0
          %976 = vmatpush1.xpose.msra.mxu0 0.0
          %977 = vmatprep.subr.mxu0 0.0
          %978 = vmatpush1.xpose.msra.mxu0 0.0
          %979 = vmatprep.subr.mxu0 0.0
          %980 = vmatpush1.xpose.msra.mxu0 0.0
          %981 = vmatprep.subr.mxu0 0.0
          %982 = vmatpush1.xpose.msra.mxu0 0.0
          %983 = vmatprep.subr.mxu0 0.0
          %984 = vmatpush1.xpose.msra.mxu0 0.0
          %985 = vmatprep.subr.mxu0 0.0
          %986 = vmatpush1.xpose.msra.mxu0 0.0
          %987 = vmatprep.subr.mxu0 0.0
          %988 = vmatpush1.xpose.msra.mxu0 0.0
          %989 = vmatprep.subr.mxu0 0.0
          %990 = vmatpush1.xpose.msra.mxu0 0.0
          %991 = vmatprep.subr.mxu0 0.0
          %992 = vmatpush1.xpose.msra.mxu0 0.0
          %993 = vmatprep.subr.mxu0 0.0
          %994 = vmatpush1.xpose.msra.mxu0 0.0
          %995 = vmatprep.subr.mxu0 0.0
          %996 = vmatpush1.xpose.msra.mxu0 0.0
          %997 = vmatprep.subr.mxu0 0.0
          %998 = vmatpush1.xpose.msra.mxu0 0.0
          %999 = vmatprep.subr.mxu0 0.0
          %1000 = vmatpush1.xpose.msra.mxu0 0.0
          %1001 = vmatprep.subr.mxu0 0.0
          %1002 = vmatpush1.xpose.msra.mxu0 0.0
          %1003 = vmatprep.subr.mxu0 0.0
          %1004 = vmatpush1.xpose.msra.mxu0 0.0
          %1005 = vmatprep.mubr.f32.mxu0 0.0
          %1006 = vmatmul.mubr.f32.gmra.mrb[0].mxu0 %v936
          %v1007 = vpop.f32.mrb[0].mxu0
          %v1008 = vadd.f32 0.0, %v1007
          %v1009 = vpop.f32.mrb[0].mxu0
          %1010 = vdwg.mxu0
          %v1011 = vsel %vm860, %v823, 0
          %v1014 = vsel %vm860, %v853, 0
          %1016 = vmatprep.subr.mxu0 0.0
          %1017 = vmatpush1.xpose.msra.mxu0 %v1014
          %1018 = vmatprep.subr.mxu0 0.0
          %1019 = vmatpush1.xpose.msra.mxu0 0.0
          %1020 = vmatprep.subr.mxu0 0.0
          %1021 = vmatpush1.xpose.msra.mxu0 0.0
          %1022 = vmatprep.subr.mxu0 0.0
          %1023 = vmatpush1.xpose.msra.mxu0 0.0
          %1024 = vmatprep.subr.mxu0 0.0
          %1025 = vmatpush1.xpose.msra.mxu0 0.0
          %1026 = vmatprep.subr.mxu0 0.0
          %1027 = vmatpush1.xpose.msra.mxu0 0.0
          %1028 = vmatprep.subr.mxu0 0.0
          %1029 = vmatpush1.xpose.msra.mxu0 0.0
          %1030 = vmatprep.subr.mxu0 0.0
          %1031 = vmatpush1.xpose.msra.mxu0 0.0
          %1032 = vmatprep.subr.mxu0 0.0
          %1033 = vmatpush1.xpose.msra.mxu0 0.0
          %1034 = vmatprep.subr.mxu0 0.0
          %1035 = vmatpush1.xpose.msra.mxu0 0.0
          %1036 = vmatprep.subr.mxu0 0.0
          %1037 = vmatpush1.xpose.msra.mxu0 0.0
          %1038 = vmatprep.subr.mxu0 0.0
          %1039 = vmatpush1.xpose.msra.mxu0 0.0
          %1040 = vmatprep.subr.mxu0 0.0
          %1041 = vmatpush1.xpose.msra.mxu0 0.0
          %1042 = vmatprep.subr.mxu0 0.0
          %1043 = vmatpush1.xpose.msra.mxu0 0.0
          %1044 = vmatprep.subr.mxu0 0.0
          %1045 = vmatpush1.xpose.msra.mxu0 0.0
          %1046 = vmatprep.subr.mxu0 0.0
          %1047 = vmatpush1.xpose.msra.mxu0 0.0
          %1048 = vmatprep.subr.mxu0 0.0
          %1049 = vmatpush1.xpose.msra.mxu0 0.0
          %1050 = vmatprep.subr.mxu0 0.0
          %1051 = vmatpush1.xpose.msra.mxu0 0.0
          %1052 = vmatprep.subr.mxu0 0.0
          %1053 = vmatpush1.xpose.msra.mxu0 0.0
          %1054 = vmatprep.subr.mxu0 0.0
          %1055 = vmatpush1.xpose.msra.mxu0 0.0
          %1056 = vmatprep.subr.mxu0 0.0
          %1057 = vmatpush1.xpose.msra.mxu0 0.0
          %1058 = vmatprep.subr.mxu0 0.0
          %1059 = vmatpush1.xpose.msra.mxu0 0.0
          %1060 = vmatprep.subr.mxu0 0.0
          %1061 = vmatpush1.xpose.msra.mxu0 0.0
          %1062 = vmatprep.subr.mxu0 0.0
          %1063 = vmatpush1.xpose.msra.mxu0 0.0
          %1064 = vmatprep.subr.mxu0 0.0
          %1065 = vmatpush1.xpose.msra.mxu0 0.0
          %1066 = vmatprep.subr.mxu0 0.0
          %1067 = vmatpush1.xpose.msra.mxu0 0.0
          %1068 = vmatprep.subr.mxu0 0.0
          %1069 = vmatpush1.xpose.msra.mxu0 0.0
          %1070 = vmatprep.subr.mxu0 0.0
          %1071 = vmatpush1.xpose.msra.mxu0 0.0
          %1072 = vmatprep.subr.mxu0 0.0
          %1073 = vmatpush1.xpose.msra.mxu0 0.0
          %1074 = vmatprep.subr.mxu0 0.0
          %1075 = vmatpush1.xpose.msra.mxu0 0.0
          %1076 = vmatprep.subr.mxu0 0.0
          %1077 = vmatpush1.xpose.msra.mxu0 0.0
          %1078 = vmatprep.subr.mxu0 0.0
          %1079 = vmatpush1.xpose.msra.mxu0 0.0
          %1080 = vmatprep.mubr.f32.mxu0 0.0
          %1081 = vmatmul.mubr.f32.gmra.mrb[0].mxu0 %v1011
          %v1082 = vpop.f32.mrb[0].mxu0
          %v1083 = vadd.f32 0.0, %v1082
          %v1084 = vpop.f32.mrb[0].mxu0
          %1085 = vdwg.mxu0
          %v1086 = vsel %vm860, %v825, 0
          %v1089 = vsel %vm860, %v854, 0
          %1091 = vmatprep.subr.mxu0 0.0
          %1092 = vmatpush1.xpose.msra.mxu0 %v1089
          %1093 = vmatprep.subr.mxu0 0.0
          %1094 = vmatpush1.xpose.msra.mxu0 0.0
          %1095 = vmatprep.subr.mxu0 0.0
          %1096 = vmatpush1.xpose.msra.mxu0 0.0
          %1097 = vmatprep.subr.mxu0 0.0
          %1098 = vmatpush1.xpose.msra.mxu0 0.0
          %1099 = vmatprep.subr.mxu0 0.0
          %1100 = vmatpush1.xpose.msra.mxu0 0.0
          %1101 = vmatprep.subr.mxu0 0.0
          %1102 = vmatpush1.xpose.msra.mxu0 0.0
          %1103 = vmatprep.subr.mxu0 0.0
          %1104 = vmatpush1.xpose.msra.mxu0 0.0
          %1105 = vmatprep.subr.mxu0 0.0
          %1106 = vmatpush1.xpose.msra.mxu0 0.0
          %1107 = vmatprep.subr.mxu0 0.0
          %1108 = vmatpush1.xpose.msra.mxu0 0.0
          %1109 = vmatprep.subr.mxu0 0.0
          %1110 = vmatpush1.xpose.msra.mxu0 0.0
          %1111 = vmatprep.subr.mxu0 0.0
          %1112 = vmatpush1.xpose.msra.mxu0 0.0
          %1113 = vmatprep.subr.mxu0 0.0
          %1114 = vmatpush1.xpose.msra.mxu0 0.0
          %1115 = vmatprep.subr.mxu0 0.0
          %1116 = vmatpush1.xpose.msra.mxu0 0.0
          %1117 = vmatprep.subr.mxu0 0.0
          %1118 = vmatpush1.xpose.msra.mxu0 0.0
          %1119 = vmatprep.subr.mxu0 0.0
          %1120 = vmatpush1.xpose.msra.mxu0 0.0
          %1121 = vmatprep.subr.mxu0 0.0
          %1122 = vmatpush1.xpose.msra.mxu0 0.0
          %1123 = vmatprep.subr.mxu0 0.0
          %1124 = vmatpush1.xpose.msra.mxu0 0.0
          %1125 = vmatprep.subr.mxu0 0.0
          %1126 = vmatpush1.xpose.msra.mxu0 0.0
          %1127 = vmatprep.subr.mxu0 0.0
          %1128 = vmatpush1.xpose.msra.mxu0 0.0
          %1129 = vmatprep.subr.mxu0 0.0
          %1130 = vmatpush1.xpose.msra.mxu0 0.0
          %1131 = vmatprep.subr.mxu0 0.0
          %1132 = vmatpush1.xpose.msra.mxu0 0.0
          %1133 = vmatprep.subr.mxu0 0.0
          %1134 = vmatpush1.xpose.msra.mxu0 0.0
          %1135 = vmatprep.subr.mxu0 0.0
          %1136 = vmatpush1.xpose.msra.mxu0 0.0
          %1137 = vmatprep.subr.mxu0 0.0
          %1138 = vmatpush1.xpose.msra.mxu0 0.0
          %1139 = vmatprep.subr.mxu0 0.0
          %1140 = vmatpush1.xpose.msra.mxu0 0.0
          %1141 = vmatprep.subr.mxu0 0.0
          %1142 = vmatpush1.xpose.msra.mxu0 0.0
          %1143 = vmatprep.subr.mxu0 0.0
          %1144 = vmatpush1.xpose.msra.mxu0 0.0
          %1145 = vmatprep.subr.mxu0 0.0
          %1146 = vmatpush1.xpose.msra.mxu0 0.0
          %1147 = vmatprep.subr.mxu0 0.0
          %1148 = vmatpush1.xpose.msra.mxu0 0.0
          %1149 = vmatprep.subr.mxu0 0.0
          %1150 = vmatpush1.xpose.msra.mxu0 0.0
          %1151 = vmatprep.subr.mxu0 0.0
          %1152 = vmatpush1.xpose.msra.mxu0 0.0
          %1153 = vmatprep.subr.mxu0 0.0
          %1154 = vmatpush1.xpose.msra.mxu0 0.0
          %1155 = vmatprep.mubr.f32.mxu0 0.0
          %1156 = vmatmul.mubr.f32.gmra.mrb[0].mxu0 %v1086
          %v1157 = vpop.f32.mrb[0].mxu0
          %v1158 = vadd.f32 0.0, %v1157
          %v1159 = vpop.f32.mrb[0].mxu0
          %1160 = vdwg.mxu0
          %v1161 = vlaneseq
          %v1162 = vand.u32 %v1161, 127
          %v1163 = vstv %s849
          %v1164 = vadd.s32 %v1163, %v1162
          %vm1165 = vcmp.ge.s32.totalorder %v829, %v1164
          %vm1166 = vcmp.ne.f32.partialorder %v933, 0.0
          %vm1167 = vcmp.ne.f32.partialorder %v1008, 0.0
          %vm1168 = vcmp.ne.f32.partialorder %v1083, 0.0
          %vm1169 = vcmp.ne.f32.partialorder %v1158, 0.0
          %v1170 = vsel %vm1165, 1, 0
          %vm1171 = vcmp.eq.s32.totalorder %v1170, 1
          %vm1172 = vmand %vm1171, %vm1166
          %vm1173 = vmand %vm1171, %vm1167
          %vm1174 = vmand %vm1171, %vm1168
          %vm1175 = vmand %vm1171, %vm1169
          %v1176 = vsel %vm1172, %v933, -inf
          %v1177 = vsel %vm1173, %v1008, -inf
          %v1178 = vsel %vm1174, %v1083, -inf
          %v1179 = vsel %vm1175, %v1158, -inf
          %v1180 = vsel %vm860, %v1176, -inf
          %1181 = vmax.xlane.f32.xlu0 %v1180
          %v1182 = vpop.xlane.xlu0 %1181
          %v1183 = vsel %vm860, %v1177, -inf
          %1184 = vmax.xlane.f32.xlu0 %v1183
          %v1185 = vpop.xlane.xlu0 %1184
          %v1186 = vsel %vm860, %v1178, -inf
          %1187 = vmax.xlane.f32.xlu0 %v1186
          %v1188 = vpop.xlane.xlu0 %1187
          %v1189 = vsel %vm860, %v1179, -inf
          %1190 = vmax.xlane.f32.xlu0 %v1189
          %v1191 = vpop.xlane.xlu0 %1190
          %v1192 = vmax.f32 %v837, %v1182
          %v1193 = vmax.f32 %v838, %v1185
          %v1194 = vmax.f32 %v839, %v1188
          %v1195 = vmax.f32 %v840, %v1191
          %v1196 = vsub.f32 %v837, %v1192
          %v1197 = vsub.f32 %v838, %v1193
          %v1198 = vsub.f32 %v839, %v1194
          %v1199 = vsub.f32 %v840, %v1195
          %v1200 = vmul.f32 %v1196, 1.442695
          %v1201 = vpow.pop %v1200
          %v1202 = vmul.f32 %v1197, 1.442695
          %v1203 = vpow.pop %v1202
          %v1204 = vmul.f32 %v1198, 1.442695
          %v1205 = vpow.pop %v1204
          %v1206 = vmul.f32 %v1199, 1.442695
          %v1207 = vpow.pop %v1206
          %v1208 = vsub.f32 %v1176, %v1192
          %v1209 = vsub.f32 %v1177, %v1193
          %v1210 = vsub.f32 %v1178, %v1194
          %v1211 = vsub.f32 %v1179, %v1195
          %v1212 = vmul.f32 %v1208, 1.442695
          %v1213 = vpow.pop %v1212
          %v1214 = vmul.f32 %v1209, 1.442695
          %v1215 = vpow.pop %v1214
          %v1216 = vmul.f32 %v1210, 1.442695
          %v1217 = vpow.pop %v1216
          %v1218 = vmul.f32 %v1211, 1.442695
          %v1219 = vpow.pop %v1218
          %v1220 = vmul.f32 %v1201, %v841
          %v1221 = vmul.f32 %v1203, %v842
          %v1222 = vmul.f32 %v1205, %v843
          %v1223 = vmul.f32 %v1207, %v844
          %v1224 = vsel %vm860, %v1213, 0.0
          %1225 = vadd.xlane.f32.xlu0 %v1224
          %v1226 = vpop.xlane.xlu0 %1225
          %v1227 = vsel %vm860, %v1215, 0.0
          %1228 = vadd.xlane.f32.xlu0 %v1227
          %v1229 = vpop.xlane.xlu0 %1228
          %v1230 = vsel %vm860, %v1217, 0.0
          %1231 = vadd.xlane.f32.xlu0 %v1230
          %v1232 = vpop.xlane.xlu0 %1231
          %v1233 = vsel %vm860, %v1219, 0.0
          %1234 = vadd.xlane.f32.xlu0 %v1233
          %v1235 = vpop.xlane.xlu0 %1234
          %v1236 = vadd.f32 %v1220, %v1226
          %v1237 = vadd.f32 %v1221, %v1229
          %v1238 = vadd.f32 %v1222, %v1232
          %v1239 = vadd.f32 %v1223, %v1235
          %v1240 = vmul.f32 %v1201, %v845
          %v1241 = vmul.f32 %v1203, %v846
          %v1242 = vmul.f32 %v1205, %v847
          %v1243 = vmul.f32 %v1207, %v848
          %v1245 = vsel %vm860, %v1213, 0
          %1247 = vmatprep.subr.mxu0 0.0
          %1248 = vmatpush1.msra.mxu0 %v856
          %1249 = vmatprep.subr.mxu0 0.0
          %1250 = vmatpush1.msra.mxu0 0.0
          %1251 = vmatprep.subr.mxu0 0.0
          %1252 = vmatpush1.msra.mxu0 0.0
          %1253 = vmatprep.subr.mxu0 0.0
          %1254 = vmatpush1.msra.mxu0 0.0
          %1255 = vmatprep.subr.mxu0 0.0
          %1256 = vmatpush1.msra.mxu0 0.0
          %1257 = vmatprep.subr.mxu0 0.0
          %1258 = vmatpush1.msra.mxu0 0.0
          %1259 = vmatprep.subr.mxu0 0.0
          %1260 = vmatpush1.msra.mxu0 0.0
          %1261 = vmatprep.subr.mxu0 0.0
          %1262 = vmatpush1.msra.mxu0 0.0
          %1263 = vmatprep.subr.mxu0 0.0
          %1264 = vmatpush1.msra.mxu0 0.0
          %1265 = vmatprep.subr.mxu0 0.0
          %1266 = vmatpush1.msra.mxu0 0.0
          %1267 = vmatprep.subr.mxu0 0.0
          %1268 = vmatpush1.msra.mxu0 0.0
          %1269 = vmatprep.subr.mxu0 0.0
          %1270 = vmatpush1.msra.mxu0 0.0
          %1271 = vmatprep.subr.mxu0 0.0
          %1272 = vmatpush1.msra.mxu0 0.0
          %1273 = vmatprep.subr.mxu0 0.0
          %1274 = vmatpush1.msra.mxu0 0.0
          %1275 = vmatprep.subr.mxu0 0.0
          %1276 = vmatpush1.msra.mxu0 0.0
          %1277 = vmatprep.subr.mxu0 0.0
          %1278 = vmatpush1.msra.mxu0 0.0
          %1279 = vmatprep.subr.mxu0 0.0
          %1280 = vmatpush1.msra.mxu0 0.0
          %1281 = vmatprep.subr.mxu0 0.0
          %1282 = vmatpush1.msra.mxu0 0.0
          %1283 = vmatprep.subr.mxu0 0.0
          %1284 = vmatpush1.msra.mxu0 0.0
          %1285 = vmatprep.subr.mxu0 0.0
          %1286 = vmatpush1.msra.mxu0 0.0
          %1287 = vmatprep.subr.mxu0 0.0
          %1288 = vmatpush1.msra.mxu0 0.0
          %1289 = vmatprep.subr.mxu0 0.0
          %1290 = vmatpush1.msra.mxu0 0.0
          %1291 = vmatprep.subr.mxu0 0.0
          %1292 = vmatpush1.msra.mxu0 0.0
          %1293 = vmatprep.subr.mxu0 0.0
          %1294 = vmatpush1.msra.mxu0 0.0
          %1295 = vmatprep.subr.mxu0 0.0
          %1296 = vmatpush1.msra.mxu0 0.0
          %1297 = vmatprep.subr.mxu0 0.0
          %1298 = vmatpush1.msra.mxu0 0.0
          %1299 = vmatprep.subr.mxu0 0.0
          %1300 = vmatpush1.msra.mxu0 0.0
          %1301 = vmatprep.subr.mxu0 0.0
          %1302 = vmatpush1.msra.mxu0 0.0
          %1303 = vmatprep.subr.mxu0 0.0
          %1304 = vmatpush1.msra.mxu0 0.0
          %1305 = vmatprep.subr.mxu0 0.0
          %1306 = vmatpush1.msra.mxu0 0.0
          %1307 = vmatprep.subr.mxu0 0.0
          %1308 = vmatpush1.msra.mxu0 0.0
          %1309 = vmatprep.subr.mxu0 0.0
          %1310 = vmatpush1.msra.mxu0 0.0
          %1311 = vmatprep.mubr.f32.mxu0 0.0
          %1312 = vmatmul.mubr.f32.gmra.mrb[0].mxu0 %v1245
          %v1313 = vpop.f32.mrb[0].mxu0
          %v1314 = vadd.f32 0.0, %v1313
          %v1315 = vpop.f32.mrb[0].mxu0
          %1316 = vdwg.mxu0
          %v1318 = vsel %vm860, %v1215, 0
          %1320 = vmatprep.subr.mxu0 0.0
          %1321 = vmatpush1.msra.mxu0 %v857
          %1322 = vmatprep.subr.mxu0 0.0
          %1323 = vmatpush1.msra.mxu0 0.0
          %1324 = vmatprep.subr.mxu0 0.0
          %1325 = vmatpush1.msra.mxu0 0.0
          %1326 = vmatprep.subr.mxu0 0.0
          %1327 = vmatpush1.msra.mxu0 0.0
          %1328 = vmatprep.subr.mxu0 0.0
          %1329 = vmatpush1.msra.mxu0 0.0
          %1330 = vmatprep.subr.mxu0 0.0
          %1331 = vmatpush1.msra.mxu0 0.0
          %1332 = vmatprep.subr.mxu0 0.0
          %1333 = vmatpush1.msra.mxu0 0.0
          %1334 = vmatprep.subr.mxu0 0.0
          %1335 = vmatpush1.msra.mxu0 0.0
          %1336 = vmatprep.subr.mxu0 0.0
          %1337 = vmatpush1.msra.mxu0 0.0
          %1338 = vmatprep.subr.mxu0 0.0
          %1339 = vmatpush1.msra.mxu0 0.0
          %1340 = vmatprep.subr.mxu0 0.0
          %1341 = vmatpush1.msra.mxu0 0.0
          %1342 = vmatprep.subr.mxu0 0.0
          %1343 = vmatpush1.msra.mxu0 0.0
          %1344 = vmatprep.subr.mxu0 0.0
          %1345 = vmatpush1.msra.mxu0 0.0
          %1346 = vmatprep.subr.mxu0 0.0
          %1347 = vmatpush1.msra.mxu0 0.0
          %1348 = vmatprep.subr.mxu0 0.0
          %1349 = vmatpush1.msra.mxu0 0.0
          %1350 = vmatprep.subr.mxu0 0.0
          %1351 = vmatpush1.msra.mxu0 0.0
          %1352 = vmatprep.subr.mxu0 0.0
          %1353 = vmatpush1.msra.mxu0 0.0
          %1354 = vmatprep.subr.mxu0 0.0
          %1355 = vmatpush1.msra.mxu0 0.0
          %1356 = vmatprep.subr.mxu0 0.0
          %1357 = vmatpush1.msra.mxu0 0.0
          %1358 = vmatprep.subr.mxu0 0.0
          %1359 = vmatpush1.msra.mxu0 0.0
          %1360 = vmatprep.subr.mxu0 0.0
          %1361 = vmatpush1.msra.mxu0 0.0
          %1362 = vmatprep.subr.mxu0 0.0
          %1363 = vmatpush1.msra.mxu0 0.0
          %1364 = vmatprep.subr.mxu0 0.0
          %1365 = vmatpush1.msra.mxu0 0.0
          %1366 = vmatprep.subr.mxu0 0.0
          %1367 = vmatpush1.msra.mxu0 0.0
          %1368 = vmatprep.subr.mxu0 0.0
          %1369 = vmatpush1.msra.mxu0 0.0
          %1370 = vmatprep.subr.mxu0 0.0
          %1371 = vmatpush1.msra.mxu0 0.0
          %1372 = vmatprep.subr.mxu0 0.0
          %1373 = vmatpush1.msra.mxu0 0.0
          %1374 = vmatprep.subr.mxu0 0.0
          %1375 = vmatpush1.msra.mxu0 0.0
          %1376 = vmatprep.subr.mxu0 0.0
          %1377 = vmatpush1.msra.mxu0 0.0
          %1378 = vmatprep.subr.mxu0 0.0
          %1379 = vmatpush1.msra.mxu0 0.0
          %1380 = vmatprep.subr.mxu0 0.0
          %1381 = vmatpush1.msra.mxu0 0.0
          %1382 = vmatprep.subr.mxu0 0.0
          %1383 = vmatpush1.msra.mxu0 0.0
          %1384 = vmatprep.mubr.f32.mxu0 0.0
          %1385 = vmatmul.mubr.f32.gmra.mrb[0].mxu0 %v1318
          %v1386 = vpop.f32.mrb[0].mxu0
          %v1387 = vadd.f32 0.0, %v1386
          %v1388 = vpop.f32.mrb[0].mxu0
          %1389 = vdwg.mxu0
          %v1391 = vsel %vm860, %v1217, 0
          %1393 = vmatprep.subr.mxu0 0.0
          %1394 = vmatpush1.msra.mxu0 %v858
          %1395 = vmatprep.subr.mxu0 0.0
          %1396 = vmatpush1.msra.mxu0 0.0
          %1397 = vmatprep.subr.mxu0 0.0
          %1398 = vmatpush1.msra.mxu0 0.0
          %1399 = vmatprep.subr.mxu0 0.0
          %1400 = vmatpush1.msra.mxu0 0.0
          %1401 = vmatprep.subr.mxu0 0.0
          %1402 = vmatpush1.msra.mxu0 0.0
          %1403 = vmatprep.subr.mxu0 0.0
          %1404 = vmatpush1.msra.mxu0 0.0
          %1405 = vmatprep.subr.mxu0 0.0
          %1406 = vmatpush1.msra.mxu0 0.0
          %1407 = vmatprep.subr.mxu0 0.0
          %1408 = vmatpush1.msra.mxu0 0.0
          %1409 = vmatprep.subr.mxu0 0.0
          %1410 = vmatpush1.msra.mxu0 0.0
          %1411 = vmatprep.subr.mxu0 0.0
          %1412 = vmatpush1.msra.mxu0 0.0
          %1413 = vmatprep.subr.mxu0 0.0
          %1414 = vmatpush1.msra.mxu0 0.0
          %1415 = vmatprep.subr.mxu0 0.0
          %1416 = vmatpush1.msra.mxu0 0.0
          %1417 = vmatprep.subr.mxu0 0.0
          %1418 = vmatpush1.msra.mxu0 0.0
          %1419 = vmatprep.subr.mxu0 0.0
          %1420 = vmatpush1.msra.mxu0 0.0
          %1421 = vmatprep.subr.mxu0 0.0
          %1422 = vmatpush1.msra.mxu0 0.0
          %1423 = vmatprep.subr.mxu0 0.0
          %1424 = vmatpush1.msra.mxu0 0.0
          %1425 = vmatprep.subr.mxu0 0.0
          %1426 = vmatpush1.msra.mxu0 0.0
          %1427 = vmatprep.subr.mxu0 0.0
          %1428 = vmatpush1.msra.mxu0 0.0
          %1429 = vmatprep.subr.mxu0 0.0
          %1430 = vmatpush1.msra.mxu0 0.0
          %1431 = vmatprep.subr.mxu0 0.0
          %1432 = vmatpush1.msra.mxu0 0.0
          %1433 = vmatprep.subr.mxu0 0.0
          %1434 = vmatpush1.msra.mxu0 0.0
          %1435 = vmatprep.subr.mxu0 0.0
          %1436 = vmatpush1.msra.mxu0 0.0
          %1437 = vmatprep.subr.mxu0 0.0
          %1438 = vmatpush1.msra.mxu0 0.0
          %1439 = vmatprep.subr.mxu0 0.0
          %1440 = vmatpush1.msra.mxu0 0.0
          %1441 = vmatprep.subr.mxu0 0.0
          %1442 = vmatpush1.msra.mxu0 0.0
          %1443 = vmatprep.subr.mxu0 0.0
          %1444 = vmatpush1.msra.mxu0 0.0
          %1445 = vmatprep.subr.mxu0 0.0
          %1446 = vmatpush1.msra.mxu0 0.0
          %1447 = vmatprep.subr.mxu0 0.0
          %1448 = vmatpush1.msra.mxu0 0.0
          %1449 = vmatprep.subr.mxu0 0.0
          %1450 = vmatpush1.msra.mxu0 0.0
          %1451 = vmatprep.subr.mxu0 0.0
          %1452 = vmatpush1.msra.mxu0 0.0
          %1453 = vmatprep.subr.mxu0 0.0
          %1454 = vmatpush1.msra.mxu0 0.0
          %1455 = vmatprep.subr.mxu0 0.0
          %1456 = vmatpush1.msra.mxu0 0.0
          %1457 = vmatprep.mubr.f32.mxu0 0.0
          %1458 = vmatmul.mubr.f32.gmra.mrb[0].mxu0 %v1391
          %v1459 = vpop.f32.mrb[0].mxu0
          %v1460 = vadd.f32 0.0, %v1459
          %v1461 = vpop.f32.mrb[0].mxu0
          %1462 = vdwg.mxu0
          %v1464 = vsel %vm860, %v1219, 0
          %1466 = vmatprep.subr.mxu0 0.0
          %1467 = vmatpush1.msra.mxu0 %v859
          %1468 = vmatprep.subr.mxu0 0.0
          %1469 = vmatpush1.msra.mxu0 0.0
          %1470 = vmatprep.subr.mxu0 0.0
          %1471 = vmatpush1.msra.mxu0 0.0
          %1472 = vmatprep.subr.mxu0 0.0
          %1473 = vmatpush1.msra.mxu0 0.0
          %1474 = vmatprep.subr.mxu0 0.0
          %1475 = vmatpush1.msra.mxu0 0.0
          %1476 = vmatprep.subr.mxu0 0.0
          %1477 = vmatpush1.msra.mxu0 0.0
          %1478 = vmatprep.subr.mxu0 0.0
          %1479 = vmatpush1.msra.mxu0 0.0
          %1480 = vmatprep.subr.mxu0 0.0
          %1481 = vmatpush1.msra.mxu0 0.0
          %1482 = vmatprep.subr.mxu0 0.0
          %1483 = vmatpush1.msra.mxu0 0.0
          %1484 = vmatprep.subr.mxu0 0.0
          %1485 = vmatpush1.msra.mxu0 0.0
          %1486 = vmatprep.subr.mxu0 0.0
          %1487 = vmatpush1.msra.mxu0 0.0
          %1488 = vmatprep.subr.mxu0 0.0
          %1489 = vmatpush1.msra.mxu0 0.0
          %1490 = vmatprep.subr.mxu0 0.0
          %1491 = vmatpush1.msra.mxu0 0.0
          %1492 = vmatprep.subr.mxu0 0.0
          %1493 = vmatpush1.msra.mxu0 0.0
          %1494 = vmatprep.subr.mxu0 0.0
          %1495 = vmatpush1.msra.mxu0 0.0
          %1496 = vmatprep.subr.mxu0 0.0
          %1497 = vmatpush1.msra.mxu0 0.0
          %1498 = vmatprep.subr.mxu0 0.0
          %1499 = vmatpush1.msra.mxu0 0.0
          %1500 = vmatprep.subr.mxu0 0.0
          %1501 = vmatpush1.msra.mxu0 0.0
          %1502 = vmatprep.subr.mxu0 0.0
          %1503 = vmatpush1.msra.mxu0 0.0
          %1504 = vmatprep.subr.mxu0 0.0
          %1505 = vmatpush1.msra.mxu0 0.0
          %1506 = vmatprep.subr.mxu0 0.0
          %1507 = vmatpush1.msra.mxu0 0.0
          %1508 = vmatprep.subr.mxu0 0.0
          %1509 = vmatpush1.msra.mxu0 0.0
          %1510 = vmatprep.subr.mxu0 0.0
          %1511 = vmatpush1.msra.mxu0 0.0
          %1512 = vmatprep.subr.mxu0 0.0
          %1513 = vmatpush1.msra.mxu0 0.0
          %1514 = vmatprep.subr.mxu0 0.0
          %1515 = vmatpush1.msra.mxu0 0.0
          %1516 = vmatprep.subr.mxu0 0.0
          %1517 = vmatpush1.msra.mxu0 0.0
          %1518 = vmatprep.subr.mxu0 0.0
          %1519 = vmatpush1.msra.mxu0 0.0
          %1520 = vmatprep.subr.mxu0 0.0
          %1521 = vmatpush1.msra.mxu0 0.0
          %1522 = vmatprep.subr.mxu0 0.0
          %1523 = vmatpush1.msra.mxu0 0.0
          %1524 = vmatprep.subr.mxu0 0.0
          %1525 = vmatpush1.msra.mxu0 0.0
          %1526 = vmatprep.subr.mxu0 0.0
          %1527 = vmatpush1.msra.mxu0 0.0
          %1528 = vmatprep.subr.mxu0 0.0
          %1529 = vmatpush1.msra.mxu0 0.0
          %1530 = vmatprep.mubr.f32.mxu0 0.0
          %1531 = vmatmul.mubr.f32.gmra.mrb[0].mxu0 %v1464
          %v1532 = vpop.f32.mrb[0].mxu0
          %v1533 = vadd.f32 0.0, %v1532
          %v1534 = vpop.f32.mrb[0].mxu0
          %1535 = vdwg.mxu0
          %v1536 = vadd.f32 %v1240, %v1314
          %v1537 = vadd.f32 %v1241, %v1387
          %v1538 = vadd.f32 %v1242, %v1460
          %v1539 = vadd.f32 %v1243, %v1533
        $region113: #{tpu_custom_call.1} parent=71 // loop_footer
          %s834 = sadd.s32 %s832, 1
        $region114: #{tpu_custom_call.1} parent=71 // loop_footer_branch
          %831 = sbr.rel target = $region110
        $region115: #{tpu_custom_call.1} parent=71 // loop_exit
          _
        %v1540 = vrcp.pop %v841
        %v1541 = vrcp.pop %v842
        %v1542 = vrcp.pop %v843
        %v1543 = vrcp.pop %v844
        %v1544 = vmul.f32 %v845, %v1540
        %v1545 = vmul.f32 %v846, %v1541
        %v1546 = vmul.f32 %v847, %v1542
        %v1547 = vmul.f32 %v848, %v1543
        %1549 = vrot.lane.b32.xlu0 %v1545, 8
        %v1550 = vpop.permute.xlu0 %1549
        %1553 = vrot.lane.b32.xlu0 %v1546, 16
        %v1554 = vpop.permute.xlu0 %1553
        %1557 = vrot.lane.b32.xlu0 %v1547, 24
        %v1558 = vpop.permute.xlu0 %1557
        %vm1560 = vcmask 64512
        %v1561 = vsel %vm1560, %v1544, %v1550
        %vm1562 = vcmask 130048
        %v1563 = vsel %vm1562, %v1561, %v1554
        %vm1564 = vcmask 195584
        %v1565 = vsel %vm1564, %v1563, %v1558
        %v1566 = vld [vmem:[#allocation10] sm:$0xff]
        %v1567 = vld [vmem:[#allocation10 + $0x8] sm:$0xff]
        %v1568 = vld [vmem:[#allocation10 + $0x10] sm:$0xff]
        %v1569 = vld [vmem:[#allocation10 + $0x18] sm:$0xff]
        %v1570 = vld [vmem:[#allocation12] sm:$0x1]
        %v1572 = vlaneseq
        %v1573 = vshrl.u32 %v1572, 7
        %v1574 = vsub.s32 0, %v1573
        %v1575 = vrot.slane %v1570, %v1574
        %v1578 = vsel %vm713, %v1565, 0
        %1580 = vmatprep.subr.mxu0 0.0
        %1581 = vmatpush1.msra.mxu0 %v1566
        %1582 = vmatprep.subr.mxu0 0.0
        %1583 = vmatpush1.msra.mxu0 %v1567
        %1584 = vmatprep.subr.mxu0 0.0
        %1585 = vmatpush1.msra.mxu0 %v1568
        %1586 = vmatprep.subr.mxu0 0.0
        %1587 = vmatpush1.msra.mxu0 %v1569
        %1588 = vmatprep.subr.mxu0 0.0
        %1589 = vmatpush1.msra.mxu0 0.0
        %1590 = vmatprep.subr.mxu0 0.0
        %1591 = vmatpush1.msra.mxu0 0.0
        %1592 = vmatprep.subr.mxu0 0.0
        %1593 = vmatpush1.msra.mxu0 0.0
        %1594 = vmatprep.subr.mxu0 0.0
        %1595 = vmatpush1.msra.mxu0 0.0
        %1596 = vmatprep.subr.mxu0 0.0
        %1597 = vmatpush1.msra.mxu0 0.0
        %1598 = vmatprep.subr.mxu0 0.0
        %1599 = vmatpush1.msra.mxu0 0.0
        %1600 = vmatprep.subr.mxu0 0.0
        %1601 = vmatpush1.msra.mxu0 0.0
        %1602 = vmatprep.subr.mxu0 0.0
        %1603 = vmatpush1.msra.mxu0 0.0
        %1604 = vmatprep.subr.mxu0 0.0
        %1605 = vmatpush1.msra.mxu0 0.0
        %1606 = vmatprep.subr.mxu0 0.0
        %1607 = vmatpush1.msra.mxu0 0.0
        %1608 = vmatprep.subr.mxu0 0.0
        %1609 = vmatpush1.msra.mxu0 0.0
        %1610 = vmatprep.subr.mxu0 0.0
        %1611 = vmatpush1.msra.mxu0 0.0
        %1612 = vmatprep.subr.mxu0 0.0
        %1613 = vmatpush1.msra.mxu0 0.0
        %1614 = vmatprep.subr.mxu0 0.0
        %1615 = vmatpush1.msra.mxu0 0.0
        %1616 = vmatprep.subr.mxu0 0.0
        %1617 = vmatpush1.msra.mxu0 0.0
        %1618 = vmatprep.subr.mxu0 0.0
        %1619 = vmatpush1.msra.mxu0 0.0
        %1620 = vmatprep.subr.mxu0 0.0
        %1621 = vmatpush1.msra.mxu0 0.0
        %1622 = vmatprep.subr.mxu0 0.0
        %1623 = vmatpush1.msra.mxu0 0.0
        %1624 = vmatprep.subr.mxu0 0.0
        %1625 = vmatpush1.msra.mxu0 0.0
        %1626 = vmatprep.subr.mxu0 0.0
        %1627 = vmatpush1.msra.mxu0 0.0
        %1628 = vmatprep.subr.mxu0 0.0
        %1629 = vmatpush1.msra.mxu0 0.0
        %1630 = vmatprep.subr.mxu0 0.0
        %1631 = vmatpush1.msra.mxu0 0.0
        %1632 = vmatprep.subr.mxu0 0.0
        %1633 = vmatpush1.msra.mxu0 0.0
        %1634 = vmatprep.subr.mxu0 0.0
        %1635 = vmatpush1.msra.mxu0 0.0
        %1636 = vmatprep.subr.mxu0 0.0
        %1637 = vmatpush1.msra.mxu0 0.0
        %1638 = vmatprep.subr.mxu0 0.0
        %1639 = vmatpush1.msra.mxu0 0.0
        %1640 = vmatprep.subr.mxu0 0.0
        %1641 = vmatpush1.msra.mxu0 0.0
        %1642 = vmatprep.subr.mxu0 0.0
        %1643 = vmatpush1.msra.mxu0 0.0
        %1644 = vmatprep.mubr.f32.mxu0 0.0
        %1645 = vmatmul.mubr.f32.gmra.mrb[0].mxu0 %v1578
        %v1646 = vpop.f32.mrb[0].mxu0
        %v1647 = vadd.f32 %v1575, %v1646
        %v1648 = vpop.f32.mrb[0].mxu0
        %1649 = vdwg.mxu0
        %v1650 = vadd.f32 %v1647, %v741
        %v1651 = vld [vmem:[#allocation13] sm:$0x1]
        %v1652 = vld [vmem:[#allocation15] sm:$0x1]
        %v1653 = vsel %vm713, %v1650, 0.0
        %1654 = vadd.xlane.f32.xlu0 %v1653
        %v1655 = vpop.xlane.xlu0 %1654
        %v1656 = vmul.f32 %v1655, %v717
        %v1657 = vsub.f32 %v1650, %v1656
        %v1658 = vmul.f32 %v1657, %v1657
        %v1659 = vsel %vm713, %v1658, 0.0
        %1660 = vadd.xlane.f32.xlu0 %v1659
        %v1661 = vpop.xlane.xlu0 %1660
        %v1662 = vmul.f32 %v1661, %v717
        %v1663 = vadd.f32 %v1662, 1e-05
        %v1664 = vrsqrt.pop %v1663
        %v1665 = vmul.f32 %v1657, %v1664
        %v1667 = vlaneseq
        %v1668 = vshrl.u32 %v1667, 7
        %v1669 = vsub.s32 0, %v1668
        %v1670 = vrot.slane %v1651, %v1669
        %v1672 = vmul.f32 %v1665, %v1670
        %v1674 = vlaneseq
        %v1675 = vshrl.u32 %v1674, 7
        %v1676 = vsub.s32 0, %v1675
        %v1677 = vrot.slane %v1652, %v1676
        %v1679 = vadd.f32 %v1672, %v1677
        %v1680 = vld [vmem:[%s9] sm:$0xff]
        %v1681 = vld [vmem:[%s9 + $0x8] sm:$0xff]
        %v1682 = vld [vmem:[%s9 + $0x10] sm:$0xff]
        %v1683 = vld [vmem:[%s9 + $0x18] sm:$0xff]
        %v1684 = vld [vmem:[%s10] sm:$0x1]
        %v1686 = vlaneseq
        %v1687 = vshrl.u32 %v1686, 7
        %v1688 = vsub.s32 0, %v1687
        %v1689 = vrot.slane %v1684, %v1688
        %v1692 = vsel %vm713, %v1679, 0
        %1694 = vmatprep.subr.mxu0 0.0
        %1695 = vmatpush1.msra.mxu0 %v1680
        %1696 = vmatprep.subr.mxu0 0.0
        %1697 = vmatpush1.msra.mxu0 %v1681
        %1698 = vmatprep.subr.mxu0 0.0
        %1699 = vmatpush1.msra.mxu0 %v1682
        %1700 = vmatprep.subr.mxu0 0.0
        %1701 = vmatpush1.msra.mxu0 %v1683
        %1702 = vmatprep.subr.mxu0 0.0
        %1703 = vmatpush1.msra.mxu0 0.0
        %1704 = vmatprep.subr.mxu0 0.0
        %1705 = vmatpush1.msra.mxu0 0.0
        %1706 = vmatprep.subr.mxu0 0.0
        %1707 = vmatpush1.msra.mxu0 0.0
        %1708 = vmatprep.subr.mxu0 0.0
        %1709 = vmatpush1.msra.mxu0 0.0
        %1710 = vmatprep.subr.mxu0 0.0
        %1711 = vmatpush1.msra.mxu0 0.0
        %1712 = vmatprep.subr.mxu0 0.0
        %1713 = vmatpush1.msra.mxu0 0.0
        %1714 = vmatprep.subr.mxu0 0.0
        %1715 = vmatpush1.msra.mxu0 0.0
        %1716 = vmatprep.subr.mxu0 0.0
        %1717 = vmatpush1.msra.mxu0 0.0
        %1718 = vmatprep.subr.mxu0 0.0
        %1719 = vmatpush1.msra.mxu0 0.0
        %1720 = vmatprep.subr.mxu0 0.0
        %1721 = vmatpush1.msra.mxu0 0.0
        %1722 = vmatprep.subr.mxu0 0.0
        %1723 = vmatpush1.msra.mxu0 0.0
        %1724 = vmatprep.subr.mxu0 0.0
        %1725 = vmatpush1.msra.mxu0 0.0
        %1726 = vmatprep.subr.mxu0 0.0
        %1727 = vmatpush1.msra.mxu0 0.0
        %1728 = vmatprep.subr.mxu0 0.0
        %1729 = vmatpush1.msra.mxu0 0.0
        %1730 = vmatprep.subr.mxu0 0.0
        %1731 = vmatpush1.msra.mxu0 0.0
        %1732 = vmatprep.subr.mxu0 0.0
        %1733 = vmatpush1.msra.mxu0 0.0
        %1734 = vmatprep.subr.mxu0 0.0
        %1735 = vmatpush1.msra.mxu0 0.0
        %1736 = vmatprep.subr.mxu0 0.0
        %1737 = vmatpush1.msra.mxu0 0.0
        %1738 = vmatprep.subr.mxu0 0.0
        %1739 = vmatpush1.msra.mxu0 0.0
        %1740 = vmatprep.subr.mxu0 0.0
        %1741 = vmatpush1.msra.mxu0 0.0
        %1742 = vmatprep.subr.mxu0 0.0
        %1743 = vmatpush1.msra.mxu0 0.0
        %1744 = vmatprep.subr.mxu0 0.0
        %1745 = vmatpush1.msra.mxu0 0.0
        %1746 = vmatprep.subr.mxu0 0.0
        %1747 = vmatpush1.msra.mxu0 0.0
        %1748 = vmatprep.subr.mxu0 0.0
        %1749 = vmatpush1.msra.mxu0 0.0
        %1750 = vmatprep.subr.mxu0 0.0
        %1751 = vmatpush1.msra.mxu0 0.0
        %1752 = vmatprep.subr.mxu0 0.0
        %1753 = vmatpush1.msra.mxu0 0.0
        %1754 = vmatprep.subr.mxu0 0.0
        %1755 = vmatpush1.msra.mxu0 0.0
        %1756 = vmatprep.subr.mxu0 0.0
        %1757 = vmatpush1.msra.mxu0 0.0
        %1758 = vmatprep.mubr.f32.mxu0 0.0
        %1759 = vmatmul.mubr.f32.gmra.mrb[0].mxu0 %v1692
        %v1760 = vpop.f32.mrb[0].mxu0
        %v1761 = vadd.f32 %v1689, %v1760
        %v1762 = vpop.f32.mrb[0].mxu0
        %1763 = vdwg.mxu0
        %v1764 = vmax.f32 %v1761, 0.0
        %v1765 = vld [vmem:[#allocation16] sm:$0xff]
        %v1766 = vld [vmem:[#allocation16 + $0x8] sm:$0xff]
        %v1767 = vld [vmem:[#allocation16 + $0x10] sm:$0xff]
        %v1768 = vld [vmem:[#allocation16 + $0x18] sm:$0xff]
        %v1769 = vld [vmem:[%s12] sm:$0x1]
        %v1771 = vlaneseq
        %v1772 = vshrl.u32 %v1771, 7
        %v1773 = vsub.s32 0, %v1772
        %v1774 = vrot.slane %v1769, %v1773
        %v1777 = vsel %vm713, %v1764, 0
        %1779 = vmatprep.subr.mxu0 0.0
        %1780 = vmatpush1.msra.mxu0 %v1765
        %1781 = vmatprep.subr.mxu0 0.0
        %1782 = vmatpush1.msra.mxu0 %v1766
        %1783 = vmatprep.subr.mxu0 0.0
        %1784 = vmatpush1.msra.mxu0 %v1767
        %1785 = vmatprep.subr.mxu0 0.0
        %1786 = vmatpush1.msra.mxu0 %v1768
        %1787 = vmatprep.subr.mxu0 0.0
        %1788 = vmatpush1.msra.mxu0 0.0
        %1789 = vmatprep.subr.mxu0 0.0
        %1790 = vmatpush1.msra.mxu0 0.0
        %1791 = vmatprep.subr.mxu0 0.0
        %1792 = vmatpush1.msra.mxu0 0.0
        %1793 = vmatprep.subr.mxu0 0.0
        %1794 = vmatpush1.msra.mxu0 0.0
        %1795 = vmatprep.subr.mxu0 0.0
        %1796 = vmatpush1.msra.mxu0 0.0
        %1797 = vmatprep.subr.mxu0 0.0
        %1798 = vmatpush1.msra.mxu0 0.0
        %1799 = vmatprep.subr.mxu0 0.0
        %1800 = vmatpush1.msra.mxu0 0.0
        %1801 = vmatprep.subr.mxu0 0.0
        %1802 = vmatpush1.msra.mxu0 0.0
        %1803 = vmatprep.subr.mxu0 0.0
        %1804 = vmatpush1.msra.mxu0 0.0
        %1805 = vmatprep.subr.mxu0 0.0
        %1806 = vmatpush1.msra.mxu0 0.0
        %1807 = vmatprep.subr.mxu0 0.0
        %1808 = vmatpush1.msra.mxu0 0.0
        %1809 = vmatprep.subr.mxu0 0.0
        %1810 = vmatpush1.msra.mxu0 0.0
        %1811 = vmatprep.subr.mxu0 0.0
        %1812 = vmatpush1.msra.mxu0 0.0
        %1813 = vmatprep.subr.mxu0 0.0
        %1814 = vmatpush1.msra.mxu0 0.0
        %1815 = vmatprep.subr.mxu0 0.0
        %1816 = vmatpush1.msra.mxu0 0.0
        %1817 = vmatprep.subr.mxu0 0.0
        %1818 = vmatpush1.msra.mxu0 0.0
        %1819 = vmatprep.subr.mxu0 0.0
        %1820 = vmatpush1.msra.mxu0 0.0
        %1821 = vmatprep.subr.mxu0 0.0
        %1822 = vmatpush1.msra.mxu0 0.0
        %1823 = vmatprep.subr.mxu0 0.0
        %1824 = vmatpush1.msra.mxu0 0.0
        %1825 = vmatprep.subr.mxu0 0.0
        %1826 = vmatpush1.msra.mxu0 0.0
        %1827 = vmatprep.subr.mxu0 0.0
        %1828 = vmatpush1.msra.mxu0 0.0
        %1829 = vmatprep.subr.mxu0 0.0
        %1830 = vmatpush1.msra.mxu0 0.0
        %1831 = vmatprep.subr.mxu0 0.0
        %1832 = vmatpush1.msra.mxu0 0.0
        %1833 = vmatprep.subr.mxu0 0.0
        %1834 = vmatpush1.msra.mxu0 0.0
        %1835 = vmatprep.subr.mxu0 0.0
        %1836 = vmatpush1.msra.mxu0 0.0
        %1837 = vmatprep.subr.mxu0 0.0
        %1838 = vmatpush1.msra.mxu0 0.0
        %1839 = vmatprep.subr.mxu0 0.0
        %1840 = vmatpush1.msra.mxu0 0.0
        %1841 = vmatprep.subr.mxu0 0.0
        %1842 = vmatpush1.msra.mxu0 0.0
        %1843 = vmatprep.mubr.f32.mxu0 0.0
        %1844 = vmatmul.mubr.f32.gmra.mrb[0].mxu0 %v1777
        %v1845 = vpop.f32.mrb[0].mxu0
        %v1846 = vadd.f32 %v1774, %v1845
        %v1847 = vpop.f32.mrb[0].mxu0
        %1848 = vdwg.mxu0
        %v1849 = vadd.f32 %v1846, %v1679
        %1850 = vst.msk [vmem:[%s565] sm:$0xff] %vm713, %v1849
        %s1851 = sand.u32 %s334, 1
        %s1852 = scalar_lea.sflag [#allocation6], %s1851
        %s1853 = sand.u32 %s334, 1
        %s1854 = smul.addr %s1853, 8
        %s1855 = scalar_lea.vmem [#allocation18], %s1854
        // Predicated region
        $region116: #{tpu_custom_call.1} parent=71 // pred_check
          %p1856 = pneg %p344
        $region117: #{tpu_custom_call.1} parent=71 // pred_check_branch
          %1858 = sbr.rel (%p1856) target = $region119
        $region118: #{tpu_custom_call.1} parent=71 // pred_region
          %s1860 = ssub.s32 128, 128
          %1861 = vsyncadd %s1852, %s1860
          %s1862 = sadd.s32 %s39, %s38
          %s1863 = smul.addr %s1862, 128
          %s1864 = scalar_lea.hbm %s13, %s1863
          %s1866 = sshll.u32 %s1855, 4
          %s1867 = int_to_ptr.vmem [resolvable:$true] %s1866
          %1869 = dma.vmem_to_hbm [thread:$0]  %s1867, 128, %s1864, %s1852
        $region119: #{tpu_custom_call.1} parent=71 // pred_fallthru
          _
      $region72: #{tpu_custom_call.1} parent=5 // pred_fallthru
        _
      %p1870 = scmp.le.s32.totalorder 2, %s29
      // Predicated region
      $region120: #{tpu_custom_call.1} parent=5 // pred_check
        %p1871 = pneg %p1870
      $region121: #{tpu_custom_call.1} parent=5 // pred_check_branch
        %1873 = sbr.rel (%p1871) target = $region123
      $region122: #{tpu_custom_call.1} parent=5 // pred_region
        %s1874 = ssub.s32 %s29, 2
        // Predicated region
        $region124: #{tpu_custom_call.1} parent=122 // pred_check
          %p1875 = pneg %p350
        $region125: #{tpu_custom_call.1} parent=122 // pred_check_branch
          %1877 = sbr.rel (%p1875) target = $region127
        $region126: #{tpu_custom_call.1} parent=122 // pred_region
          %s1878 = sand.u32 %s335, 1
          %s1879 = scalar_lea.sflag [#allocation6], %s1878
          %s1880 = sand.u32 %s335, 1
          %s1881 = smul.addr %s1880, 8
          %s1882 = scalar_lea.vmem [#allocation18], %s1881
          %1883 = dma.done %s1879, 128
        $region127: #{tpu_custom_call.1} parent=122 // pred_fallthru
          _
      $region123: #{tpu_custom_call.1} parent=5 // pred_fallthru
        _
    $region6: #{tpu_custom_call.1} parent=1 // loop_footer
      %s33 = sadd.s32 1, %s29
    $region7: #{tpu_custom_call.1} parent=1 // loop_footer_branch
      %28 = sbr.rel target = $region3
    $region8: #{tpu_custom_call.1} parent=1 // loop_exit
      _
    %1884 = vsyncpa [#allocation5], 1
    %s1885 = scalar_lea.sflag [#allocation5], 1
    %1886 = vsyncpa %s1885, 1
    %1887 = vsyncpa [#allocation8], 1
    %1888 = vsyncpa [#allocation11], 1
    %1889 = vsyncpa [#allocation14], 1
    %1890 = vsyncpa [#allocation17], 1
    %1891 = vsyncpa [#allocation6], 1
    %s1892 = scalar_lea.sflag [#allocation6], 1
    %1893 = vsyncpa %s1892, 1

// kernel: tpu_custom_call.1
$region0: #{tpu_custom_call.1}
  #allocation0 [shape = 'u32[]', space=smem, size = 0x4, offset = 0x4, fixed_abs, tag = 'smem constant byte address 0x4 - core index']
  #allocation1 [shape = 'u32[144,128]{1,0:T(1,128)}', space=vmem, size = 0x12000, scoped, tag = 'internal scratch']
  #allocation2 [shape = 'f32[4,8,8]{2,1,0:T(8,128)}', space=vmem, size = 0x4000, scoped, tag = 'scratch operand']
  #allocation3 [shape = 'f32[4,8,8]{2,1,0:T(8,128)}', space=vmem, size = 0x4000, scoped, tag = 'scratch operand']
  %s0 = inlined_call_operand.hbm [shape: f32[2,8,32], index: 0, kind: input, shape index: {}]
  %s1 = inlined_call_operand.vmem [shape: f32[1,32], index: 1, kind: input, shape index: {}]
  %s2 = inlined_call_operand.vmem [shape: f32[1,32], index: 2, kind: input, shape index: {}]
  %s3 = inlined_call_operand.hbm [shape: f32[32,32], index: 3, kind: input, shape index: {}]
  %s4 = inlined_call_operand.hbm [shape: f32[32,64], index: 4, kind: input, shape index: {}]
  %s5 = inlined_call_operand.hbm [shape: f32[32,32], index: 5, kind: input, shape index: {}]
  %s6 = inlined_call_operand.hbm [shape: f32[1,32], index: 6, kind: input, shape index: {}]
  %s7 = inlined_call_operand.hbm [shape: f32[1,32], index: 7, kind: input, shape index: {}]
  %s8 = inlined_call_operand.hbm [shape: f32[1,32], index: 8, kind: input, shape index: {}]
  %s9 = inlined_call_operand.vmem [shape: f32[32,32], index: 9, kind: input, shape index: {}]
  %s10 = inlined_call_operand.vmem [shape: f32[1,32], index: 10, kind: input, shape index: {}]
  %s11 = inlined_call_operand.hbm [shape: f32[32,32], index: 11, kind: input, shape index: {}]
  %s12 = inlined_call_operand.vmem [shape: f32[1,32], index: 12, kind: input, shape index: {}]
  %s13 = inlined_call_operand.hbm [shape: f32[2,8,32], index: 13, kind: output, shape index: {}]
  %s14 = sld [smem:[#allocation0]]
  $region128: #{tpu_custom_call.1} parent=0
    _
  %s16 = ssub.s32 1, %s14
  %s17 = scalar_select 0, %s16, %s14
  $region1: #{tpu_custom_call.1} parent=0
    #allocation4 [shape = 'u8[8192]{0}', space=vmem, size = 0x2000, scoped, tag = 'input window, operand 0']
    #allocation5 [shape = 's32[2]{0}', space=sflag, size = 0x8, scoped, tag = 'scoped memory for tpu_custom_call.1']
    #allocation6 [shape = 's32[2]{0}', space=sflag, size = 0x8, scoped, tag = 'scoped memory for tpu_custom_call.1']
    #allocation7 [shape = 'u8[16384]{0}', space=vmem, size = 0x4000, scoped, tag = 'input window, operand 3, single buffered']
    #allocation8 [shape = 's32[1]{0}', space=sflag, size = 0x4, scoped, tag = 'scoped memory for tpu_custom_call.1']
    #allocation9 [shape = 'u8[16384]{0}', space=vmem, size = 0x4000, scoped, tag = 'input window, operand 4, single buffered']
    #allocation10 [shape = 'u8[16384]{0}', space=vmem, size = 0x4000, scoped, tag = 'input window, operand 5, single buffered']
    #allocation11 [shape = 's32[1]{0}', space=sflag, size = 0x4, scoped, tag = 'scoped memory for tpu_custom_call.1']
    #allocation12 [shape = 'u8[512]{0}', space=vmem, size = 0x400, scoped, tag = 'input window, operand 6, single buffered']
    #allocation13 [shape = 'u8[512]{0}', space=vmem, size = 0x400, scoped, tag = 'input window, operand 7, single buffered']
    #allocation14 [shape = 's32[1]{0}', space=sflag, size = 0x4, scoped, tag = 'scoped memory for tpu_custom_call.1']
    #allocation15 [shape = 'u8[512]{0}', space=vmem, size = 0x400, scoped, tag = 'input window, operand 8, single buffered']
    #allocation16 [shape = 'u8[16384]{0}', space=vmem, size = 0x4000, scoped, tag = 'input window, operand 11, single buffered']
    #allocation17 [shape = 's32[1]{0}', space=sflag, size = 0x4, scoped, tag = 'scoped memory for tpu_custom_call.1']
    #allocation18 [shape = 'u8[8192]{0}', space=vmem, size = 0x2000, scoped, tag = 'output window, operand 0']
    %18 = vsyncpa [#allocation5], 0
    %s19 = scalar_lea.sflag [#allocation5], 1
    %20 = vsyncpa %s19, 0
    %21 = vsyncpa [#allocation8], 0
    %22 = vsyncpa [#allocation11], 0
    %23 = vsyncpa [#allocation14], 0
    %24 = vsyncpa [#allocation17], 0
    %25 = vsyncpa [#allocation6], 0
    %s26 = scalar_lea.sflag [#allocation6], 1
    %27 = vsyncpa %s26, 0
    loop: start=0, step=1, limit=4
    $region2: #{tpu_custom_call.1} parent=1 // loop_pre_header
      _
    $region3: #{tpu_custom_call.1} parent=1 // loop_header
      %s29 = sphi 0, %s33
      %p30 = scmp.ge.s32.totalorder %s29, 4
      %s36 = sphi 0, %s48
      %s37 = sphi 0, %s44
      %s38 = sphi 0, %s36
      %s39 = sphi 0, %s37
      %s40 = sphi 0, %s38
      %s41 = sphi 0, %s39
      %s51 = sphi 0, %s53
      %s54 = sphi 0, %s51
      %s55 = sphi 0, %s54
      %s71 = sphi 0, %s55
      %s75 = sphi 0, %s75
      %s77 = sphi 0, %s75
      %s78 = sphi 0, %s77
      %s92 = sphi 0, %s78
      %s96 = sphi 0, %s96
      %s98 = sphi 0, %s96
      %s99 = sphi 0, %s98
      %s113 = sphi 0, %s99
      %s117 = sphi 0, %s117
      %s119 = sphi 0, %s117
      %s120 = sphi 0, %s119
      %s134 = sphi 0, %s120
      %s138 = sphi 0, %s138
      %s140 = sphi 0, %s138
      %s141 = sphi 0, %s140
      %s155 = sphi 0, %s141
      %s159 = sphi 0, %s159
      %s161 = sphi 0, %s159
      %s162 = sphi 0, %s161
      %s176 = sphi 0, %s162
      %s180 = sphi 0, %s180
      %s182 = sphi 0, %s180
      %s183 = sphi 0, %s182
      %s197 = sphi 0, %s183
      %s201 = sphi 0, %s201
      %s203 = sphi 0, %s201
      %s204 = sphi 0, %s203
      %s218 = sphi 0, %s204
      %s222 = sphi 0, %s222
      %s224 = sphi 0, %s222
      %s225 = sphi 0, %s224
      %s239 = sphi 0, %s225
      %s243 = sphi 0, %s243
      %s245 = sphi 0, %s243
      %s246 = sphi 0, %s245
      %s260 = sphi 0, %s246
      %s264 = sphi 0, %s264
      %s266 = sphi 0, %s264
      %s267 = sphi 0, %s266
      %s281 = sphi 0, %s267
      %s285 = sphi 0, %s285
      %s287 = sphi 0, %s285
      %s288 = sphi 0, %s287
      %s302 = sphi 0, %s288
      %s306 = sphi 0, %s306
      %s308 = sphi 0, %s306
      %s309 = sphi 0, %s308
      %s323 = sphi 0, %s309
      %s331 = sphi 0, %s333
      %s334 = sphi 0, %s331
      %s335 = sphi 0, %s334
      %s351 = sphi 0, %s335
    $region4: #{tpu_custom_call.1} parent=1 // loop_header_branch
      %32 = sbr.rel (%p30) target = $region8
    $region5: #{tpu_custom_call.1} parent=1 // loop_body
      %s34 = ssub.s32 %s29, 1
      %s35 = ssub.s32 %s29, 2
      %s42 = sadd.s32 1, %s37
      %p43 = scmp.ge.s32.totalorder %s42, 1
      %s44 = scalar_select %p43, 0, %s42
      %s45 = sadd.s32 1, %s36
      %s46 = scalar_select %p43, %s45, %s36
      %p47 = scmp.ge.s32.totalorder %s46, 2
      %s48 = scalar_select %p47, 0, %s46
      %s49 = ssub.s32 %s36, %s48
      %p50 = scmp.eq.s32.totalorder %s49, 0
      %s52 = sadd.s32 %s51, 1
      %s53 = scalar_select %p50, %s51, %s52
      %p56 = pneg %p50
      %p57 = scmp.eq.s32.totalorder %s29, 1
      %p58 = por %p56, %p57
      %p59 = scmp.ne.s32.totalorder %s51, %s54
      %p60 = scmp.eq.s32.totalorder %s29, 0
      %p61 = por %p59, %p60
      %p62 = scmp.ne.s32.totalorder %s51, %s54
      %p63 = scmp.eq.s32.totalorder %s34, 1
      %p64 = por %p62, %p63
      %p65 = scmp.ne.s32.totalorder %s54, %s55
      %p66 = scmp.eq.s32.totalorder %s34, 0
      %p67 = por %p65, %p66
      %p68 = scmp.ne.s32.totalorder %s54, %s55
      %p69 = scmp.eq.s32.totalorder %s35, 1
      %p70 = por %p68, %p69
      %p72 = scmp.ne.s32.totalorder %s55, %s71
      %p73 = scmp.eq.s32.totalorder %s35, 0
      %p74 = por %p72, %p73
      %s76 = sadd.s32 %s75, 1
      %p79 = scmp.eq.s32.totalorder %s29, 1
      %p80 = scmp.ne.s32.totalorder %s75, %s77
      %p81 = scmp.eq.s32.totalorder %s29, 0
      %p82 = por %p80, %p81
      %p83 = scmp.ne.s32.totalorder %s75, %s77
      %p84 = scmp.eq.s32.totalorder %s34, 1
      %p85 = por %p83, %p84
      %p86 = scmp.ne.s32.totalorder %s77, %s78
      %p87 = scmp.eq.s32.totalorder %s34, 0
      %p88 = por %p86, %p87
      %p89 = scmp.ne.s32.totalorder %s77, %s78
      %p90 = scmp.eq.s32.totalorder %s35, 1
      %p91 = por %p89, %p90
      %p93 = scmp.ne.s32.totalorder %s78, %s92
      %p94 = scmp.eq.s32.totalorder %s35, 0
      %p95 = por %p93, %p94
      %s97 = sadd.s32 %s96, 1
      %p100 = scmp.eq.s32.totalorder %s29, 1
      %p101 = scmp.ne.s32.totalorder %s96, %s98
      %p102 = scmp.eq.s32.totalorder %s29, 0
      %p103 = por %p101, %p102
      %p104 = scmp.ne.s32.totalorder %s96, %s98
      %p105 = scmp.eq.s32.totalorder %s34, 1
      %p106 = por %p104, %p105
      %p107 = scmp.ne.s32.totalorder %s98, %s99
      %p108 = scmp.eq.s32.totalorder %s34, 0
      %p109 = por %p107, %p108
      %p110 = scmp.ne.s32.totalorder %s98, %s99
      %p111 = scmp.eq.s32.totalorder %s35, 1
      %p112 = por %p110, %p111
      %p114 = scmp.ne.s32.totalorder %s99, %s113
      %p115 = scmp.eq.s32.totalorder %s35, 0
      %p116 = por %p114, %p115
      %s118 = sadd.s32 %s117, 1
      %p121 = scmp.eq.s32.totalorder %s29, 1
      %p122 = scmp.ne.s32.totalorder %s117, %s119
      %p123 = scmp.eq.s32.totalorder %s29, 0
      %p124 = por %p122, %p123
      %p125 = scmp.ne.s32.totalorder %s117, %s119
      %p126 = scmp.eq.s32.totalorder %s34, 1
      %p127 = por %p125, %p126
      %p128 = scmp.ne.s32.totalorder %s119, %s120
      %p129 = scmp.eq.s32.totalorder %s34, 0
      %p130 = por %p128, %p129
      %p131 = scmp.ne.s32.totalorder %s119, %s120
      %p132 = scmp.eq.s32.totalorder %s35, 1
      %p133 = por %p131, %p132
      %p135 = scmp.ne.s32.totalorder %s120, %s134
      %p136 = scmp.eq.s32.totalorder %s35, 0
      %p137 = por %p135, %p136
      %s139 = sadd.s32 %s138, 1
      %p142 = scmp.eq.s32.totalorder %s29, 1
      %p143 = scmp.ne.s32.totalorder %s138, %s140
      %p144 = scmp.eq.s32.totalorder %s29, 0
      %p145 = por %p143, %p144
      %p146 = scmp.ne.s32.totalorder %s138, %s140
      %p147 = scmp.eq.s32.totalorder %s34, 1
      %p148 = por %p146, %p147
      %p149 = scmp.ne.s32.totalorder %s140, %s141
      %p150 = scmp.eq.s32.totalorder %s34, 0
      %p151 = por %p149, %p150
      %p152 = scmp.ne.s32.totalorder %s140, %s141
      %p153 = scmp.eq.s32.totalorder %s35, 1
      %p154 = por %p152, %p153
      %p156 = scmp.ne.s32.totalorder %s141, %s155
      %p157 = scmp.eq.s32.totalorder %s35, 0
      %p158 = por %p156, %p157
      %s160 = sadd.s32 %s159, 1
      %p163 = scmp.eq.s32.totalorder %s29, 1
      %p164 = scmp.ne.s32.totalorder %s159, %s161
      %p165 = scmp.eq.s32.totalorder %s29, 0
      %p166 = por %p164, %p165
      %p167 = scmp.ne.s32.totalorder %s159, %s161
      %p168 = scmp.eq.s32.totalorder %s34, 1
      %p169 = por %p167, %p168
      %p170 = scmp.ne.s32.totalorder %s161, %s162
      %p171 = scmp.eq.s32.totalorder %s34, 0
      %p172 = por %p170, %p171
      %p173 = scmp.ne.s32.totalorder %s161, %s162
      %p174 = scmp.eq.s32.totalorder %s35, 1
      %p175 = por %p173, %p174
      %p177 = scmp.ne.s32.totalorder %s162, %s176
      %p178 = scmp.eq.s32.totalorder %s35, 0
      %p179 = por %p177, %p178
      %s181 = sadd.s32 %s180, 1
      %p184 = scmp.eq.s32.totalorder %s29, 1
      %p185 = scmp.ne.s32.totalorder %s180, %s182
      %p186 = scmp.eq.s32.totalorder %s29, 0
      %p187 = por %p185, %p186
      %p188 = scmp.ne.s32.totalorder %s180, %s182
      %p189 = scmp.eq.s32.totalorder %s34, 1
      %p190 = por %p188, %p189
      %p191 = scmp.ne.s32.totalorder %s182, %s183
      %p192 = scmp.eq.s32.totalorder %s34, 0
      %p193 = por %p191, %p192
      %p194 = scmp.ne.s32.totalorder %s182, %s183
      %p195 = scmp.eq.s32.totalorder %s35, 1
      %p196 = por %p194, %p195
      %p198 = scmp.ne.s32.totalorder %s183, %s197
      %p199 = scmp.eq.s32.totalorder %s35, 0
      %p200 = por %p198, %p199
      %s202 = sadd.s32 %s201, 1
      %p205 = scmp.eq.s32.totalorder %s29, 1
      %p206 = scmp.ne.s32.totalorder %s201, %s203
      %p207 = scmp.eq.s32.totalorder %s29, 0
      %p208 = por %p206, %p207
      %p209 = scmp.ne.s32.totalorder %s201, %s203
      %p210 = scmp.eq.s32.totalorder %s34, 1
      %p211 = por %p209, %p210
      %p212 = scmp.ne.s32.totalorder %s203, %s204
      %p213 = scmp.eq.s32.totalorder %s34, 0
      %p214 = por %p212, %p213
      %p215 = scmp.ne.s32.totalorder %s203, %s204
      %p216 = scmp.eq.s32.totalorder %s35, 1
      %p217 = por %p215, %p216
      %p219 = scmp.ne.s32.totalorder %s204, %s218
      %p220 = scmp.eq.s32.totalorder %s35, 0
      %p221 = por %p219, %p220
      %s223 = sadd.s32 %s222, 1
      %p226 = scmp.eq.s32.totalorder %s29, 1
      %p227 = scmp.ne.s32.totalorder %s222, %s224
      %p228 = scmp.eq.s32.totalorder %s29, 0
      %p229 = por %p227, %p228
      %p230 = scmp.ne.s32.totalorder %s222, %s224
      %p231 = scmp.eq.s32.totalorder %s34, 1
      %p232 = por %p230, %p231
      %p233 = scmp.ne.s32.totalorder %s224, %s225
      %p234 = scmp.eq.s32.totalorder %s34, 0
      %p235 = por %p233, %p234
      %p236 = scmp.ne.s32.totalorder %s224, %s225
      %p237 = scmp.eq.s32.totalorder %s35, 1
      %p238 = por %p236, %p237
      %p240 = scmp.ne.s32.totalorder %s225, %s239
      %p241 = scmp.eq.s32.totalorder %s35, 0
      %p242 = por %p240, %p241
      %s244 = sadd.s32 %s243, 1
      %p247 = scmp.eq.s32.totalorder %s29, 1
      %p248 = scmp.ne.s32.totalorder %s243, %s245
      %p249 = scmp.eq.s32.totalorder %s29, 0
      %p250 = por %p248, %p249
      %p251 = scmp.ne.s32.totalorder %s243, %s245
      %p252 = scmp.eq.s32.totalorder %s34, 1
      %p253 = por %p251, %p252
      %p254 = scmp.ne.s32.totalorder %s245, %s246
      %p255 = scmp.eq.s32.totalorder %s34, 0
      %p256 = por %p254, %p255
      %p257 = scmp.ne.s32.totalorder %s245, %s246
      %p258 = scmp.eq.s32.totalorder %s35, 1
      %p259 = por %p257, %p258
      %p261 = scmp.ne.s32.totalorder %s246, %s260
      %p262 = scmp.eq.s32.totalorder %s35, 0
      %p263 = por %p261, %p262
      %s265 = sadd.s32 %s264, 1
      %p268 = scmp.eq.s32.totalorder %s29, 1
      %p269 = scmp.ne.s32.totalorder %s264, %s266
      %p270 = scmp.eq.s32.totalorder %s29, 0
      %p271 = por %p269, %p270
      %p272 = scmp.ne.s32.totalorder %s264, %s266
      %p273 = scmp.eq.s32.totalorder %s34, 1
      %p274 = por %p272, %p273
      %p275 = scmp.ne.s32.totalorder %s266, %s267
      %p276 = scmp.eq.s32.totalorder %s34, 0
      %p277 = por %p275, %p276
      %p278 = scmp.ne.s32.totalorder %s266, %s267
      %p279 = scmp.eq.s32.totalorder %s35, 1
      %p280 = por %p278, %p279
      %p282 = scmp.ne.s32.totalorder %s267, %s281
      %p283 = scmp.eq.s32.totalorder %s35, 0
      %p284 = por %p282, %p283
      %s286 = sadd.s32 %s285, 1
      %p289 = scmp.eq.s32.totalorder %s29, 1
      %p290 = scmp.ne.s32.totalorder %s285, %s287
      %p291 = scmp.eq.s32.totalorder %s29, 0
      %p292 = por %p290, %p291
      %p293 = scmp.ne.s32.totalorder %s285, %s287
      %p294 = scmp.eq.s32.totalorder %s34, 1
      %p295 = por %p293, %p294
      %p296 = scmp.ne.s32.totalorder %s287, %s288
      %p297 = scmp.eq.s32.totalorder %s34, 0
      %p298 = por %p296, %p297
      %p299 = scmp.ne.s32.totalorder %s287, %s288
      %p300 = scmp.eq.s32.totalorder %s35, 1
      %p301 = por %p299, %p300
      %p303 = scmp.ne.s32.totalorder %s288, %s302
      %p304 = scmp.eq.s32.totalorder %s35, 0
      %p305 = por %p303, %p304
      %s307 = sadd.s32 %s306, 1
      %p310 = scmp.eq.s32.totalorder %s29, 1
      %p311 = scmp.ne.s32.totalorder %s306, %s308
      %p312 = scmp.eq.s32.totalorder %s29, 0
      %p313 = por %p311, %p312
      %p314 = scmp.ne.s32.totalorder %s306, %s308
      %p315 = scmp.eq.s32.totalorder %s34, 1
      %p316 = por %p314, %p315
      %p317 = scmp.ne.s32.totalorder %s308, %s309
      %p318 = scmp.eq.s32.totalorder %s34, 0
      %p319 = por %p317, %p318
      %p320 = scmp.ne.s32.totalorder %s308, %s309
      %p321 = scmp.eq.s32.totalorder %s35, 1
      %p322 = por %p320, %p321
      %p324 = scmp.ne.s32.totalorder %s309, %s323
      %p325 = scmp.eq.s32.totalorder %s35, 0
      %p326 = por %p324, %p325
      %s327 = ssub.s32 %s36, %s48
      %s328 = ssub.s32 %s37, %s44
      %s329 = sor.u32 %s327, %s328
      %p330 = scmp.eq.s32.totalorder %s329, 0
      %s332 = sadd.s32 %s331, 1
      %s333 = scalar_select %p330, %s331, %s332
      %p336 = pneg %p330
      %p337 = scmp.eq.s32.totalorder %s29, 1
      %p338 = por %p336, %p337
      %p339 = scmp.ne.s32.totalorder %s331, %s334
      %p340 = scmp.eq.s32.totalorder %s29, 0
      %p341 = por %p339, %p340
      %p342 = scmp.ne.s32.totalorder %s331, %s334
      %p343 = scmp.eq.s32.totalorder %s34, 1
      %p344 = por %p342, %p343
      %p345 = scmp.ne.s32.totalorder %s334, %s335
      %p346 = scmp.eq.s32.totalorder %s34, 0
      %p347 = por %p345, %p346
      %p348 = scmp.ne.s32.totalorder %s334, %s335
      %p349 = scmp.eq.s32.totalorder %s35, 1
      %p350 = por %p348, %p349
      %p352 = scmp.ne.s32.totalorder %s335, %s351
      %p353 = scmp.eq.s32.totalorder %s35, 0
      %p354 = por %p352, %p353
      %p355 = scmp.le.s32.totalorder 1, %s29
      %p356 = scmp.lt.s32.totalorder %s29, 3
      %p357 = pnand %p355, %p356
      %p358 = pneg %p357
      // Predicated region
      $region9: #{tpu_custom_call.1} parent=5 // pred_check
        _
      $region10: #{tpu_custom_call.1} parent=5 // pred_check_branch
        %360 = sbr.rel (%p357) target = $region12
      $region11: #{tpu_custom_call.1} parent=5 // pred_region
        %s361 = ssub.s32 %s29, 1
        // Predicated region
        $region13: #{tpu_custom_call.1} parent=11 // pred_check
          %p362 = pneg %p88
        $region14: #{tpu_custom_call.1} parent=11 // pred_check_branch
          %364 = sbr.rel (%p362) target = $region16
        $region15: #{tpu_custom_call.1} parent=11 // pred_region
          _
        $region16: #{tpu_custom_call.1} parent=11 // pred_fallthru
          _
        // Predicated region
        $region17: #{tpu_custom_call.1} parent=11 // pred_check
          %p365 = pneg %p109
        $region18: #{tpu_custom_call.1} parent=11 // pred_check_branch
          %367 = sbr.rel (%p365) target = $region20
        $region19: #{tpu_custom_call.1} parent=11 // pred_region
          _
        $region20: #{tpu_custom_call.1} parent=11 // pred_fallthru
          _
        // Predicated region
        $region21: #{tpu_custom_call.1} parent=11 // pred_check
          %p368 = pneg %p130
        $region22: #{tpu_custom_call.1} parent=11 // pred_check_branch
          %370 = sbr.rel (%p368) target = $region24
        $region23: #{tpu_custom_call.1} parent=11 // pred_region
          %s372 = ssub.s32 512, 512
          %373 = vsyncadd [#allocation8], %s372
          %s374 = sshll.u32 [#allocation7], 4
          %s375 = int_to_ptr.vmem [resolvable:$true] %s374
          %380 = dma.hbm_to_vmem [thread:$0]  %s3, 512, %s375, [#allocation8], 128, 128, 8
        $region24: #{tpu_custom_call.1} parent=11 // pred_fallthru
          _
        // Predicated region
        $region25: #{tpu_custom_call.1} parent=11 // pred_check
          %p381 = pneg %p151
        $region26: #{tpu_custom_call.1} parent=11 // pred_check_branch
          %383 = sbr.rel (%p381) target = $region28
        $region27: #{tpu_custom_call.1} parent=11 // pred_region
          %s385 = ssub.s32 512, 512
          %386 = vsyncadd [#allocation8], %s385
          %s387 = sshll.u32 [#allocation9], 4
          %s388 = int_to_ptr.vmem [resolvable:$true] %s387
          %393 = dma.hbm_to_vmem [thread:$0]  %s4, 512, %s388, [#allocation8], 128, 128, 8
        $region28: #{tpu_custom_call.1} parent=11 // pred_fallthru
          _
        // Predicated region
        $region29: #{tpu_custom_call.1} parent=11 // pred_check
          %p394 = pneg %p172
        $region30: #{tpu_custom_call.1} parent=11 // pred_check_branch
          %396 = sbr.rel (%p394) target = $region32
        $region31: #{tpu_custom_call.1} parent=11 // pred_region
          %s398 = ssub.s32 512, 512
          %399 = vsyncadd [#allocation11], %s398
          %s400 = sshll.u32 [#allocation10], 4
          %s401 = int_to_ptr.vmem [resolvable:$true] %s400
          %406 = dma.hbm_to_vmem [thread:$0]  %s5, 512, %s401, [#allocation11], 128, 128, 8
        $region32: #{tpu_custom_call.1} parent=11 // pred_fallthru
          _
        // Predicated region
        $region33: #{tpu_custom_call.1} parent=11 // pred_check
          %p407 = pneg %p193
        $region34: #{tpu_custom_call.1} parent=11 // pred_check_branch
          %409 = sbr.rel (%p407) target = $region36
        $region35: #{tpu_custom_call.1} parent=11 // pred_region
          %s411 = ssub.s32 16, 16
          %412 = vsyncadd [#allocation11], %s411
          %s414 = sshll.u32 [#allocation12], 4
          %s415 = int_to_ptr.vmem [resolvable:$true] %s414
          %417 = dma.hbm_to_vmem [thread:$0]  %s6, 16, %s415, [#allocation11]
        $region36: #{tpu_custom_call.1} parent=11 // pred_fallthru
          _
        // Predicated region
        $region37: #{tpu_custom_call.1} parent=11 // pred_check
          %p418 = pneg %p214
        $region38: #{tpu_custom_call.1} parent=11 // pred_check_branch
          %420 = sbr.rel (%p418) target = $region40
        $region39: #{tpu_custom_call.1} parent=11 // pred_region
          %s422 = ssub.s32 16, 16
          %423 = vsyncadd [#allocation14], %s422
          %s425 = sshll.u32 [#allocation13], 4
          %s426 = int_to_ptr.vmem [resolvable:$true] %s425
          %428 = dma.hbm_to_vmem [thread:$0]  %s7, 16, %s426, [#allocation14]
        $region40: #{tpu_custom_call.1} parent=11 // pred_fallthru
          _
        // Predicated region
        $region41: #{tpu_custom_call.1} parent=11 // pred_check
          %p429 = pneg %p235
        $region42: #{tpu_custom_call.1} parent=11 // pred_check_branch
          %431 = sbr.rel (%p429) target = $region44
        $region43: #{tpu_custom_call.1} parent=11 // pred_region
          %s433 = ssub.s32 16, 16
          %434 = vsyncadd [#allocation14], %s433
          %s436 = sshll.u32 [#allocation15], 4
          %s437 = int_to_ptr.vmem [resolvable:$true] %s436
          %439 = dma.hbm_to_vmem [thread:$0]  %s8, 16, %s437, [#allocation14]
        $region44: #{tpu_custom_call.1} parent=11 // pred_fallthru
          _
        // Predicated region
        $region45: #{tpu_custom_call.1} parent=11 // pred_check
          %p440 = pneg %p256
        $region46: #{tpu_custom_call.1} parent=11 // pred_check_branch
          %442 = sbr.rel (%p440) target = $region48
        $region47: #{tpu_custom_call.1} parent=11 // pred_region
          _
        $region48: #{tpu_custom_call.1} parent=11 // pred_fallthru
          _
        // Predicated region
        $region49: #{tpu_custom_call.1} parent=11 // pred_check
          %p443 = pneg %p277
        $region50: #{tpu_custom_call.1} parent=11 // pred_check_branch
          %445 = sbr.rel (%p443) target = $region52
        $region51: #{tpu_custom_call.1} parent=11 // pred_region
          _
        $region52: #{tpu_custom_call.1} parent=11 // pred_fallthru
          _
        // Predicated region
        $region53: #{tpu_custom_call.1} parent=11 // pred_check
          %p446 = pneg %p298
        $region54: #{tpu_custom_call.1} parent=11 // pred_check_branch
          %448 = sbr.rel (%p446) target = $region56
        $region55: #{tpu_custom_call.1} parent=11 // pred_region
          %s450 = ssub.s32 512, 512
          %451 = vsyncadd [#allocation17], %s450
          %s452 = sshll.u32 [#allocation16], 4
          %s453 = int_to_ptr.vmem [resolvable:$true] %s452
          %458 = dma.hbm_to_vmem [thread:$0]  %s11, 512, %s453, [#allocation17], 128, 128, 8
        $region56: #{tpu_custom_call.1} parent=11 // pred_fallthru
          _
        // Predicated region
        $region57: #{tpu_custom_call.1} parent=11 // pred_check
          %p459 = pneg %p319
        $region58: #{tpu_custom_call.1} parent=11 // pred_check_branch
          %461 = sbr.rel (%p459) target = $region60
        $region59: #{tpu_custom_call.1} parent=11 // pred_region
          _
        $region60: #{tpu_custom_call.1} parent=11 // pred_fallthru
          _
      $region12: #{tpu_custom_call.1} parent=5 // pred_fallthru
        _
      %p462 = scmp.lt.s32.totalorder %s29, 2
      // Predicated region
      $region61: #{tpu_custom_call.1} parent=5 // pred_check
        %p463 = pneg %p462
      $region62: #{tpu_custom_call.1} parent=5 // pred_check_branch
        %465 = sbr.rel (%p463) target = $region64
      $region63: #{tpu_custom_call.1} parent=5 // pred_region
        // Predicated region
        $region65: #{tpu_custom_call.1} parent=63 // pred_check
          %p466 = pneg %p61
        $region66: #{tpu_custom_call.1} parent=63 // pred_check_branch
          %468 = sbr.rel (%p466) target = $region68
        $region67: #{tpu_custom_call.1} parent=63 // pred_region
          %s469 = sand.u32 %s51, 1
          %s470 = scalar_lea.sflag [#allocation5], %s469
          %s471 = sand.u32 %s51, 1
          %s472 = smul.addr %s471, 8
          %s473 = scalar_lea.vmem [#allocation4], %s472
          %s475 = ssub.s32 128, 128
          %476 = vsyncadd %s470, %s475
          %s477 = smul.addr %s36, 128
          %s478 = scalar_lea.hbm %s0, %s477
          %s480 = sshll.u32 %s473, 4
          %s481 = int_to_ptr.vmem [resolvable:$true] %s480
          %483 = dma.hbm_to_vmem [thread:$0]  %s478, 128, %s481, %s470
        $region68: #{tpu_custom_call.1} parent=63 // pred_fallthru
          _
      $region64: #{tpu_custom_call.1} parent=5 // pred_fallthru
        _
      %p484 = scmp.le.s32.totalorder 1, %s29
      %p485 = scmp.lt.s32.totalorder %s29, 3
      %p486 = pnand %p484, %p485
      %p487 = pneg %p486
      // Predicated region
      $region69: #{tpu_custom_call.1} parent=5 // pred_check
        _
      $region70: #{tpu_custom_call.1} parent=5 // pred_check_branch
        %489 = sbr.rel (%p486) target = $region72
      $region71: #{tpu_custom_call.1} parent=5 // pred_region
        %s490 = ssub.s32 %s29, 1
        %s491 = sand.u32 %s54, 1
        %s492 = scalar_lea.sflag [#allocation5], %s491
        %s493 = sand.u32 %s54, 1
        %s494 = smul.addr %s493, 8
        %s495 = scalar_lea.vmem [#allocation4], %s494
        // Predicated region
        $region73: #{tpu_custom_call.1} parent=71 // pred_check
          %p496 = pneg %p67
        $region74: #{tpu_custom_call.1} parent=71 // pred_check_branch
          %498 = sbr.rel (%p496) target = $region76
        $region75: #{tpu_custom_call.1} parent=71 // pred_region
          %499 = dma.done %s492, 128
        $region76: #{tpu_custom_call.1} parent=71 // pred_fallthru
          _
        // Predicated region
        $region77: #{tpu_custom_call.1} parent=71 // pred_check
          %p500 = pneg %p130
        $region78: #{tpu_custom_call.1} parent=71 // pred_check_branch
          %502 = sbr.rel (%p500) target = $region80
        $region79: #{tpu_custom_call.1} parent=71 // pred_region
          %503 = dma.done [#allocation8], 512
        $region80: #{tpu_custom_call.1} parent=71 // pred_fallthru
          _
        // Predicated region
        $region81: #{tpu_custom_call.1} parent=71 // pred_check
          %p504 = pneg %p151
        $region82: #{tpu_custom_call.1} parent=71 // pred_check_branch
          %506 = sbr.rel (%p504) target = $region84
        $region83: #{tpu_custom_call.1} parent=71 // pred_region
          %507 = dma.done [#allocation8], 512
        $region84: #{tpu_custom_call.1} parent=71 // pred_fallthru
          _
        // Predicated region
        $region85: #{tpu_custom_call.1} parent=71 // pred_check
          %p508 = pneg %p172
        $region86: #{tpu_custom_call.1} parent=71 // pred_check_branch
          %510 = sbr.rel (%p508) target = $region88
        $region87: #{tpu_custom_call.1} parent=71 // pred_region
          %511 = dma.done [#allocation11], 512
        $region88: #{tpu_custom_call.1} parent=71 // pred_fallthru
          _
        // Predicated region
        $region89: #{tpu_custom_call.1} parent=71 // pred_check
          %p512 = pneg %p193
        $region90: #{tpu_custom_call.1} parent=71 // pred_check_branch
          %514 = sbr.rel (%p512) target = $region92
        $region91: #{tpu_custom_call.1} parent=71 // pred_region
          %515 = dma.done [#allocation11], 16
        $region92: #{tpu_custom_call.1} parent=71 // pred_fallthru
          _
        // Predicated region
        $region93: #{tpu_custom_call.1} parent=71 // pred_check
          %p516 = pneg %p214
        $region94: #{tpu_custom_call.1} parent=71 // pred_check_branch
          %518 = sbr.rel (%p516) target = $region96
        $region95: #{tpu_custom_call.1} parent=71 // pred_region
          %519 = dma.done [#allocation14], 16
        $region96: #{tpu_custom_call.1} parent=71 // pred_fallthru
          _
        // Predicated region
        $region97: #{tpu_custom_call.1} parent=71 // pred_check
          %p520 = pneg %p235
        $region98: #{tpu_custom_call.1} parent=71 // pred_check_branch
          %522 = sbr.rel (%p520) target = $region100
        $region99: #{tpu_custom_call.1} parent=71 // pred_region
          %523 = dma.done [#allocation14], 16
        $region100: #{tpu_custom_call.1} parent=71 // pred_fallthru
          _
        // Predicated region
        $region101: #{tpu_custom_call.1} parent=71 // pred_check
          %p524 = pneg %p298
        $region102: #{tpu_custom_call.1} parent=71 // pred_check_branch
          %526 = sbr.rel (%p524) target = $region104
        $region103: #{tpu_custom_call.1} parent=71 // pred_region
          %527 = dma.done [#allocation17], 512
        $region104: #{tpu_custom_call.1} parent=71 // pred_fallthru
          _
        %s528 = sand.u32 %s54, 1
        %s529 = scalar_lea.sflag [#allocation5], %s528
        %s530 = sand.u32 %s54, 1
        %s531 = smul.addr %s530, 8
        %s532 = scalar_lea.vmem [#allocation4], %s531
        %p533 = pneg %p67
        %p534 = pneg %p64
        %p535 = pneg %p88
        %p536 = pneg %p85
        %p537 = pneg %p109
        %p538 = pneg %p106
        %p539 = pneg %p130
        %p540 = pneg %p127
        %p541 = pneg %p151
        %p542 = pneg %p148
        %p543 = pneg %p172
        %p544 = pneg %p169
        %p545 = pneg %p193
        %p546 = pneg %p190
        %p547 = pneg %p214
        %p548 = pneg %p211
        %p549 = pneg %p235
        %p550 = pneg %p232
        %p551 = pneg %p256
        %p552 = pneg %p253
        %p553 = pneg %p277
        %p554 = pneg %p274
        %p555 = pneg %p298
        %p556 = pneg %p295
        %p557 = pneg %p319
        %p558 = pneg %p316
        %p559 = pneg %p347
        %p560 = pneg %p344
        %s561 = sand.u32 %s334, 1
        %s562 = scalar_lea.sflag [#allocation6], %s561
        %s563 = sand.u32 %s334, 1
        %s564 = smul.addr %s563, 8
        %s565 = scalar_lea.vmem [#allocation18], %s564
        %v566 = vld [vmem:[%s1] sm:$0x1]
        %v567 = vld [vmem:[%s2] sm:$0x1]
        %p568 = scmp.eq.s32.totalorder %s39, 0
        // Predicated region
        $region105: #{tpu_custom_call.1} parent=71 // pred_check
          %p569 = pneg %p568
        $region106: #{tpu_custom_call.1} parent=71 // pred_check_branch
          %571 = sbr.rel (%p569) target = $region108
        $region107: #{tpu_custom_call.1} parent=71 // pred_region
          %v572 = vld [vmem:[%s495] sm:$0xff]
          %vm573 = vcmask 261120
          %v574 = vsel %vm573, %v572, 0.0
          %575 = vadd.xlane.f32.xlu0 %v574
          %v576 = vpop.xlane.xlu0 %575
          %v577 = vrcp.pop 32.0
          %v578 = vmul.f32 %v576, %v577
          %v579 = vsub.f32 %v572, %v578
          %v580 = vmul.f32 %v579, %v579
          %v581 = vsel %vm573, %v580, 0.0
          %582 = vadd.xlane.f32.xlu0 %v581
          %v583 = vpop.xlane.xlu0 %582
          %v584 = vmul.f32 %v583, %v577
          %v585 = vadd.f32 %v584, 1e-05
          %v586 = vrsqrt.pop %v585
          %v587 = vmul.f32 %v579, %v586
          %v589 = vlaneseq
          %v590 = vshrl.u32 %v589, 7
          %v591 = vsub.s32 0, %v590
          %v592 = vrot.slane %v566, %v591
          %v594 = vmul.f32 %v587, %v592
          %v596 = vlaneseq
          %v597 = vshrl.u32 %v596, 7
          %v598 = vsub.s32 0, %v597
          %v599 = vrot.slane %v567, %v598
          %v601 = vadd.f32 %v594, %v599
          %v602 = vld [vmem:[#allocation9] sm:$0xff]
          %v603 = vld [vmem:[#allocation9 + $0x8] sm:$0xff]
          %v604 = vld [vmem:[#allocation9 + $0x10] sm:$0xff]
          %v605 = vld [vmem:[#allocation9 + $0x18] sm:$0xff]
          %v607 = vsel %vm573, %v601, 0
          %609 = vmatprep.subr.mxu0 0.0
          %610 = vmatpush1.msra.mxu0 %v602
          %611 = vmatprep.subr.mxu0 0.0
          %612 = vmatpush1.msra.mxu0 %v603
          %613 = vmatprep.subr.mxu0 0.0
          %614 = vmatpush1.msra.mxu0 %v604
          %615 = vmatprep.subr.mxu0 0.0
          %616 = vmatpush1.msra.mxu0 %v605
          %617 = vmatprep.subr.mxu0 0.0
          %618 = vmatpush1.msra.mxu0 0.0
          %619 = vmatprep.subr.mxu0 0.0
          %620 = vmatpush1.msra.mxu0 0.0
          %621 = vmatprep.subr.mxu0 0.0
          %622 = vmatpush1.msra.mxu0 0.0
          %623 = vmatprep.subr.mxu0 0.0
          %624 = vmatpush1.msra.mxu0 0.0
          %625 = vmatprep.subr.mxu0 0.0
          %626 = vmatpush1.msra.mxu0 0.0
          %627 = vmatprep.subr.mxu0 0.0
          %628 = vmatpush1.msra.mxu0 0.0
          %629 = vmatprep.subr.mxu0 0.0
          %630 = vmatpush1.msra.mxu0 0.0
          %631 = vmatprep.subr.mxu0 0.0
          %632 = vmatpush1.msra.mxu0 0.0
          %633 = vmatprep.subr.mxu0 0.0
          %634 = vmatpush1.msra.mxu0 0.0
          %635 = vmatprep.subr.mxu0 0.0
          %636 = vmatpush1.msra.mxu0 0.0
          %637 = vmatprep.subr.mxu0 0.0
          %638 = vmatpush1.msra.mxu0 0.0
          %639 = vmatprep.subr.mxu0 0.0
          %640 = vmatpush1.msra.mxu0 0.0
          %641 = vmatprep.subr.mxu0 0.0
          %642 = vmatpush1.msra.mxu0 0.0
          %643 = vmatprep.subr.mxu0 0.0
          %644 = vmatpush1.msra.mxu0 0.0
          %645 = vmatprep.subr.mxu0 0.0
          %646 = vmatpush1.msra.mxu0 0.0
          %647 = vmatprep.subr.mxu0 0.0
          %648 = vmatpush1.msra.mxu0 0.0
          %649 = vmatprep.subr.mxu0 0.0
          %650 = vmatpush1.msra.mxu0 0.0
          %651 = vmatprep.subr.mxu0 0.0
          %652 = vmatpush1.msra.mxu0 0.0
          %653 = vmatprep.subr.mxu0 0.0
          %654 = vmatpush1.msra.mxu0 0.0
          %655 = vmatprep.subr.mxu0 0.0
          %656 = vmatpush1.msra.mxu0 0.0
          %657 = vmatprep.subr.mxu0 0.0
          %658 = vmatpush1.msra.mxu0 0.0
          %659 = vmatprep.subr.mxu0 0.0
          %660 = vmatpush1.msra.mxu0 0.0
          %661 = vmatprep.subr.mxu0 0.0
          %662 = vmatpush1.msra.mxu0 0.0
          %663 = vmatprep.subr.mxu0 0.0
          %664 = vmatpush1.msra.mxu0 0.0
          %665 = vmatprep.subr.mxu0 0.0
          %666 = vmatpush1.msra.mxu0 0.0
          %667 = vmatprep.subr.mxu0 0.0
          %668 = vmatpush1.msra.mxu0 0.0
          %669 = vmatprep.subr.mxu0 0.0
          %670 = vmatpush1.msra.mxu0 0.0
          %671 = vmatprep.subr.mxu0 0.0
          %672 = vmatpush1.msra.mxu0 0.0
          %673 = vmatprep.mubr.f32.mxu0 0.0
          %674 = vmatmul.mubr.f32.gmra.mrb[0].mxu0 %v607
          %v675 = vpop.f32.mrb[0].mxu0
          %v676 = vadd.f32 0.0, %v675
          %v677 = vpop.f32.mrb[0].mxu0
          %678 = vdwg.mxu0
          %680 = vrot.lane.b32.xlu0 %v676, 120
          %v681 = vpop.permute.xlu0 %680
          %683 = vrot.lane.b32.xlu0 %v676, 112
          %v684 = vpop.permute.xlu0 %683
          %686 = vrot.lane.b32.xlu0 %v676, 104
          %v687 = vpop.permute.xlu0 %686
          %vm689 = vcmask 64512
          %690 = vst.msk [vmem:[#allocation2] sm:$0xff] %vm689, %v676
          %691 = vst.msk [vmem:[#allocation2 + $0x8] sm:$0xff] %vm689, %v681
          %692 = vst.msk [vmem:[#allocation2 + $0x10] sm:$0xff] %vm689, %v684
          %693 = vst.msk [vmem:[#allocation2 + $0x18] sm:$0xff] %vm689, %v687
          %694 = vrot.lane.b32.xlu0 %v676, 96
          %v695 = vpop.permute.xlu0 %694
          %696 = vrot.lane.b32.xlu0 %v681, 96
          %v697 = vpop.permute.xlu0 %696
          %698 = vrot.lane.b32.xlu0 %v684, 96
          %v699 = vpop.permute.xlu0 %698
          %700 = vrot.lane.b32.xlu0 %v687, 96
          %v701 = vpop.permute.xlu0 %700
          %706 = vst.msk [vmem:[#allocation3] sm:$0xff] %vm689, %v695
          %707 = vst.msk [vmem:[#allocation3 + $0x8] sm:$0xff] %vm689, %v697
          %708 = vst.msk [vmem:[#allocation3 + $0x10] sm:$0xff] %vm689, %v699
          %709 = vst.msk [vmem:[#allocation3 + $0x18] sm:$0xff] %vm689, %v701
        $region108: #{tpu_custom_call.1} parent=71 // pred_fallthru
          _
        %s710 = smul.u32 %s39, 8
        %s711 = scalar_lea.vmem %s495, %s710 [#allocation4]
        %v712 = vld [vmem:[%s711] sm:$0xff]
        %vm713 = vcmask 261120
        %v714 = vsel %vm713, %v712, 0.0
        %715 = vadd.xlane.f32.xlu0 %v714
        %v716 = vpop.xlane.xlu0 %715
        %v717 = vrcp.pop 32.0
        %v718 = vmul.f32 %v716, %v717
        %v719 = vsub.f32 %v712, %v718
        %v720 = vmul.f32 %v719, %v719
        %v721 = vsel %vm713, %v720, 0.0
        %722 = vadd.xlane.f32.xlu0 %v721
        %v723 = vpop.xlane.xlu0 %722
        %v724 = vmul.f32 %v723, %v717
        %v725 = vadd.f32 %v724, 1e-05
        %v726 = vrsqrt.pop %v725
        %v727 = vmul.f32 %v719, %v726
        %v729 = vlaneseq
        %v730 = vshrl.u32 %v729, 7
        %v731 = vsub.s32 0, %v730
        %v732 = vrot.slane %v566, %v731
        %v734 = vmul.f32 %v727, %v732
        %v736 = vlaneseq
        %v737 = vshrl.u32 %v736, 7
        %v738 = vsub.s32 0, %v737
        %v739 = vrot.slane %v567, %v738
        %v741 = vadd.f32 %v734, %v739
        %v742 = vld [vmem:[#allocation7] sm:$0xff]
        %v743 = vld [vmem:[#allocation7 + $0x8] sm:$0xff]
        %v744 = vld [vmem:[#allocation7 + $0x10] sm:$0xff]
        %v745 = vld [vmem:[#allocation7 + $0x18] sm:$0xff]
        %v747 = vsel %vm713, %v741, 0
        %749 = vmatprep.subr.mxu0 0.0
        %750 = vmatpush1.msra.mxu0 %v742
        %751 = vmatprep.subr.mxu0 0.0
        %752 = vmatpush1.msra.mxu0 %v743
        %753 = vmatprep.subr.mxu0 0.0
        %754 = vmatpush1.msra.mxu0 %v744
        %755 = vmatprep.subr.mxu0 0.0
        %756 = vmatpush1.msra.mxu0 %v745
        %757 = vmatprep.subr.mxu0 0.0
        %758 = vmatpush1.msra.mxu0 0.0
        %759 = vmatprep.subr.mxu0 0.0
        %760 = vmatpush1.msra.mxu0 0.0
        %761 = vmatprep.subr.mxu0 0.0
        %762 = vmatpush1.msra.mxu0 0.0
        %763 = vmatprep.subr.mxu0 0.0
        %764 = vmatpush1.msra.mxu0 0.0
        %765 = vmatprep.subr.mxu0 0.0
        %766 = vmatpush1.msra.mxu0 0.0
        %767 = vmatprep.subr.mxu0 0.0
        %768 = vmatpush1.msra.mxu0 0.0
        %769 = vmatprep.subr.mxu0 0.0
        %770 = vmatpush1.msra.mxu0 0.0
        %771 = vmatprep.subr.mxu0 0.0
        %772 = vmatpush1.msra.mxu0 0.0
        %773 = vmatprep.subr.mxu0 0.0
        %774 = vmatpush1.msra.mxu0 0.0
        %775 = vmatprep.subr.mxu0 0.0
        %776 = vmatpush1.msra.mxu0 0.0
        %777 = vmatprep.subr.mxu0 0.0
        %778 = vmatpush1.msra.mxu0 0.0
        %779 = vmatprep.subr.mxu0 0.0
        %780 = vmatpush1.msra.mxu0 0.0
        %781 = vmatprep.subr.mxu0 0.0
        %782 = vmatpush1.msra.mxu0 0.0
        %783 = vmatprep.subr.mxu0 0.0
        %784 = vmatpush1.msra.mxu0 0.0
        %785 = vmatprep.subr.mxu0 0.0
        %786 = vmatpush1.msra.mxu0 0.0
        %787 = vmatprep.subr.mxu0 0.0
        %788 = vmatpush1.msra.mxu0 0.0
        %789 = vmatprep.subr.mxu0 0.0
        %790 = vmatpush1.msra.mxu0 0.0
        %791 = vmatprep.subr.mxu0 0.0
        %792 = vmatpush1.msra.mxu0 0.0
        %793 = vmatprep.subr.mxu0 0.0
        %794 = vmatpush1.msra.mxu0 0.0
        %795 = vmatprep.subr.mxu0 0.0
        %796 = vmatpush1.msra.mxu0 0.0
        %797 = vmatprep.subr.mxu0 0.0
        %798 = vmatpush1.msra.mxu0 0.0
        %799 = vmatprep.subr.mxu0 0.0
        %800 = vmatpush1.msra.mxu0 0.0
        %801 = vmatprep.subr.mxu0 0.0
        %802 = vmatpush1.msra.mxu0 0.0
        %803 = vmatprep.subr.mxu0 0.0
        %804 = vmatpush1.msra.mxu0 0.0
        %805 = vmatprep.subr.mxu0 0.0
        %806 = vmatpush1.msra.mxu0 0.0
        %807 = vmatprep.subr.mxu0 0.0
        %808 = vmatpush1.msra.mxu0 0.0
        %809 = vmatprep.subr.mxu0 0.0
        %810 = vmatpush1.msra.mxu0 0.0
        %811 = vmatprep.subr.mxu0 0.0
        %812 = vmatpush1.msra.mxu0 0.0
        %813 = vmatprep.mubr.f32.mxu0 0.0
        %814 = vmatmul.mubr.f32.gmra.mrb[0].mxu0 %v747
        %v815 = vpop.f32.mrb[0].mxu0
        %v816 = vadd.f32 0.0, %v815
        %v817 = vpop.f32.mrb[0].mxu0
        %818 = vdwg.mxu0
        %820 = vrot.lane.b32.xlu0 %v816, 120
        %v821 = vpop.permute.xlu0 %820
        %822 = vrot.lane.b32.xlu0 %v816, 112
        %v823 = vpop.permute.xlu0 %822
        %824 = vrot.lane.b32.xlu0 %v816, 104
        %v825 = vpop.permute.xlu0 %824
        %v826 = vlaneseq
        %v827 = vshrl.u32 %v826, 7
        %v828 = vstv %s710
        %v829 = vadd.s32 %v828, %v827
        %s830 = sadd.s32 %s39, 1
        // While loop
        $region109: #{tpu_custom_call.1} parent=71 // loop_pre_header
          _
        $region110: #{tpu_custom_call.1} parent=71 // loop_header
          %s832 = sphi 0, %s834
          %p833 = scmp.ge.s32.totalorder %s832, %s830
          %v837 = vphi -inf, %v1192
          %v838 = vphi -inf, %v1193
          %v839 = vphi -inf, %v1194
          %v840 = vphi -inf, %v1195
          %v841 = vphi 0.0, %v1236
          %v842 = vphi 0.0, %v1237
          %v843 = vphi 0.0, %v1238
          %v844 = vphi 0.0, %v1239
          %v845 = vphi 0.0, %v1536
          %v846 = vphi 0.0, %v1537
          %v847 = vphi 0.0, %v1538
          %v848 = vphi 0.0, %v1539
        $region111: #{tpu_custom_call.1} parent=71 // loop_header_branch
          %836 = sbr.rel (%p833) target = $region115
        $region112: #{tpu_custom_call.1} parent=71 // loop_body
          %s849 = smul.u32 %s832, 8
          %s850 = scalar_lea.vmem [#allocation2], %s849
          %v851 = vld [vmem:[%s850] sm:$0xff]
          %v852 = vld [vmem:[%s850 + $0x8] sm:$0xff]
          %v853 = vld [vmem:[%s850 + $0x10] sm:$0xff]
          %v854 = vld [vmem:[%s850 + $0x18] sm:$0xff]
          %s855 = scalar_lea.vmem [#allocation3], %s849
          %v856 = vld [vmem:[%s855] sm:$0xff]
          %v857 = vld [vmem:[%s855 + $0x8] sm:$0xff]
          %v858 = vld [vmem:[%s855 + $0x10] sm:$0xff]
          %v859 = vld [vmem:[%s855 + $0x18] sm:$0xff]
          %vm860 = vcmask 64512
          %v861 = vsel %vm860, %v816, 0
          %v864 = vsel %vm860, %v851, 0
          %866 = vmatprep.subr.mxu0 0.0
          %867 = vmatpush1.xpose.msra.mxu0 %v864
          %868 = vmatprep.subr.mxu0 0.0
          %869 = vmatpush1.xpose.msra.mxu0 0.0
          %870 = vmatprep.subr.mxu0 0.0
          %871 = vmatpush1.xpose.msra.mxu0 0.0
          %872 = vmatprep.subr.mxu0 0.0
          %873 = vmatpush1.xpose.msra.mxu0 0.0
          %874 = vmatprep.subr.mxu0 0.0
          %875 = vmatpush1.xpose.msra.mxu0 0.0
          %876 = vmatprep.subr.mxu0 0.0
          %877 = vmatpush1.xpose.msra.mxu0 0.0
          %878 = vmatprep.subr.mxu0 0.0
          %879 = vmatpush1.xpose.msra.mxu0 0.0
          %880 = vmatprep.subr.mxu0 0.0
          %881 = vmatpush1.xpose.msra.mxu0 0.0
          %882 = vmatprep.subr.mxu0 0.0
          %883 = vmatpush1.xpose.msra.mxu0 0.0
          %884 = vmatprep.subr.mxu0 0.0
          %885 = vmatpush1.xpose.msra.mxu0 0.0
          %886 = vmatprep.subr.mxu0 0.0
          %887 = vmatpush1.xpose.msra.mxu0 0.0
          %888 = vmatprep.subr.mxu0 0.0
          %889 = vmatpush1.xpose.msra.mxu0 0.0
          %890 = vmatprep.subr.mxu0 0.0
          %891 = vmatpush1.xpose.msra.mxu0 0.0
          %892 = vmatprep.subr.mxu0 0.0
          %893 = vmatpush1.xpose.msra.mxu0 0.0
          %894 = vmatprep.subr.mxu0 0.0
          %895 = vmatpush1.xpose.msra.mxu0 0.0
          %896 = vmatprep.subr.mxu0 0.0
          %897 = vmatpush1.xpose.msra.mxu0 0.0
          %898 = vmatprep.subr.mxu0 0.0
          %899 = vmatpush1.xpose.msra.mxu0 0.0
          %900 = vmatprep.subr.mxu0 0.0
          %901 = vmatpush1.xpose.msra.mxu0 0.0
          %902 = vmatprep.subr.mxu0 0.0
          %903 = vmatpush1.xpose.msra.mxu0 0.0
          %904 = vmatprep.subr.mxu0 0.0
          %905 = vmatpush1.xpose.msra.mxu0 0.0
          %906 = vmatprep.subr.mxu0 0.0
          %907 = vmatpush1.xpose.msra.mxu0 0.0
          %908 = vmatprep.subr.mxu0 0.0
          %909 = vmatpush1.xpose.msra.mxu0 0.0
          %910 = vmatprep.subr.mxu0 0.0
          %911 = vmatpush1.xpose.msra.mxu0 0.0
          %912 = vmatprep.subr.mxu0 0.0
          %913 = vmatpush1.xpose.msra.mxu0 0.0
          %914 = vmatprep.subr.mxu0 0.0
          %915 = vmatpush1.xpose.msra.mxu0 0.0
          %916 = vmatprep.subr.mxu0 0.0
          %917 = vmatpush1.xpose.msra.mxu0 0.0
          %918 = vmatprep.subr.mxu0 0.0
          %919 = vmatpush1.xpose.msra.mxu0 0.0
          %920 = vmatprep.subr.mxu0 0.0
          %921 = vmatpush1.xpose.msra.mxu0 0.0
          %922 = vmatprep.subr.mxu0 0.0
          %923 = vmatpush1.xpose.msra.mxu0 0.0
          %924 = vmatprep.subr.mxu0 0.0
          %925 = vmatpush1.xpose.msra.mxu0 0.0
          %926 = vmatprep.subr.mxu0 0.0
          %927 = vmatpush1.xpose.msra.mxu0 0.0
          %928 = vmatprep.subr.mxu0 0.0
          %929 = vmatpush1.xpose.msra.mxu0 0.0
          %930 = vmatprep.mubr.f32.mxu0 0.0
          %931 = vmatmul.mubr.f32.gmra.mrb[0].mxu0 %v861
          %v932 = vpop.f32.mrb[0].mxu0
          %v933 = vadd.f32 0.0, %v932
          %v934 = vpop.f32.mrb[0].mxu0
          %935 = vdwg.mxu0
          %v936 = vsel %vm860, %v821, 0
          %v939 = vsel %vm860, %v852, 0
          %941 = vmatprep.subr.mxu0 0.0
          %942 = vmatpush1.xpose.msra.mxu0 %v939
          %943 = vmatprep.subr.mxu0 0.0
          %944 = vmatpush1.xpose.msra.mxu0 0.0
          %945 = vmatprep.subr.mxu0 0.0
          %946 = vmatpush1.xpose.msra.mxu0 0.0
          %947 = vmatprep.subr.mxu0 0.0
          %948 = vmatpush1.xpose.msra.mxu0 0.0
          %949 = vmatprep.subr.mxu0 0.0
          %950 = vmatpush1.xpose.msra.mxu0 0.0
          %951 = vmatprep.subr.mxu0 0.0
          %952 = vmatpush1.xpose.msra.mxu0 0.0
          %953 = vmatprep.subr.mxu0 0.0
          %954 = vmatpush1.xpose.msra.mxu0 0.0
          %955 = vmatprep.subr.mxu0 0.0
          %956 = vmatpush1.xpose.msra.mxu0 0.0
          %957 = vmatprep.subr.mxu0 0.0
          %958 = vmatpush1.xpose.msra.mxu0 0.0
          %959 = vmatprep.subr.mxu0 0.0
          %960 = vmatpush1.xpose.msra.mxu0 0.0
          %961 = vmatprep.subr.mxu0 0.0
          %962 = vmatpush1.xpose.msra.mxu0 0.0
          %963 = vmatprep.subr.mxu0 0.0
          %964 = vmatpush1.xpose.msra.mxu0 0.0
          %965 = vmatprep.subr.mxu0 0.0
          %966 = vmatpush1.xpose.msra.mxu0 0.0
          %967 = vmatprep.subr.mxu0 0.0
          %968 = vmatpush1.xpose.msra.mxu0 0.0
          %969 = vmatprep.subr.mxu0 0.0
          %970 = vmatpush1.xpose.msra.mxu0 0.0
          %971 = vmatprep.subr.mxu0 0.0
          %972 = vmatpush1.xpose.msra.mxu0 0.0
          %973 = vmatprep.subr.mxu0 0.0
          %974 = vmatpush1.xpose.msra.mxu0 0.0
          %975 = vmatprep.subr.mxu0 0.0
          %976 = vmatpush1.xpose.msra.mxu0 0.0
          %977 = vmatprep.subr.mxu0 0.0
          %978 = vmatpush1.xpose.msra.mxu0 0.0
          %979 = vmatprep.subr.mxu0 0.0
          %980 = vmatpush1.xpose.msra.mxu0 0.0
          %981 = vmatprep.subr.mxu0 0.0
          %982 = vmatpush1.xpose.msra.mxu0 0.0
          %983 = vmatprep.subr.mxu0 0.0
          %984 = vmatpush1.xpose.msra.mxu0 0.0
          %985 = vmatprep.subr.mxu0 0.0
          %986 = vmatpush1.xpose.msra.mxu0 0.0
          %987 = vmatprep.subr.mxu0 0.0
          %988 = vmatpush1.xpose.msra.mxu0 0.0
          %989 = vmatprep.subr.mxu0 0.0
          %990 = vmatpush1.xpose.msra.mxu0 0.0
          %991 = vmatprep.subr.mxu0 0.0
          %992 = vmatpush1.xpose.msra.mxu0 0.0
          %993 = vmatprep.subr.mxu0 0.0
          %994 = vmatpush1.xpose.msra.mxu0 0.0
          %995 = vmatprep.subr.mxu0 0.0
          %996 = vmatpush1.xpose.msra.mxu0 0.0
          %997 = vmatprep.subr.mxu0 0.0
          %998 = vmatpush1.xpose.msra.mxu0 0.0
          %999 = vmatprep.subr.mxu0 0.0
          %1000 = vmatpush1.xpose.msra.mxu0 0.0
          %1001 = vmatprep.subr.mxu0 0.0
          %1002 = vmatpush1.xpose.msra.mxu0 0.0
          %1003 = vmatprep.subr.mxu0 0.0
          %1004 = vmatpush1.xpose.msra.mxu0 0.0
          %1005 = vmatprep.mubr.f32.mxu0 0.0
          %1006 = vmatmul.mubr.f32.gmra.mrb[0].mxu0 %v936
          %v1007 = vpop.f32.mrb[0].mxu0
          %v1008 = vadd.f32 0.0, %v1007
          %v1009 = vpop.f32.mrb[0].mxu0
          %1010 = vdwg.mxu0
          %v1011 = vsel %vm860, %v823, 0
          %v1014 = vsel %vm860, %v853, 0
          %1016 = vmatprep.subr.mxu0 0.0
          %1017 = vmatpush1.xpose.msra.mxu0 %v1014
          %1018 = vmatprep.subr.mxu0 0.0
          %1019 = vmatpush1.xpose.msra.mxu0 0.0
          %1020 = vmatprep.subr.mxu0 0.0
          %1021 = vmatpush1.xpose.msra.mxu0 0.0
          %1022 = vmatprep.subr.mxu0 0.0
          %1023 = vmatpush1.xpose.msra.mxu0 0.0
          %1024 = vmatprep.subr.mxu0 0.0
          %1025 = vmatpush1.xpose.msra.mxu0 0.0
          %1026 = vmatprep.subr.mxu0 0.0
          %1027 = vmatpush1.xpose.msra.mxu0 0.0
          %1028 = vmatprep.subr.mxu0 0.0
          %1029 = vmatpush1.xpose.msra.mxu0 0.0
          %1030 = vmatprep.subr.mxu0 0.0
          %1031 = vmatpush1.xpose.msra.mxu0 0.0
          %1032 = vmatprep.subr.mxu0 0.0
          %1033 = vmatpush1.xpose.msra.mxu0 0.0
          %1034 = vmatprep.subr.mxu0 0.0
          %1035 = vmatpush1.xpose.msra.mxu0 0.0
          %1036 = vmatprep.subr.mxu0 0.0
          %1037 = vmatpush1.xpose.msra.mxu0 0.0
          %1038 = vmatprep.subr.mxu0 0.0
          %1039 = vmatpush1.xpose.msra.mxu0 0.0
          %1040 = vmatprep.subr.mxu0 0.0
          %1041 = vmatpush1.xpose.msra.mxu0 0.0
          %1042 = vmatprep.subr.mxu0 0.0
          %1043 = vmatpush1.xpose.msra.mxu0 0.0
          %1044 = vmatprep.subr.mxu0 0.0
          %1045 = vmatpush1.xpose.msra.mxu0 0.0
          %1046 = vmatprep.subr.mxu0 0.0
          %1047 = vmatpush1.xpose.msra.mxu0 0.0
          %1048 = vmatprep.subr.mxu0 0.0
          %1049 = vmatpush1.xpose.msra.mxu0 0.0
          %1050 = vmatprep.subr.mxu0 0.0
          %1051 = vmatpush1.xpose.msra.mxu0 0.0
          %1052 = vmatprep.subr.mxu0 0.0
          %1053 = vmatpush1.xpose.msra.mxu0 0.0
          %1054 = vmatprep.subr.mxu0 0.0
          %1055 = vmatpush1.xpose.msra.mxu0 0.0
          %1056 = vmatprep.subr.mxu0 0.0
          %1057 = vmatpush1.xpose.msra.mxu0 0.0
          %1058 = vmatprep.subr.mxu0 0.0
          %1059 = vmatpush1.xpose.msra.mxu0 0.0
          %1060 = vmatprep.subr.mxu0 0.0
          %1061 = vmatpush1.xpose.msra.mxu0 0.0
          %1062 = vmatprep.subr.mxu0 0.0
          %1063 = vmatpush1.xpose.msra.mxu0 0.0
          %1064 = vmatprep.subr.mxu0 0.0
          %1065 = vmatpush1.xpose.msra.mxu0 0.0
          %1066 = vmatprep.subr.mxu0 0.0
          %1067 = vmatpush1.xpose.msra.mxu0 0.0
          %1068 = vmatprep.subr.mxu0 0.0
          %1069 = vmatpush1.xpose.msra.mxu0 0.0
          %1070 = vmatprep.subr.mxu0 0.0
          %1071 = vmatpush1.xpose.msra.mxu0 0.0
          %1072 = vmatprep.subr.mxu0 0.0
          %1073 = vmatpush1.xpose.msra.mxu0 0.0
          %1074 = vmatprep.subr.mxu0 0.0
          %1075 = vmatpush1.xpose.msra.mxu0 0.0
          %1076 = vmatprep.subr.mxu0 0.0
          %1077 = vmatpush1.xpose.msra.mxu0 0.0
          %1078 = vmatprep.subr.mxu0 0.0
          %1079 = vmatpush1.xpose.msra.mxu0 0.0
          %1080 = vmatprep.mubr.f32.mxu0 0.0
          %1081 = vmatmul.mubr.f32.gmra.mrb[0].mxu0 %v1011
          %v1082 = vpop.f32.mrb[0].mxu0
          %v1083 = vadd.f32 0.0, %v1082
          %v1084 = vpop.f32.mrb[0].mxu0
          %1085 = vdwg.mxu0
          %v1086 = vsel %vm860, %v825, 0
          %v1089 = vsel %vm860, %v854, 0
          %1091 = vmatprep.subr.mxu0 0.0
          %1092 = vmatpush1.xpose.msra.mxu0 %v1089
          %1093 = vmatprep.subr.mxu0 0.0
          %1094 = vmatpush1.xpose.msra.mxu0 0.0
          %1095 = vmatprep.subr.mxu0 0.0
          %1096 = vmatpush1.xpose.msra.mxu0 0.0
          %1097 = vmatprep.subr.mxu0 0.0
          %1098 = vmatpush1.xpose.msra.mxu0 0.0
          %1099 = vmatprep.subr.mxu0 0.0
          %1100 = vmatpush1.xpose.msra.mxu0 0.0
          %1101 = vmatprep.subr.mxu0 0.0
          %1102 = vmatpush1.xpose.msra.mxu0 0.0
          %1103 = vmatprep.subr.mxu0 0.0
          %1104 = vmatpush1.xpose.msra.mxu0 0.0
          %1105 = vmatprep.subr.mxu0 0.0
          %1106 = vmatpush1.xpose.msra.mxu0 0.0
          %1107 = vmatprep.subr.mxu0 0.0
          %1108 = vmatpush1.xpose.msra.mxu0 0.0
          %1109 = vmatprep.subr.mxu0 0.0
          %1110 = vmatpush1.xpose.msra.mxu0 0.0
          %1111 = vmatprep.subr.mxu0 0.0
          %1112 = vmatpush1.xpose.msra.mxu0 0.0
          %1113 = vmatprep.subr.mxu0 0.0
          %1114 = vmatpush1.xpose.msra.mxu0 0.0
          %1115 = vmatprep.subr.mxu0 0.0
          %1116 = vmatpush1.xpose.msra.mxu0 0.0
          %1117 = vmatprep.subr.mxu0 0.0
          %1118 = vmatpush1.xpose.msra.mxu0 0.0
          %1119 = vmatprep.subr.mxu0 0.0
          %1120 = vmatpush1.xpose.msra.mxu0 0.0
          %1121 = vmatprep.subr.mxu0 0.0
          %1122 = vmatpush1.xpose.msra.mxu0 0.0
          %1123 = vmatprep.subr.mxu0 0.0
          %1124 = vmatpush1.xpose.msra.mxu0 0.0
          %1125 = vmatprep.subr.mxu0 0.0
          %1126 = vmatpush1.xpose.msra.mxu0 0.0
          %1127 = vmatprep.subr.mxu0 0.0
          %1128 = vmatpush1.xpose.msra.mxu0 0.0
          %1129 = vmatprep.subr.mxu0 0.0
          %1130 = vmatpush1.xpose.msra.mxu0 0.0
          %1131 = vmatprep.subr.mxu0 0.0
          %1132 = vmatpush1.xpose.msra.mxu0 0.0
          %1133 = vmatprep.subr.mxu0 0.0
          %1134 = vmatpush1.xpose.msra.mxu0 0.0
          %1135 = vmatprep.subr.mxu0 0.0
          %1136 = vmatpush1.xpose.msra.mxu0 0.0
          %1137 = vmatprep.subr.mxu0 0.0
          %1138 = vmatpush1.xpose.msra.mxu0 0.0
          %1139 = vmatprep.subr.mxu0 0.0
          %1140 = vmatpush1.xpose.msra.mxu0 0.0
          %1141 = vmatprep.subr.mxu0 0.0
          %1142 = vmatpush1.xpose.msra.mxu0 0.0
          %1143 = vmatprep.subr.mxu0 0.0
          %1144 = vmatpush1.xpose.msra.mxu0 0.0
          %1145 = vmatprep.subr.mxu0 0.0
          %1146 = vmatpush1.xpose.msra.mxu0 0.0
          %1147 = vmatprep.subr.mxu0 0.0
          %1148 = vmatpush1.xpose.msra.mxu0 0.0
          %1149 = vmatprep.subr.mxu0 0.0
          %1150 = vmatpush1.xpose.msra.mxu0 0.0
          %1151 = vmatprep.subr.mxu0 0.0
          %1152 = vmatpush1.xpose.msra.mxu0 0.0
          %1153 = vmatprep.subr.mxu0 0.0
          %1154 = vmatpush1.xpose.msra.mxu0 0.0
          %1155 = vmatprep.mubr.f32.mxu0 0.0
          %1156 = vmatmul.mubr.f32.gmra.mrb[0].mxu0 %v1086
          %v1157 = vpop.f32.mrb[0].mxu0
          %v1158 = vadd.f32 0.0, %v1157
          %v1159 = vpop.f32.mrb[0].mxu0
          %1160 = vdwg.mxu0
          %v1161 = vlaneseq
          %v1162 = vand.u32 %v1161, 127
          %v1163 = vstv %s849
          %v1164 = vadd.s32 %v1163, %v1162
          %vm1165 = vcmp.ge.s32.totalorder %v829, %v1164
          %vm1166 = vcmp.ne.f32.partialorder %v933, 0.0
          %vm1167 = vcmp.ne.f32.partialorder %v1008, 0.0
          %vm1168 = vcmp.ne.f32.partialorder %v1083, 0.0
          %vm1169 = vcmp.ne.f32.partialorder %v1158, 0.0
          %v1170 = vsel %vm1165, 1, 0
          %vm1171 = vcmp.eq.s32.totalorder %v1170, 1
          %vm1172 = vmand %vm1171, %vm1166
          %vm1173 = vmand %vm1171, %vm1167
          %vm1174 = vmand %vm1171, %vm1168
          %vm1175 = vmand %vm1171, %vm1169
          %v1176 = vsel %vm1172, %v933, -inf
          %v1177 = vsel %vm1173, %v1008, -inf
          %v1178 = vsel %vm1174, %v1083, -inf
          %v1179 = vsel %vm1175, %v1158, -inf
          %v1180 = vsel %vm860, %v1176, -inf
          %1181 = vmax.xlane.f32.xlu0 %v1180
          %v1182 = vpop.xlane.xlu0 %1181
          %v1183 = vsel %vm860, %v1177, -inf
          %1184 = vmax.xlane.f32.xlu0 %v1183
          %v1185 = vpop.xlane.xlu0 %1184
          %v1186 = vsel %vm860, %v1178, -inf
          %1187 = vmax.xlane.f32.xlu0 %v1186
          %v1188 = vpop.xlane.xlu0 %1187
          %v1189 = vsel %vm860, %v1179, -inf
          %1190 = vmax.xlane.f32.xlu0 %v1189
          %v1191 = vpop.xlane.xlu0 %1190
          %v1192 = vmax.f32 %v837, %v1182
          %v1193 = vmax.f32 %v838, %v1185
          %v1194 = vmax.f32 %v839, %v1188
          %v1195 = vmax.f32 %v840, %v1191
          %v1196 = vsub.f32 %v837, %v1192
          %v1197 = vsub.f32 %v838, %v1193
          %v1198 = vsub.f32 %v839, %v1194
          %v1199 = vsub.f32 %v840, %v1195
          %v1200 = vmul.f32 %v1196, 1.442695
          %v1201 = vpow.pop %v1200
          %v1202 = vmul.f32 %v1197, 1.442695
          %v1203 = vpow.pop %v1202
          %v1204 = vmul.f32 %v1198, 1.442695
          %v1205 = vpow.pop %v1204
          %v1206 = vmul.f32 %v1199, 1.442695
          %v1207 = vpow.pop %v1206
          %v1208 = vsub.f32 %v1176, %v1192
          %v1209 = vsub.f32 %v1177, %v1193
          %v1210 = vsub.f32 %v1178, %v1194
          %v1211 = vsub.f32 %v1179, %v1195
          %v1212 = vmul.f32 %v1208, 1.442695
          %v1213 = vpow.pop %v1212
          %v1214 = vmul.f32 %v1209, 1.442695
          %v1215 = vpow.pop %v1214
          %v1216 = vmul.f32 %v1210, 1.442695
          %v1217 = vpow.pop %v1216
          %v1218 = vmul.f32 %v1211, 1.442695
          %v1219 = vpow.pop %v1218
          %v1220 = vmul.f32 %v1201, %v841
          %v1221 = vmul.f32 %v1203, %v842
          %v1222 = vmul.f32 %v1205, %v843
          %v1223 = vmul.f32 %v1207, %v844
          %v1224 = vsel %vm860, %v1213, 0.0
          %1225 = vadd.xlane.f32.xlu0 %v1224
          %v1226 = vpop.xlane.xlu0 %1225
          %v1227 = vsel %vm860, %v1215, 0.0
          %1228 = vadd.xlane.f32.xlu0 %v1227
          %v1229 = vpop.xlane.xlu0 %1228
          %v1230 = vsel %vm860, %v1217, 0.0
          %1231 = vadd.xlane.f32.xlu0 %v1230
          %v1232 = vpop.xlane.xlu0 %1231
          %v1233 = vsel %vm860, %v1219, 0.0
          %1234 = vadd.xlane.f32.xlu0 %v1233
          %v1235 = vpop.xlane.xlu0 %1234
          %v1236 = vadd.f32 %v1220, %v1226
          %v1237 = vadd.f32 %v1221, %v1229
          %v1238 = vadd.f32 %v1222, %v1232
          %v1239 = vadd.f32 %v1223, %v1235
          %v1240 = vmul.f32 %v1201, %v845
          %v1241 = vmul.f32 %v1203, %v846
          %v1242 = vmul.f32 %v1205, %v847
          %v1243 = vmul.f32 %v1207, %v848
          %v1245 = vsel %vm860, %v1213, 0
          %1247 = vmatprep.subr.mxu0 0.0
          %1248 = vmatpush1.msra.mxu0 %v856
          %1249 = vmatprep.subr.mxu0 0.0
          %1250 = vmatpush1.msra.mxu0 0.0
          %1251 = vmatprep.subr.mxu0 0.0
          %1252 = vmatpush1.msra.mxu0 0.0
          %1253 = vmatprep.subr.mxu0 0.0
          %1254 = vmatpush1.msra.mxu0 0.0
          %1255 = vmatprep.subr.mxu0 0.0
          %1256 = vmatpush1.msra.mxu0 0.0
          %1257 = vmatprep.subr.mxu0 0.0
          %1258 = vmatpush1.msra.mxu0 0.0
          %1259 = vmatprep.subr.mxu0 0.0
          %1260 = vmatpush1.msra.mxu0 0.0
          %1261 = vmatprep.subr.mxu0 0.0
          %1262 = vmatpush1.msra.mxu0 0.0
          %1263 = vmatprep.subr.mxu0 0.0
          %1264 = vmatpush1.msra.mxu0 0.0
          %1265 = vmatprep.subr.mxu0 0.0
          %1266 = vmatpush1.msra.mxu0 0.0
          %1267 = vmatprep.subr.mxu0 0.0
          %1268 = vmatpush1.msra.mxu0 0.0
          %1269 = vmatprep.subr.mxu0 0.0
          %1270 = vmatpush1.msra.mxu0 0.0
          %1271 = vmatprep.subr.mxu0 0.0
          %1272 = vmatpush1.msra.mxu0 0.0
          %1273 = vmatprep.subr.mxu0 0.0
          %1274 = vmatpush1.msra.mxu0 0.0
          %1275 = vmatprep.subr.mxu0 0.0
          %1276 = vmatpush1.msra.mxu0 0.0
          %1277 = vmatprep.subr.mxu0 0.0
          %1278 = vmatpush1.msra.mxu0 0.0
          %1279 = vmatprep.subr.mxu0 0.0
          %1280 = vmatpush1.msra.mxu0 0.0
          %1281 = vmatprep.subr.mxu0 0.0
          %1282 = vmatpush1.msra.mxu0 0.0
          %1283 = vmatprep.subr.mxu0 0.0
          %1284 = vmatpush1.msra.mxu0 0.0
          %1285 = vmatprep.subr.mxu0 0.0
          %1286 = vmatpush1.msra.mxu0 0.0
          %1287 = vmatprep.subr.mxu0 0.0
          %1288 = vmatpush1.msra.mxu0 0.0
          %1289 = vmatprep.subr.mxu0 0.0
          %1290 = vmatpush1.msra.mxu0 0.0
          %1291 = vmatprep.subr.mxu0 0.0
          %1292 = vmatpush1.msra.mxu0 0.0
          %1293 = vmatprep.subr.mxu0 0.0
          %1294 = vmatpush1.msra.mxu0 0.0
          %1295 = vmatprep.subr.mxu0 0.0
          %1296 = vmatpush1.msra.mxu0 0.0
          %1297 = vmatprep.subr.mxu0 0.0
          %1298 = vmatpush1.msra.mxu0 0.0
          %1299 = vmatprep.subr.mxu0 0.0
          %1300 = vmatpush1.msra.mxu0 0.0
          %1301 = vmatprep.subr.mxu0 0.0
          %1302 = vmatpush1.msra.mxu0 0.0
          %1303 = vmatprep.subr.mxu0 0.0
          %1304 = vmatpush1.msra.mxu0 0.0
          %1305 = vmatprep.subr.mxu0 0.0
          %1306 = vmatpush1.msra.mxu0 0.0
          %1307 = vmatprep.subr.mxu0 0.0
          %1308 = vmatpush1.msra.mxu0 0.0
          %1309 = vmatprep.subr.mxu0 0.0
          %1310 = vmatpush1.msra.mxu0 0.0
          %1311 = vmatprep.mubr.f32.mxu0 0.0
          %1312 = vmatmul.mubr.f32.gmra.mrb[0].mxu0 %v1245
          %v1313 = vpop.f32.mrb[0].mxu0
          %v1314 = vadd.f32 0.0, %v1313
          %v1315 = vpop.f32.mrb[0].mxu0
          %1316 = vdwg.mxu0
          %v1318 = vsel %vm860, %v1215, 0
          %1320 = vmatprep.subr.mxu0 0.0
          %1321 = vmatpush1.msra.mxu0 %v857
          %1322 = vmatprep.subr.mxu0 0.0
          %1323 = vmatpush1.msra.mxu0 0.0
          %1324 = vmatprep.subr.mxu0 0.0
          %1325 = vmatpush1.msra.mxu0 0.0
          %1326 = vmatprep.subr.mxu0 0.0
          %1327 = vmatpush1.msra.mxu0 0.0
          %1328 = vmatprep.subr.mxu0 0.0
          %1329 = vmatpush1.msra.mxu0 0.0
          %1330 = vmatprep.subr.mxu0 0.0
          %1331 = vmatpush1.msra.mxu0 0.0
          %1332 = vmatprep.subr.mxu0 0.0
          %1333 = vmatpush1.msra.mxu0 0.0
          %1334 = vmatprep.subr.mxu0 0.0
          %1335 = vmatpush1.msra.mxu0 0.0
          %1336 = vmatprep.subr.mxu0 0.0
          %1337 = vmatpush1.msra.mxu0 0.0
          %1338 = vmatprep.subr.mxu0 0.0
          %1339 = vmatpush1.msra.mxu0 0.0
          %1340 = vmatprep.subr.mxu0 0.0
          %1341 = vmatpush1.msra.mxu0 0.0
          %1342 = vmatprep.subr.mxu0 0.0
          %1343 = vmatpush1.msra.mxu0 0.0
          %1344 = vmatprep.subr.mxu0 0.0
          %1345 = vmatpush1.msra.mxu0 0.0
          %1346 = vmatprep.subr.mxu0 0.0
          %1347 = vmatpush1.msra.mxu0 0.0
          %1348 = vmatprep.subr.mxu0 0.0
          %1349 = vmatpush1.msra.mxu0 0.0
          %1350 = vmatprep.subr.mxu0 0.0
          %1351 = vmatpush1.msra.mxu0 0.0
          %1352 = vmatprep.subr.mxu0 0.0
          %1353 = vmatpush1.msra.mxu0 0.0
          %1354 = vmatprep.subr.mxu0 0.0
          %1355 = vmatpush1.msra.mxu0 0.0
          %1356 = vmatprep.subr.mxu0 0.0
          %1357 = vmatpush1.msra.mxu0 0.0
          %1358 = vmatprep.subr.mxu0 0.0
          %1359 = vmatpush1.msra.mxu0 0.0
          %1360 = vmatprep.subr.mxu0 0.0
          %1361 = vmatpush1.msra.mxu0 0.0
          %1362 = vmatprep.subr.mxu0 0.0
          %1363 = vmatpush1.msra.mxu0 0.0
          %1364 = vmatprep.subr.mxu0 0.0
          %1365 = vmatpush1.msra.mxu0 0.0
          %1366 = vmatprep.subr.mxu0 0.0
          %1367 = vmatpush1.msra.mxu0 0.0
          %1368 = vmatprep.subr.mxu0 0.0
          %1369 = vmatpush1.msra.mxu0 0.0
          %1370 = vmatprep.subr.mxu0 0.0
          %1371 = vmatpush1.msra.mxu0 0.0
          %1372 = vmatprep.subr.mxu0 0.0
          %1373 = vmatpush1.msra.mxu0 0.0
          %1374 = vmatprep.subr.mxu0 0.0
          %1375 = vmatpush1.msra.mxu0 0.0
          %1376 = vmatprep.subr.mxu0 0.0
          %1377 = vmatpush1.msra.mxu0 0.0
          %1378 = vmatprep.subr.mxu0 0.0
          %1379 = vmatpush1.msra.mxu0 0.0
          %1380 = vmatprep.subr.mxu0 0.0
          %1381 = vmatpush1.msra.mxu0 0.0
          %1382 = vmatprep.subr.mxu0 0.0
          %1383 = vmatpush1.msra.mxu0 0.0
          %1384 = vmatprep.mubr.f32.mxu0 0.0
          %1385 = vmatmul.mubr.f32.gmra.mrb[0].mxu0 %v1318
          %v1386 = vpop.f32.mrb[0].mxu0
          %v1387 = vadd.f32 0.0, %v1386
          %v1388 = vpop.f32.mrb[0].mxu0
          %1389 = vdwg.mxu0
          %v1391 = vsel %vm860, %v1217, 0
          %1393 = vmatprep.subr.mxu0 0.0
          %1394 = vmatpush1.msra.mxu0 %v858
          %1395 = vmatprep.subr.mxu0 0.0
          %1396 = vmatpush1.msra.mxu0 0.0
          %1397 = vmatprep.subr.mxu0 0.0
          %1398 = vmatpush1.msra.mxu0 0.0
          %1399 = vmatprep.subr.mxu0 0.0
          %1400 = vmatpush1.msra.mxu0 0.0
          %1401 = vmatprep.subr.mxu0 0.0
          %1402 = vmatpush1.msra.mxu0 0.0
          %1403 = vmatprep.subr.mxu0 0.0
          %1404 = vmatpush1.msra.mxu0 0.0
          %1405 = vmatprep.subr.mxu0 0.0
          %1406 = vmatpush1.msra.mxu0 0.0
          %1407 = vmatprep.subr.mxu0 0.0
          %1408 = vmatpush1.msra.mxu0 0.0
          %1409 = vmatprep.subr.mxu0 0.0
          %1410 = vmatpush1.msra.mxu0 0.0
          %1411 = vmatprep.subr.mxu0 0.0
          %1412 = vmatpush1.msra.mxu0 0.0
          %1413 = vmatprep.subr.mxu0 0.0
          %1414 = vmatpush1.msra.mxu0 0.0
          %1415 = vmatprep.subr.mxu0 0.0
          %1416 = vmatpush1.msra.mxu0 0.0
          %1417 = vmatprep.subr.mxu0 0.0
          %1418 = vmatpush1.msra.mxu0 0.0
          %1419 = vmatprep.subr.mxu0 0.0
          %1420 = vmatpush1.msra.mxu0 0.0
          %1421 = vmatprep.subr.mxu0 0.0
          %1422 = vmatpush1.msra.mxu0 0.0
          %1423 = vmatprep.subr.mxu0 0.0
          %1424 = vmatpush1.msra.mxu0 0.0
          %1425 = vmatprep.subr.mxu0 0.0
          %1426 = vmatpush1.msra.mxu0 0.0
          %1427 = vmatprep.subr.mxu0 0.0
          %1428 = vmatpush1.msra.mxu0 0.0
          %1429 = vmatprep.subr.mxu0 0.0
          %1430 = vmatpush1.msra.mxu0 0.0
          %1431 = vmatprep.subr.mxu0 0.0
          %1432 = vmatpush1.msra.mxu0 0.0
          %1433 = vmatprep.subr.mxu0 0.0
          %1434 = vmatpush1.msra.mxu0 0.0
          %1435 = vmatprep.subr.mxu0 0.0
          %1436 = vmatpush1.msra.mxu0 0.0
          %1437 = vmatprep.subr.mxu0 0.0
          %1438 = vmatpush1.msra.mxu0 0.0
          %1439 = vmatprep.subr.mxu0 0.0
          %1440 = vmatpush1.msra.mxu0 0.0
          %1441 = vmatprep.subr.mxu0 0.0
          %1442 = vmatpush1.msra.mxu0 0.0
          %1443 = vmatprep.subr.mxu0 0.0
          %1444 = vmatpush1.msra.mxu0 0.0
          %1445 = vmatprep.subr.mxu0 0.0
          %1446 = vmatpush1.msra.mxu0 0.0
          %1447 = vmatprep.subr.mxu0 0.0
          %1448 = vmatpush1.msra.mxu0 0.0
          %1449 = vmatprep.subr.mxu0 0.0
          %1450 = vmatpush1.msra.mxu0 0.0
          %1451 = vmatprep.subr.mxu0 0.0
          %1452 = vmatpush1.msra.mxu0 0.0
          %1453 = vmatprep.subr.mxu0 0.0
          %1454 = vmatpush1.msra.mxu0 0.0
          %1455 = vmatprep.subr.mxu0 0.0
          %1456 = vmatpush1.msra.mxu0 0.0
          %1457 = vmatprep.mubr.f32.mxu0 0.0
          %1458 = vmatmul.mubr.f32.gmra.mrb[0].mxu0 %v1391
          %v1459 = vpop.f32.mrb[0].mxu0
          %v1460 = vadd.f32 0.0, %v1459
          %v1461 = vpop.f32.mrb[0].mxu0
          %1462 = vdwg.mxu0
          %v1464 = vsel %vm860, %v1219, 0
          %1466 = vmatprep.subr.mxu0 0.0
          %1467 = vmatpush1.msra.mxu0 %v859
          %1468 = vmatprep.subr.mxu0 0.0
          %1469 = vmatpush1.msra.mxu0 0.0
          %1470 = vmatprep.subr.mxu0 0.0
          %1471 = vmatpush1.msra.mxu0 0.0
          %1472 = vmatprep.subr.mxu0 0.0
          %1473 = vmatpush1.msra.mxu0 0.0
          %1474 = vmatprep.subr.mxu0 0.0
          %1475 = vmatpush1.msra.mxu0 0.0
          %1476 = vmatprep.subr.mxu0 0.0
          %1477 = vmatpush1.msra.mxu0 0.0
          %1478 = vmatprep.subr.mxu0 0.0
          %1479 = vmatpush1.msra.mxu0 0.0
          %1480 = vmatprep.subr.mxu0 0.0
          %1481 = vmatpush1.msra.mxu0 0.0
          %1482 = vmatprep.subr.mxu0 0.0
          %1483 = vmatpush1.msra.mxu0 0.0
          %1484 = vmatprep.subr.mxu0 0.0
          %1485 = vmatpush1.msra.mxu0 0.0
          %1486 = vmatprep.subr.mxu0 0.0
          %1487 = vmatpush1.msra.mxu0 0.0
          %1488 = vmatprep.subr.mxu0 0.0
          %1489 = vmatpush1.msra.mxu0 0.0
          %1490 = vmatprep.subr.mxu0 0.0
          %1491 = vmatpush1.msra.mxu0 0.0
          %1492 = vmatprep.subr.mxu0 0.0
          %1493 = vmatpush1.msra.mxu0 0.0
          %1494 = vmatprep.subr.mxu0 0.0
          %1495 = vmatpush1.msra.mxu0 0.0
          %1496 = vmatprep.subr.mxu0 0.0
          %1497 = vmatpush1.msra.mxu0 0.0
          %1498 = vmatprep.subr.mxu0 0.0
          %1499 = vmatpush1.msra.mxu0 0.0
          %1500 = vmatprep.subr.mxu0 0.0
          %1501 = vmatpush1.msra.mxu0 0.0
          %1502 = vmatprep.subr.mxu0 0.0
          %1503 = vmatpush1.msra.mxu0 0.0
          %1504 = vmatprep.subr.mxu0 0.0
          %1505 = vmatpush1.msra.mxu0 0.0
          %1506 = vmatprep.subr.mxu0 0.0
          %1507 = vmatpush1.msra.mxu0 0.0
          %1508 = vmatprep.subr.mxu0 0.0
          %1509 = vmatpush1.msra.mxu0 0.0
          %1510 = vmatprep.subr.mxu0 0.0
          %1511 = vmatpush1.msra.mxu0 0.0
          %1512 = vmatprep.subr.mxu0 0.0
          %1513 = vmatpush1.msra.mxu0 0.0
          %1514 = vmatprep.subr.mxu0 0.0
          %1515 = vmatpush1.msra.mxu0 0.0
          %1516 = vmatprep.subr.mxu0 0.0
          %1517 = vmatpush1.msra.mxu0 0.0
          %1518 = vmatprep.subr.mxu0 0.0
          %1519 = vmatpush1.msra.mxu0 0.0
          %1520 = vmatprep.subr.mxu0 0.0
          %1521 = vmatpush1.msra.mxu0 0.0
          %1522 = vmatprep.subr.mxu0 0.0
          %1523 = vmatpush1.msra.mxu0 0.0
          %1524 = vmatprep.subr.mxu0 0.0
          %1525 = vmatpush1.msra.mxu0 0.0
          %1526 = vmatprep.subr.mxu0 0.0
          %1527 = vmatpush1.msra.mxu0 0.0
          %1528 = vmatprep.subr.mxu0 0.0
          %1529 = vmatpush1.msra.mxu0 0.0
          %1530 = vmatprep.mubr.f32.mxu0 0.0
          %1531 = vmatmul.mubr.f32.gmra.mrb[0].mxu0 %v1464
          %v1532 = vpop.f32.mrb[0].mxu0
          %v1533 = vadd.f32 0.0, %v1532
          %v1534 = vpop.f32.mrb[0].mxu0
          %1535 = vdwg.mxu0
          %v1536 = vadd.f32 %v1240, %v1314
          %v1537 = vadd.f32 %v1241, %v1387
          %v1538 = vadd.f32 %v1242, %v1460
          %v1539 = vadd.f32 %v1243, %v1533
        $region113: #{tpu_custom_call.1} parent=71 // loop_footer
          %s834 = sadd.s32 %s832, 1
        $region114: #{tpu_custom_call.1} parent=71 // loop_footer_branch
          %831 = sbr.rel target = $region110
        $region115: #{tpu_custom_call.1} parent=71 // loop_exit
          _
        %v1540 = vrcp.pop %v841
        %v1541 = vrcp.pop %v842
        %v1542 = vrcp.pop %v843
        %v1543 = vrcp.pop %v844
        %v1544 = vmul.f32 %v845, %v1540
        %v1545 = vmul.f32 %v846, %v1541
        %v1546 = vmul.f32 %v847, %v1542
        %v1547 = vmul.f32 %v848, %v1543
        %1549 = vrot.lane.b32.xlu0 %v1545, 8
        %v1550 = vpop.permute.xlu0 %1549
        %1553 = vrot.lane.b32.xlu0 %v1546, 16
        %v1554 = vpop.permute.xlu0 %1553
        %1557 = vrot.lane.b32.xlu0 %v1547, 24
        %v1558 = vpop.permute.xlu0 %1557
        %vm1560 = vcmask 64512
        %v1561 = vsel %vm1560, %v1544, %v1550
        %vm1562 = vcmask 130048
        %v1563 = vsel %vm1562, %v1561, %v1554
        %vm1564 = vcmask 195584
        %v1565 = vsel %vm1564, %v1563, %v1558
        %v1566 = vld [vmem:[#allocation10] sm:$0xff]
        %v1567 = vld [vmem:[#allocation10 + $0x8] sm:$0xff]
        %v1568 = vld [vmem:[#allocation10 + $0x10] sm:$0xff]
        %v1569 = vld [vmem:[#allocation10 + $0x18] sm:$0xff]
        %v1570 = vld [vmem:[#allocation12] sm:$0x1]
        %v1572 = vlaneseq
        %v1573 = vshrl.u32 %v1572, 7
        %v1574 = vsub.s32 0, %v1573
        %v1575 = vrot.slane %v1570, %v1574
        %v1578 = vsel %vm713, %v1565, 0
        %1580 = vmatprep.subr.mxu0 0.0
        %1581 = vmatpush1.msra.mxu0 %v1566
        %1582 = vmatprep.subr.mxu0 0.0
        %1583 = vmatpush1.msra.mxu0 %v1567
        %1584 = vmatprep.subr.mxu0 0.0
        %1585 = vmatpush1.msra.mxu0 %v1568
        %1586 = vmatprep.subr.mxu0 0.0
        %1587 = vmatpush1.msra.mxu0 %v1569
        %1588 = vmatprep.subr.mxu0 0.0
        %1589 = vmatpush1.msra.mxu0 0.0
        %1590 = vmatprep.subr.mxu0 0.0
        %1591 = vmatpush1.msra.mxu0 0.0
        %1592 = vmatprep.subr.mxu0 0.0
        %1593 = vmatpush1.msra.mxu0 0.0
        %1594 = vmatprep.subr.mxu0 0.0
        %1595 = vmatpush1.msra.mxu0 0.0
        %1596 = vmatprep.subr.mxu0 0.0
        %1597 = vmatpush1.msra.mxu0 0.0
        %1598 = vmatprep.subr.mxu0 0.0
        %1599 = vmatpush1.msra.mxu0 0.0
        %1600 = vmatprep.subr.mxu0 0.0
        %1601 = vmatpush1.msra.mxu0 0.0
        %1602 = vmatprep.subr.mxu0 0.0
        %1603 = vmatpush1.msra.mxu0 0.0
        %1604 = vmatprep.subr.mxu0 0.0
        %1605 = vmatpush1.msra.mxu0 0.0
        %1606 = vmatprep.subr.mxu0 0.0
        %1607 = vmatpush1.msra.mxu0 0.0
        %1608 = vmatprep.subr.mxu0 0.0
        %1609 = vmatpush1.msra.mxu0 0.0
        %1610 = vmatprep.subr.mxu0 0.0
        %1611 = vmatpush1.msra.mxu0 0.0
        %1612 = vmatprep.subr.mxu0 0.0
        %1613 = vmatpush1.msra.mxu0 0.0
        %1614 = vmatprep.subr.mxu0 0.0
        %1615 = vmatpush1.msra.mxu0 0.0
        %1616 = vmatprep.subr.mxu0 0.0
        %1617 = vmatpush1.msra.mxu0 0.0
        %1618 = vmatprep.subr.mxu0 0.0
        %1619 = vmatpush1.msra.mxu0 0.0
        %1620 = vmatprep.subr.mxu0 0.0
        %1621 = vmatpush1.msra.mxu0 0.0
        %1622 = vmatprep.subr.mxu0 0.0
        %1623 = vmatpush1.msra.mxu0 0.0
        %1624 = vmatprep.subr.mxu0 0.0
        %1625 = vmatpush1.msra.mxu0 0.0
        %1626 = vmatprep.subr.mxu0 0.0
        %1627 = vmatpush1.msra.mxu0 0.0
        %1628 = vmatprep.subr.mxu0 0.0
        %1629 = vmatpush1.msra.mxu0 0.0
        %1630 = vmatprep.subr.mxu0 0.0
        %1631 = vmatpush1.msra.mxu0 0.0
        %1632 = vmatprep.subr.mxu0 0.0
        %1633 = vmatpush1.msra.mxu0 0.0
        %1634 = vmatprep.subr.mxu0 0.0
        %1635 = vmatpush1.msra.mxu0 0.0
        %1636 = vmatprep.subr.mxu0 0.0
        %1637 = vmatpush1.msra.mxu0 0.0
        %1638 = vmatprep.subr.mxu0 0.0
        %1639 = vmatpush1.msra.mxu0 0.0
        %1640 = vmatprep.subr.mxu0 0.0
        %1641 = vmatpush1.msra.mxu0 0.0
        %1642 = vmatprep.subr.mxu0 0.0
        %1643 = vmatpush1.msra.mxu0 0.0
        %1644 = vmatprep.mubr.f32.mxu0 0.0
        %1645 = vmatmul.mubr.f32.gmra.mrb[0].mxu0 %v1578
        %v1646 = vpop.f32.mrb[0].mxu0
        %v1647 = vadd.f32 %v1575, %v1646
        %v1648 = vpop.f32.mrb[0].mxu0
        %1649 = vdwg.mxu0
        %v1650 = vadd.f32 %v1647, %v741
        %v1651 = vld [vmem:[#allocation13] sm:$0x1]
        %v1652 = vld [vmem:[#allocation15] sm:$0x1]
        %v1653 = vsel %vm713, %v1650, 0.0
        %1654 = vadd.xlane.f32.xlu0 %v1653
        %v1655 = vpop.xlane.xlu0 %1654
        %v1656 = vmul.f32 %v1655, %v717
        %v1657 = vsub.f32 %v1650, %v1656
        %v1658 = vmul.f32 %v1657, %v1657
        %v1659 = vsel %vm713, %v1658, 0.0
        %1660 = vadd.xlane.f32.xlu0 %v1659
        %v1661 = vpop.xlane.xlu0 %1660
        %v1662 = vmul.f32 %v1661, %v717
        %v1663 = vadd.f32 %v1662, 1e-05
        %v1664 = vrsqrt.pop %v1663
        %v1665 = vmul.f32 %v1657, %v1664
        %v1667 = vlaneseq
        %v1668 = vshrl.u32 %v1667, 7
        %v1669 = vsub.s32 0, %v1668
        %v1670 = vrot.slane %v1651, %v1669
        %v1672 = vmul.f32 %v1665, %v1670
        %v1674 = vlaneseq
        %v1675 = vshrl.u32 %v1674, 7
        %v1676 = vsub.s32 0, %v1675
        %v1677 = vrot.slane %v1652, %v1676
        %v1679 = vadd.f32 %v1672, %v1677
        %v1680 = vld [vmem:[%s9] sm:$0xff]
        %v1681 = vld [vmem:[%s9 + $0x8] sm:$0xff]
        %v1682 = vld [vmem:[%s9 + $0x10] sm:$0xff]
        %v1683 = vld [vmem:[%s9 + $0x18] sm:$0xff]
        %v1684 = vld [vmem:[%s10] sm:$0x1]
        %v1686 = vlaneseq
        %v1687 = vshrl.u32 %v1686, 7
        %v1688 = vsub.s32 0, %v1687
        %v1689 = vrot.slane %v1684, %v1688
        %v1692 = vsel %vm713, %v1679, 0
        %1694 = vmatprep.subr.mxu0 0.0
        %1695 = vmatpush1.msra.mxu0 %v1680
        %1696 = vmatprep.subr.mxu0 0.0
        %1697 = vmatpush1.msra.mxu0 %v1681
        %1698 = vmatprep.subr.mxu0 0.0
        %1699 = vmatpush1.msra.mxu0 %v1682
        %1700 = vmatprep.subr.mxu0 0.0
        %1701 = vmatpush1.msra.mxu0 %v1683
        %1702 = vmatprep.subr.mxu0 0.0
        %1703 = vmatpush1.msra.mxu0 0.0
        %1704 = vmatprep.subr.mxu0 0.0
        %1705 = vmatpush1.msra.mxu0 0.0
        %1706 = vmatprep.subr.mxu0 0.0
        %1707 = vmatpush1.msra.mxu0 0.0
        %1708 = vmatprep.subr.mxu0 0.0
        %1709 = vmatpush1.msra.mxu0 0.0
        %1710 = vmatprep.subr.mxu0 0.0
        %1711 = vmatpush1.msra.mxu0 0.0
        %1712 = vmatprep.subr.mxu0 0.0
        %1713 = vmatpush1.msra.mxu0 0.0
        %1714 = vmatprep.subr.mxu0 0.0
        %1715 = vmatpush1.msra.mxu0 0.0
        %1716 = vmatprep.subr.mxu0 0.0
        %1717 = vmatpush1.msra.mxu0 0.0
        %1718 = vmatprep.subr.mxu0 0.0
        %1719 = vmatpush1.msra.mxu0 0.0
        %1720 = vmatprep.subr.mxu0 0.0
        %1721 = vmatpush1.msra.mxu0 0.0
        %1722 = vmatprep.subr.mxu0 0.0
        %1723 = vmatpush1.msra.mxu0 0.0
        %1724 = vmatprep.subr.mxu0 0.0
        %1725 = vmatpush1.msra.mxu0 0.0
        %1726 = vmatprep.subr.mxu0 0.0
        %1727 = vmatpush1.msra.mxu0 0.0
        %1728 = vmatprep.subr.mxu0 0.0
        %1729 = vmatpush1.msra.mxu0 0.0
        %1730 = vmatprep.subr.mxu0 0.0
        %1731 = vmatpush1.msra.mxu0 0.0
        %1732 = vmatprep.subr.mxu0 0.0
        %1733 = vmatpush1.msra.mxu0 0.0
        %1734 = vmatprep.subr.mxu0 0.0
        %1735 = vmatpush1.msra.mxu0 0.0
        %1736 = vmatprep.subr.mxu0 0.0
        %1737 = vmatpush1.msra.mxu0 0.0
        %1738 = vmatprep.subr.mxu0 0.0
        %1739 = vmatpush1.msra.mxu0 0.0
        %1740 = vmatprep.subr.mxu0 0.0
        %1741 = vmatpush1.msra.mxu0 0.0
        %1742 = vmatprep.subr.mxu0 0.0
        %1743 = vmatpush1.msra.mxu0 0.0
        %1744 = vmatprep.subr.mxu0 0.0
        %1745 = vmatpush1.msra.mxu0 0.0
        %1746 = vmatprep.subr.mxu0 0.0
        %1747 = vmatpush1.msra.mxu0 0.0
        %1748 = vmatprep.subr.mxu0 0.0
        %1749 = vmatpush1.msra.mxu0 0.0
        %1750 = vmatprep.subr.mxu0 0.0
        %1751 = vmatpush1.msra.mxu0 0.0
        %1752 = vmatprep.subr.mxu0 0.0
        %1753 = vmatpush1.msra.mxu0 0.0
        %1754 = vmatprep.subr.mxu0 0.0
        %1755 = vmatpush1.msra.mxu0 0.0
        %1756 = vmatprep.subr.mxu0 0.0
        %1757 = vmatpush1.msra.mxu0 0.0
        %1758 = vmatprep.mubr.f32.mxu0 0.0
        %1759 = vmatmul.mubr.f32.gmra.mrb[0].mxu0 %v1692
        %v1760 = vpop.f32.mrb[0].mxu0
        %v1761 = vadd.f32 %v1689, %v1760
        %v1762 = vpop.f32.mrb[0].mxu0
        %1763 = vdwg.mxu0
        %v1764 = vmax.f32 %v1761, 0.0
        %v1765 = vld [vmem:[#allocation16] sm:$0xff]
        %v1766 = vld [vmem:[#allocation16 + $0x8] sm:$0xff]
        %v1767 = vld [vmem:[#allocation16 + $0x10] sm:$0xff]
        %v1768 = vld [vmem:[#allocation16 + $0x18] sm:$0xff]
        %v1769 = vld [vmem:[%s12] sm:$0x1]
        %v1771 = vlaneseq
        %v1772 = vshrl.u32 %v1771, 7
        %v1773 = vsub.s32 0, %v1772
        %v1774 = vrot.slane %v1769, %v1773
        %v1777 = vsel %vm713, %v1764, 0
        %1779 = vmatprep.subr.mxu0 0.0
        %1780 = vmatpush1.msra.mxu0 %v1765
        %1781 = vmatprep.subr.mxu0 0.0
        %1782 = vmatpush1.msra.mxu0 %v1766
        %1783 = vmatprep.subr.mxu0 0.0
        %1784 = vmatpush1.msra.mxu0 %v1767
        %1785 = vmatprep.subr.mxu0 0.0
        %1786 = vmatpush1.msra.mxu0 %v1768
        %1787 = vmatprep.subr.mxu0 0.0
        %1788 = vmatpush1.msra.mxu0 0.0
        %1789 = vmatprep.subr.mxu0 0.0
        %1790 = vmatpush1.msra.mxu0 0.0
        %1791 = vmatprep.subr.mxu0 0.0
        %1792 = vmatpush1.msra.mxu0 0.0
        %1793 = vmatprep.subr.mxu0 0.0
        %1794 = vmatpush1.msra.mxu0 0.0
        %1795 = vmatprep.subr.mxu0 0.0
        %1796 = vmatpush1.msra.mxu0 0.0
        %1797 = vmatprep.subr.mxu0 0.0
        %1798 = vmatpush1.msra.mxu0 0.0
        %1799 = vmatprep.subr.mxu0 0.0
        %1800 = vmatpush1.msra.mxu0 0.0
        %1801 = vmatprep.subr.mxu0 0.0
        %1802 = vmatpush1.msra.mxu0 0.0
        %1803 = vmatprep.subr.mxu0 0.0
        %1804 = vmatpush1.msra.mxu0 0.0
        %1805 = vmatprep.subr.mxu0 0.0
        %1806 = vmatpush1.msra.mxu0 0.0
        %1807 = vmatprep.subr.mxu0 0.0
        %1808 = vmatpush1.msra.mxu0 0.0
        %1809 = vmatprep.subr.mxu0 0.0
        %1810 = vmatpush1.msra.mxu0 0.0
        %1811 = vmatprep.subr.mxu0 0.0
        %1812 = vmatpush1.msra.mxu0 0.0
        %1813 = vmatprep.subr.mxu0 0.0
        %1814 = vmatpush1.msra.mxu0 0.0
        %1815 = vmatprep.subr.mxu0 0.0
        %1816 = vmatpush1.msra.mxu0 0.0
        %1817 = vmatprep.subr.mxu0 0.0
        %1818 = vmatpush1.msra.mxu0 0.0
        %1819 = vmatprep.subr.mxu0 0.0
        %1820 = vmatpush1.msra.mxu0 0.0
        %1821 = vmatprep.subr.mxu0 0.0
        %1822 = vmatpush1.msra.mxu0 0.0
        %1823 = vmatprep.subr.mxu0 0.0
        %1824 = vmatpush1.msra.mxu0 0.0
        %1825 = vmatprep.subr.mxu0 0.0
        %1826 = vmatpush1.msra.mxu0 0.0
        %1827 = vmatprep.subr.mxu0 0.0
        %1828 = vmatpush1.msra.mxu0 0.0
        %1829 = vmatprep.subr.mxu0 0.0
        %1830 = vmatpush1.msra.mxu0 0.0
        %1831 = vmatprep.subr.mxu0 0.0
        %1832 = vmatpush1.msra.mxu0 0.0
        %1833 = vmatprep.subr.mxu0 0.0
        %1834 = vmatpush1.msra.mxu0 0.0
        %1835 = vmatprep.subr.mxu0 0.0
        %1836 = vmatpush1.msra.mxu0 0.0
        %1837 = vmatprep.subr.mxu0 0.0
        %1838 = vmatpush1.msra.mxu0 0.0
        %1839 = vmatprep.subr.mxu0 0.0
        %1840 = vmatpush1.msra.mxu0 0.0
        %1841 = vmatprep.subr.mxu0 0.0
        %1842 = vmatpush1.msra.mxu0 0.0
        %1843 = vmatprep.mubr.f32.mxu0 0.0
        %1844 = vmatmul.mubr.f32.gmra.mrb[0].mxu0 %v1777
        %v1845 = vpop.f32.mrb[0].mxu0
        %v1846 = vadd.f32 %v1774, %v1845
        %v1847 = vpop.f32.mrb[0].mxu0
        %1848 = vdwg.mxu0
        %v1849 = vadd.f32 %v1846, %v1679
        %1850 = vst.msk [vmem:[%s565] sm:$0xff] %vm713, %v1849
        %s1851 = sand.u32 %s334, 1
        %s1852 = scalar_lea.sflag [#allocation6], %s1851
        %s1853 = sand.u32 %s334, 1
        %s1854 = smul.addr %s1853, 8
        %s1855 = scalar_lea.vmem [#allocation18], %s1854
        // Predicated region
        $region116: #{tpu_custom_call.1} parent=71 // pred_check
          %p1856 = pneg %p344
        $region117: #{tpu_custom_call.1} parent=71 // pred_check_branch
          %1858 = sbr.rel (%p1856) target = $region119
        $region118: #{tpu_custom_call.1} parent=71 // pred_region
          %s1860 = ssub.s32 128, 128
          %1861 = vsyncadd %s1852, %s1860
          %s1862 = sadd.s32 %s39, %s38
          %s1863 = smul.addr %s1862, 128
          %s1864 = scalar_lea.hbm %s13, %s1863
          %s1866 = sshll.u32 %s1855, 4
          %s1867 = int_to_ptr.vmem [resolvable:$true] %s1866
          %1869 = dma.vmem_to_hbm [thread:$0]  %s1867, 128, %s1864, %s1852
        $region119: #{tpu_custom_call.1} parent=71 // pred_fallthru
          _
      $region72: #{tpu_custom_call.1} parent=5 // pred_fallthru
        _
      %p1870 = scmp.le.s32.totalorder 2, %s29
      // Predicated region
      $region120: #{tpu_custom_call.1} parent=5 // pred_check
        %p1871 = pneg %p1870
      $region121: #{tpu_custom_call.1} parent=5 // pred_check_branch
        %1873 = sbr.rel (%p1871) target = $region123
      $region122: #{tpu_custom_call.1} parent=5 // pred_region
        %s1874 = ssub.s32 %s29, 2
        // Predicated region
        $region124: #{tpu_custom_call.1} parent=122 // pred_check
          %p1875 = pneg %p350
        $region125: #{tpu_custom_call.1} parent=122 // pred_check_branch
          %1877 = sbr.rel (%p1875) target = $region127
        $region126: #{tpu_custom_call.1} parent=122 // pred_region
          %s1878 = sand.u32 %s335, 1
          %s1879 = scalar_lea.sflag [#allocation6], %s1878
          %s1880 = sand.u32 %s335, 1
          %s1881 = smul.addr %s1880, 8
          %s1882 = scalar_lea.vmem [#allocation18], %s1881
          %1883 = dma.done %s1879, 128
        $region127: #{tpu_custom_call.1} parent=122 // pred_fallthru
          _
      $region123: #{tpu_custom_call.1} parent=5 // pred_fallthru
        _
    $region6: #{tpu_custom_call.1} parent=1 // loop_footer
      %s33 = sadd.s32 1, %s29
    $region7: #{tpu_custom_call.1} parent=1 // loop_footer_branch
      %28 = sbr.rel target = $region3
    $region8: #{tpu_custom_call.1} parent=1 // loop_exit
      _
    %1884 = vsyncpa [#allocation5], 1
    %s1885 = scalar_lea.sflag [#allocation5], 1
    %1886 = vsyncpa %s1885, 1
    %1887 = vsyncpa [#allocation8], 1
    %1888 = vsyncpa [#allocation11], 1
    %1889 = vsyncpa [#allocation14], 1
    %1890 = vsyncpa [#allocation17], 1
    %1891 = vsyncpa [#allocation6], 1
    %s1892 = scalar_lea.sflag [#allocation6], 1
    %1893 = vsyncpa %s1892, 1

</llo_original>
